<compile_context>
chip_gen: v7x
topology: tpu7x:2x2x1
jax: 0.10.0
libtpu: 0.0.40
codegen_flags: <defaults>
</compile_context>

<pallas_src>
import functools
import math

import jax
import jax.numpy as jnp
from jax.experimental import pallas as pl
from jax.experimental.pallas import tpu as pltpu


CFG = dict(vocab=100, max_pos=16, hidden=32, heads=4, layers=2,
           intermediate=64, n_classes=3)


# --------------------------------------------------------------------------
# Fused forward kernel: everything after the embedding gather lives here.
# --------------------------------------------------------------------------

def _fused_forward_kernel(
    h0_ref,            # (B*S, D)   word+pos+type embedding sum (pre-LN), f32
    mask_ref,          # (B, 1, S)  additive attention bias (0 or -1e4), f32
    emb_g_ref,         # (1, D)     f32
    emb_b_ref,         # (1, D)     f32
    wqkv_ref,          # (L, D, 3D) fused Q/K/V projection weights, bf16
    bqkv_ref,          # (L, 1, 3D) f32
    wo_ref,            # (L, D, D)  bf16
    bo_ref,            # (L, 1, D)  f32
    ln1_g_ref,         # (L, 1, D)  f32
    ln1_b_ref,         # (L, 1, D)  f32
    wi_ref,            # (L, D, I)  bf16
    bi_ref,            # (L, 1, I)  f32
    wo2_ref,           # (L, I, D)  bf16
    bo2_ref,           # (L, 1, D)  f32
    ln2_g_ref,         # (L, 1, D)  f32
    ln2_b_ref,         # (L, 1, D)  f32
    pool_w_ref,        # (D, D)     bf16
    pool_b_ref,        # (1, D)     f32
    cls_w_ref,         # (D, C)     bf16
    cls_b_ref,         # (1, C)     f32
    logits_ref,        # (B, C)     output, f32
    ctx_ref,           # VMEM scratch (B*S, D)      f32
    scores_ref,        # VMEM scratch (B*H*S, S)    f32
    *, B, S, H, Dh, L, eps):
    D = H * Dh
    scale = 1.0 / math.sqrt(Dh)

    def layer_norm(x, g, b):
        mu = jnp.mean(x, axis=-1, keepdims=True)
        var = jnp.mean(jnp.square(x - mu), axis=-1, keepdims=True)
        return (x - mu) * jax.lax.rsqrt(var + eps) * g + b

    def mm(a, w):
        # bf16 operands, f32 accumulation on the MXU.
        return jnp.dot(a.astype(jnp.bfloat16), w.astype(jnp.bfloat16),
                       preferred_element_type=jnp.float32)

    # ---- embedding LayerNorm ----
    h = layer_norm(h0_ref[...], emb_g_ref[...], emb_b_ref[...])        # (B*S, D)

    # ---- transformer layers (statically unrolled, weights resident in VMEM) --
    for l in range(L):
        qkv = mm(h, wqkv_ref[l]) + bqkv_ref[l]                         # (B*S, 3D)

        # -- scores for every (batch, head) stacked into one scratch --
        for b in range(B):
            rows = slice(b * S, (b + 1) * S)
            bias = mask_ref[b]                                         # (1, S)
            for hh in range(H):
                q = qkv[rows, hh * Dh:(hh + 1) * Dh]                   # (S, Dh)
                k = qkv[rows, D + hh * Dh:D + (hh + 1) * Dh]           # (S, Dh)
                # Contract over Dh directly: no k.T / XLU transpose.
                s = jax.lax.dot_general(
                    q.astype(jnp.bfloat16), k.astype(jnp.bfloat16),
                    (((1,), (1,)), ((), ())),
                    preferred_element_type=jnp.float32)                # (S, S)
                r0 = (b * H + hh) * S
                scores_ref[r0:r0 + S, :] = s * scale + bias

        # -- single batched softmax over all B*H heads --
        s_all = scores_ref[...]                                        # (B*H*S, S)
        s_all = s_all - jnp.max(s_all, axis=-1, keepdims=True)
        p_all = jnp.exp(s_all)
        p_all = p_all * pl.reciprocal(jnp.sum(p_all, axis=-1, keepdims=True),
                                      approx=True)

        # -- p @ v per head, written straight into the resident ctx scratch --
        for b in range(B):
            rows = slice(b * S, (b + 1) * S)
            for hh in range(H):
                v = qkv[rows, 2 * D + hh * Dh:2 * D + (hh + 1) * Dh]   # (S, Dh)
                r0 = (b * H + hh) * S
                p = p_all[r0:r0 + S, :]                                # (S, S)
                ctx_ref[b * S:(b + 1) * S, hh * Dh:(hh + 1) * Dh] = mm(p, v)

        # attention output projection + residual + LayerNorm (fused epilogue)
        attn_out = mm(ctx_ref[...], wo_ref[l]) + bo_ref[l]
        h = layer_norm(h + attn_out, ln1_g_ref[l], ln1_b_ref[l])

        # FFN + residual + LayerNorm (fused epilogue)
        inter = mm(h, wi_ref[l]) + bi_ref[l]
        # TODO(synk): HF BERT uses the erf-based GELU; tanh approximation used here.
        inter = jax.nn.gelu(inter, approximate=True)
        ffn_out = mm(inter, wo2_ref[l]) + bo2_ref[l]
        h = layer_norm(h + ffn_out, ln2_g_ref[l], ln2_b_ref[l])

    # ---- pooler: tanh(W * h[:, 0]) on the CLS rows ----
    # S == one sublane group, so this reshape/select is layout-free.
    cls_rows = h.reshape(B, S, D)[:, 0, :]                             # (B, D)
    pooled = jnp.tanh(mm(cls_rows, pool_w_ref[...]) + pool_b_ref[...])

    # ---- self.drop = nn.Dropout(p=0.3): identity at inference ----
    # TODO(synk): dropout is stochastic only in training mode; treated as identity.

    # ---- self.out = nn.Linear(hidden, n_classes) ----
    logits_ref[...] = mm(pooled, cls_w_ref[...]) + cls_b_ref[...]


# --------------------------------------------------------------------------
# Parameter init + packing (glue)
# --------------------------------------------------------------------------

def init_params(key, cfg):
    D, I, L = cfg["hidden"], cfg["intermediate"], cfg["layers"]
    std = 0.02
    keys = iter(jax.random.split(key, 8 + 8 * L))

    def nrm(shape):
        return std * jax.random.normal(next(keys), shape, jnp.float32)

    params = {
        "word_emb": nrm((cfg["vocab"], D)),
        "pos_emb": nrm((cfg["max_pos"], D)),
        "type_emb": nrm((2, D)),
        "emb_ln_g": jnp.ones((D,), jnp.float32),
        "emb_ln_b": jnp.zeros((D,), jnp.float32),
        "pool_w": nrm((D, D)),
        "pool_b": jnp.zeros((D,), jnp.float32),
        "cls_w": nrm((D, cfg["n_classes"])),
        "cls_b": jnp.zeros((cfg["n_classes"],), jnp.float32),
        "layers": [],
    }
    for _ in range(L):
        params["layers"].append({
            "wq": nrm((D, D)), "bq": jnp.zeros((D,), jnp.float32),
            "wk": nrm((D, D)), "bk": jnp.zeros((D,), jnp.float32),
            "wv": nrm((D, D)), "bv": jnp.zeros((D,), jnp.float32),
            "wo": nrm((D, D)), "bo": jnp.zeros((D,), jnp.float32),
            "ln1_g": jnp.ones((D,), jnp.float32), "ln1_b": jnp.zeros((D,), jnp.float32),
            "wi": nrm((D, I)), "bi": jnp.zeros((I,), jnp.float32),
            "wo2": nrm((I, D)), "bo2": jnp.zeros((D,), jnp.float32),
            "ln2_g": jnp.ones((D,), jnp.float32), "ln2_b": jnp.zeros((D,), jnp.float32),
        })
    return params


def _pack_layers(layers, D, I):
    """Stack per-layer weights along a leading L axis; fuse Q/K/V.

    Matmul weights are packed in bf16 (MXU-native, half the VMEM footprint);
    biases and LayerNorm params stay f32.
    """
    wqkv = jnp.stack([jnp.concatenate([p["wq"], p["wk"], p["wv"]], axis=1)
                      for p in layers]).astype(jnp.bfloat16)           # (L, D, 3D)
    bqkv = jnp.stack([jnp.concatenate([p["bq"], p["bk"], p["bv"]])[None, :]
                      for p in layers])                                # (L, 1, 3D)

    def stk(name, n, dtype=jnp.float32):
        return jnp.stack([p[name].reshape(1, n) if p[name].ndim == 1
                          else p[name] for p in layers]).astype(dtype)

    return (wqkv, bqkv,
            stk("wo", D, jnp.bfloat16), stk("bo", D),
            stk("ln1_g", D), stk("ln1_b", D),
            stk("wi", I, jnp.bfloat16), stk("bi", I),
            stk("wo2", D, jnp.bfloat16), stk("bo2", D),
            stk("ln2_g", D), stk("ln2_b", D))


# --------------------------------------------------------------------------
# Forward wrapper
# --------------------------------------------------------------------------

def sentiment_classifier_forward(params, input_ids, attention_mask, cfg=CFG):
    B, S = input_ids.shape
    D, H, L, I, C = (cfg["hidden"], cfg["heads"], cfg["layers"],
                     cfg["intermediate"], cfg["n_classes"])
    Dh = D // H

    # --- embeddings (gather is glue; everything after runs in one kernel) ---
    # TODO(synk): at larger B*S*D move this gather into the kernel via
    # PrefetchScalarGridSpec + pl.Element row-gather to avoid the HBM round-trip.
    word = jnp.take(params["word_emb"], input_ids, axis=0)            # (B, S, D)
    pos = params["pos_emb"][:S][None, :, :]                           # (1, S, D)
    typ = params["type_emb"][0][None, None, :]                        # (1, 1, D)
    h0 = (word + pos + typ).reshape(B * S, D)

    # Precomputed additive mask bias: 0 where attended, -1e4 where masked.
    mask_bias = (1.0 - attention_mask.astype(jnp.float32)).reshape(B, 1, S) * -10000.0

    packed = _pack_layers(params["layers"], D, I)

    kern = functools.partial(_fused_forward_kernel,
                             B=B, S=S, H=H, Dh=Dh, L=L, eps=1e-12)

    logits = pl.pallas_call(
        kern,
        out_shape=jax.ShapeDtypeStruct((B, C), jnp.float32),
        scratch_shapes=[
            pltpu.VMEM((B * S, D), jnp.float32),        # ctx (merged heads)
            pltpu.VMEM((B * H * S, S), jnp.float32),    # stacked attention scores
        ],
        # Footprint is ~100 KB; set the limit consciously (v5e default is 16 MiB)
        # with plenty of headroom, rather than a blanket 32 MiB.
        compiler_params=pltpu.CompilerParams(vmem_limit_bytes=8 * 1024 * 1024),
    )(h0, mask_bias,
      params["emb_ln_g"].reshape(1, D), params["emb_ln_b"].reshape(1, D),
      *packed,
      params["pool_w"].astype(jnp.bfloat16), params["pool_b"].reshape(1, D),
      params["cls_w"].astype(jnp.bfloat16), params["cls_b"].reshape(1, C))
    return logits


# --------------------------------------------------------------------------

if __name__ == "__main__":
    B, S = 2, 8
    key = jax.random.PRNGKey(0)
    k_param, k_ids = jax.random.split(key)

    params = init_params(k_param, CFG)
    input_ids = jax.random.randint(k_ids, (B, S), 0, CFG["vocab"], dtype=jnp.int32)
    attention_mask = jnp.array(
        [[1, 1, 1, 1, 1, 1, 1, 1],
         [1, 1, 1, 1, 1, 0, 0, 0]], dtype=jnp.int32)

    fwd = jax.jit(functools.partial(sentiment_classifier_forward, cfg=CFG))
    logits = fwd(params, input_ids, attention_mask)
    jax.block_until_ready(logits)
    assert logits.shape == (B, CFG["n_classes"])
    assert bool(jnp.all(jnp.isfinite(logits)))
    print("KERNEL_OK")
</pallas_src>

<mosaic_0001>
module attributes {stable_mosaic.version = 11 : i64} {
  func.func @_fused_forward_kernel(%arg0: memref<16x32xf32, #tpu.memory_space<vmem>>, %arg1: memref<2x1x8xf32, #tpu.memory_space<vmem>>, %arg2: memref<1x32xf32, #tpu.memory_space<vmem>>, %arg3: memref<1x32xf32, #tpu.memory_space<vmem>>, %arg4: memref<2x32x96xbf16, #tpu.memory_space<vmem>>, %arg5: memref<2x1x96xf32, #tpu.memory_space<vmem>>, %arg6: memref<2x32x32xbf16, #tpu.memory_space<vmem>>, %arg7: memref<2x1x32xf32, #tpu.memory_space<vmem>>, %arg8: memref<2x1x32xf32, #tpu.memory_space<vmem>>, %arg9: memref<2x1x32xf32, #tpu.memory_space<vmem>>, %arg10: memref<2x32x64xbf16, #tpu.memory_space<vmem>>, %arg11: memref<2x1x64xf32, #tpu.memory_space<vmem>>, %arg12: memref<2x64x32xbf16, #tpu.memory_space<vmem>>, %arg13: memref<2x1x32xf32, #tpu.memory_space<vmem>>, %arg14: memref<2x1x32xf32, #tpu.memory_space<vmem>>, %arg15: memref<2x1x32xf32, #tpu.memory_space<vmem>>, %arg16: memref<32x32xbf16, #tpu.memory_space<vmem>>, %arg17: memref<1x32xf32, #tpu.memory_space<vmem>>, %arg18: memref<32x3xbf16, #tpu.memory_space<vmem>>, %arg19: memref<1x3xf32, #tpu.memory_space<vmem>>, %arg20: memref<2x3xf32, #tpu.memory_space<vmem>>, %arg21: memref<16x32xf32, #tpu.memory_space<vmem>>, %arg22: memref<64x8xf32, #tpu.memory_space<vmem>>) attributes {dimension_semantics = [], scalar_prefetch = 0 : i64, scratch_operands = 2 : i64, tpu.core_type = #tpu.core_type<tc>} {
    %c0 = arith.constant 0 : index
    %c0_0 = arith.constant 0 : index
    %0 = vector.load %arg0[%c0, %c0_0] : memref<16x32xf32, #tpu.memory_space<vmem>>, vector<16x32xf32>
    %c0_1 = arith.constant 0 : index
    %c0_2 = arith.constant 0 : index
    %1 = vector.load %arg2[%c0_1, %c0_2] : memref<1x32xf32, #tpu.memory_space<vmem>>, vector<1x32xf32>
    %c0_3 = arith.constant 0 : index
    %c0_4 = arith.constant 0 : index
    %2 = vector.load %arg3[%c0_3, %c0_4] : memref<1x32xf32, #tpu.memory_space<vmem>>, vector<1x32xf32>
    %cst = arith.constant dense<0.000000e+00> : vector<16xf32>
    %3 = vector.multi_reduction <add>, %0, %cst [1] : vector<16x32xf32> to vector<16xf32>
    %4 = vector.shape_cast %3 : vector<16xf32> to vector<16x1xf32>
    %cst_5 = arith.constant 3.200000e+01 : f32
    %5 = vector.broadcast %cst_5 : f32 to vector<16x1xf32>
    %6 = arith.divf %4, %5 : vector<16x1xf32>
    %7 = vector.broadcast %6 : vector<16x1xf32> to vector<16x32xf32>
    %8 = arith.subf %0, %7 : vector<16x32xf32>
    %9 = arith.mulf %8, %8 : vector<16x32xf32>
    %cst_6 = arith.constant dense<0.000000e+00> : vector<16xf32>
    %10 = vector.multi_reduction <add>, %9, %cst_6 [1] : vector<16x32xf32> to vector<16xf32>
    %11 = vector.shape_cast %10 : vector<16xf32> to vector<16x1xf32>
    %cst_7 = arith.constant 3.200000e+01 : f32
    %12 = vector.broadcast %cst_7 : f32 to vector<16x1xf32>
    %13 = arith.divf %11, %12 : vector<16x1xf32>
    %14 = vector.broadcast %6 : vector<16x1xf32> to vector<16x32xf32>
    %15 = arith.subf %0, %14 : vector<16x32xf32>
    %cst_8 = arith.constant 9.99999996E-13 : f32
    %16 = vector.broadcast %cst_8 : f32 to vector<16x1xf32>
    %17 = arith.addf %13, %16 : vector<16x1xf32>
    %18 = math.rsqrt %17 : vector<16x1xf32>
    %19 = vector.broadcast %18 : vector<16x1xf32> to vector<16x32xf32>
    %20 = arith.mulf %15, %19 : vector<16x32xf32>
    %21 = vector.broadcast %1 : vector<1x32xf32> to vector<16x32xf32>
    %22 = arith.mulf %20, %21 : vector<16x32xf32>
    %23 = vector.broadcast %2 : vector<1x32xf32> to vector<16x32xf32>
    %24 = arith.addf %22, %23 : vector<16x32xf32>
    %c0_9 = arith.constant 0 : index
    %c0_10 = arith.constant 0 : index
    %c0_11 = arith.constant 0 : index
    %25 = vector.load %arg4[%c0_9, %c0_10, %c0_11] : memref<2x32x96xbf16, #tpu.memory_space<vmem>>, vector<1x32x96xbf16>
    %26 = vector.shape_cast %25 : vector<1x32x96xbf16> to vector<32x96xbf16>
    %27 = arith.truncf %24 : vector<16x32xf32> to vector<16x32xbf16>
    %cst_12 = arith.constant dense<0.000000e+00> : vector<16x96xf32>
    %28 = tpu.matmul %27, %26, %cst_12 {dimension_numbers = #tpu.dot_dimension_numbers<[1], [0], [0], [1], [0, 0, 1, 1], [], []>} : vector<16x32xbf16>, vector<32x96xbf16>, vector<16x96xf32> -> vector<16x96xf32>
    %c0_13 = arith.constant 0 : index
    %c0_14 = arith.constant 0 : index
    %c0_15 = arith.constant 0 : index
    %29 = vector.load %arg5[%c0_13, %c0_14, %c0_15] : memref<2x1x96xf32, #tpu.memory_space<vmem>>, vector<1x1x96xf32>
    %30 = vector.shape_cast %29 : vector<1x1x96xf32> to vector<1x96xf32>
    %31 = vector.broadcast %30 : vector<1x96xf32> to vector<16x96xf32>
    %32 = arith.addf %28, %31 : vector<16x96xf32>
    %c0_16 = arith.constant 0 : index
    %c0_17 = arith.constant 0 : index
    %c0_18 = arith.constant 0 : index
    %33 = vector.load %arg1[%c0_16, %c0_17, %c0_18] : memref<2x1x8xf32, #tpu.memory_space<vmem>>, vector<1x1x8xf32>
    %34 = vector.shape_cast %33 : vector<1x1x8xf32> to vector<1x8xf32>
    %35 = vector.extract_strided_slice %32 {offsets = [0, 0], sizes = [8, 8], strides = [1, 1]} : vector<16x96xf32> to vector<8x8xf32>
    %36 = vector.extract_strided_slice %32 {offsets = [0, 32], sizes = [8, 8], strides = [1, 1]} : vector<16x96xf32> to vector<8x8xf32>
    %37 = arith.truncf %35 : vector<8x8xf32> to vector<8x8xbf16>
    %38 = arith.truncf %36 : vector<8x8xf32> to vector<8x8xbf16>
    %cst_19 = arith.constant dense<0.000000e+00> : vector<8x8xf32>
    %39 = tpu.matmul %37, %38, %cst_19 {dimension_numbers = #tpu.dot_dimension_numbers<[1], [1], [0], [0], [0, 0, 1, 0], [], []>} : vector<8x8xbf16>, vector<8x8xbf16>, vector<8x8xf32> -> vector<8x8xf32>
    %cst_20 = arith.constant 0.353553385 : f32
    %40 = vector.broadcast %cst_20 : f32 to vector<8x8xf32>
    %41 = arith.mulf %39, %40 : vector<8x8xf32>
    %42 = vector.broadcast %34 : vector<1x8xf32> to vector<8x8xf32>
    %43 = arith.addf %41, %42 : vector<8x8xf32>
    %c0_21 = arith.constant 0 : index
    %c0_22 = arith.constant 0 : index
    %44 = vector.load %arg22[%c0_21, %c0_22] : memref<64x8xf32, #tpu.memory_space<vmem>>, vector<8x8xf32>
    tpu.vector_store %arg22[%c0_21, %c0_22], %43 {strides = array<i32>} : memref<64x8xf32, #tpu.memory_space<vmem>>, vector<8x8xf32>,
    %45 = vector.extract_strided_slice %32 {offsets = [0, 8], sizes = [8, 8], strides = [1, 1]} : vector<16x96xf32> to vector<8x8xf32>
    %46 = vector.extract_strided_slice %32 {offsets = [0, 40], sizes = [8, 8], strides = [1, 1]} : vector<16x96xf32> to vector<8x8xf32>
    %47 = arith.truncf %45 : vector<8x8xf32> to vector<8x8xbf16>
    %48 = arith.truncf %46 : vector<8x8xf32> to vector<8x8xbf16>
    %cst_23 = arith.constant dense<0.000000e+00> : vector<8x8xf32>
    %49 = tpu.matmul %47, %48, %cst_23 {dimension_numbers = #tpu.dot_dimension_numbers<[1], [1], [0], [0], [0, 0, 1, 0], [], []>} : vector<8x8xbf16>, vector<8x8xbf16>, vector<8x8xf32> -> vector<8x8xf32>
    %cst_24 = arith.constant 0.353553385 : f32
    %50 = vector.broadcast %cst_24 : f32 to vector<8x8xf32>
    %51 = arith.mulf %49, %50 : vector<8x8xf32>
    %52 = vector.broadcast %34 : vector<1x8xf32> to vector<8x8xf32>
    %53 = arith.addf %51, %52 : vector<8x8xf32>
    %c8 = arith.constant 8 : index
    %c0_25 = arith.constant 0 : index
    %54 = vector.load %arg22[%c8, %c0_25] : memref<64x8xf32, #tpu.memory_space<vmem>>, vector<8x8xf32>
    tpu.vector_store %arg22[%c8, %c0_25], %53 {strides = array<i32>} : memref<64x8xf32, #tpu.memory_space<vmem>>, vector<8x8xf32>,
    %55 = vector.extract_strided_slice %32 {offsets = [0, 16], sizes = [8, 8], strides = [1, 1]} : vector<16x96xf32> to vector<8x8xf32>
    %56 = vector.extract_strided_slice %32 {offsets = [0, 48], sizes = [8, 8], strides = [1, 1]} : vector<16x96xf32> to vector<8x8xf32>
    %57 = arith.truncf %55 : vector<8x8xf32> to vector<8x8xbf16>
    %58 = arith.truncf %56 : vector<8x8xf32> to vector<8x8xbf16>
    %cst_26 = arith.constant dense<0.000000e+00> : vector<8x8xf32>
    %59 = tpu.matmul %57, %58, %cst_26 {dimension_numbers = #tpu.dot_dimension_numbers<[1], [1], [0], [0], [0, 0, 1, 0], [], []>} : vector<8x8xbf16>, vector<8x8xbf16>, vector<8x8xf32> -> vector<8x8xf32>
    %cst_27 = arith.constant 0.353553385 : f32
    %60 = vector.broadcast %cst_27 : f32 to vector<8x8xf32>
    %61 = arith.mulf %59, %60 : vector<8x8xf32>
    %62 = vector.broadcast %34 : vector<1x8xf32> to vector<8x8xf32>
    %63 = arith.addf %61, %62 : vector<8x8xf32>
    %c16 = arith.constant 16 : index
    %c0_28 = arith.constant 0 : index
    %64 = vector.load %arg22[%c16, %c0_28] : memref<64x8xf32, #tpu.memory_space<vmem>>, vector<8x8xf32>
    tpu.vector_store %arg22[%c16, %c0_28], %63 {strides = array<i32>} : memref<64x8xf32, #tpu.memory_space<vmem>>, vector<8x8xf32>,
    %65 = vector.extract_strided_slice %32 {offsets = [0, 24], sizes = [8, 8], strides = [1, 1]} : vector<16x96xf32> to vector<8x8xf32>
    %66 = vector.extract_strided_slice %32 {offsets = [0, 56], sizes = [8, 8], strides = [1, 1]} : vector<16x96xf32> to vector<8x8xf32>
    %67 = arith.truncf %65 : vector<8x8xf32> to vector<8x8xbf16>
    %68 = arith.truncf %66 : vector<8x8xf32> to vector<8x8xbf16>
    %cst_29 = arith.constant dense<0.000000e+00> : vector<8x8xf32>
    %69 = tpu.matmul %67, %68, %cst_29 {dimension_numbers = #tpu.dot_dimension_numbers<[1], [1], [0], [0], [0, 0, 1, 0], [], []>} : vector<8x8xbf16>, vector<8x8xbf16>, vector<8x8xf32> -> vector<8x8xf32>
    %cst_30 = arith.constant 0.353553385 : f32
    %70 = vector.broadcast %cst_30 : f32 to vector<8x8xf32>
    %71 = arith.mulf %69, %70 : vector<8x8xf32>
    %72 = vector.broadcast %34 : vector<1x8xf32> to vector<8x8xf32>
    %73 = arith.addf %71, %72 : vector<8x8xf32>
    %c24 = arith.constant 24 : index
    %c0_31 = arith.constant 0 : index
    %74 = vector.load %arg22[%c24, %c0_31] : memref<64x8xf32, #tpu.memory_space<vmem>>, vector<8x8xf32>
    tpu.vector_store %arg22[%c24, %c0_31], %73 {strides = array<i32>} : memref<64x8xf32, #tpu.memory_space<vmem>>, vector<8x8xf32>,
    %c1 = arith.constant 1 : index
    %c0_32 = arith.constant 0 : index
    %c0_33 = arith.constant 0 : index
    %75 = vector.load %arg1[%c1, %c0_32, %c0_33] : memref<2x1x8xf32, #tpu.memory_space<vmem>>, vector<1x1x8xf32>
    %76 = vector.shape_cast %75 : vector<1x1x8xf32> to vector<1x8xf32>
    %77 = vector.extract_strided_slice %32 {offsets = [8, 0], sizes = [8, 8], strides = [1, 1]} : vector<16x96xf32> to vector<8x8xf32>
    %78 = vector.extract_strided_slice %32 {offsets = [8, 32], sizes = [8, 8], strides = [1, 1]} : vector<16x96xf32> to vector<8x8xf32>
    %79 = arith.truncf %77 : vector<8x8xf32> to vector<8x8xbf16>
    %80 = arith.truncf %78 : vector<8x8xf32> to vector<8x8xbf16>
    %cst_34 = arith.constant dense<0.000000e+00> : vector<8x8xf32>
    %81 = tpu.matmul %79, %80, %cst_34 {dimension_numbers = #tpu.dot_dimension_numbers<[1], [1], [0], [0], [0, 0, 1, 0], [], []>} : vector<8x8xbf16>, vector<8x8xbf16>, vector<8x8xf32> -> vector<8x8xf32>
    %cst_35 = arith.constant 0.353553385 : f32
    %82 = vector.broadcast %cst_35 : f32 to vector<8x8xf32>
    %83 = arith.mulf %81, %82 : vector<8x8xf32>
    %84 = vector.broadcast %76 : vector<1x8xf32> to vector<8x8xf32>
    %85 = arith.addf %83, %84 : vector<8x8xf32>
    %c32 = arith.constant 32 : index
    %c0_36 = arith.constant 0 : index
    %86 = vector.load %arg22[%c32, %c0_36] : memref<64x8xf32, #tpu.memory_space<vmem>>, vector<8x8xf32>
    tpu.vector_store %arg22[%c32, %c0_36], %85 {strides = array<i32>} : memref<64x8xf32, #tpu.memory_space<vmem>>, vector<8x8xf32>,
    %87 = vector.extract_strided_slice %32 {offsets = [8, 8], sizes = [8, 8], strides = [1, 1]} : vector<16x96xf32> to vector<8x8xf32>
    %88 = vector.extract_strided_slice %32 {offsets = [8, 40], sizes = [8, 8], strides = [1, 1]} : vector<16x96xf32> to vector<8x8xf32>
    %89 = arith.truncf %87 : vector<8x8xf32> to vector<8x8xbf16>
    %90 = arith.truncf %88 : vector<8x8xf32> to vector<8x8xbf16>
    %cst_37 = arith.constant dense<0.000000e+00> : vector<8x8xf32>
    %91 = tpu.matmul %89, %90, %cst_37 {dimension_numbers = #tpu.dot_dimension_numbers<[1], [1], [0], [0], [0, 0, 1, 0], [], []>} : vector<8x8xbf16>, vector<8x8xbf16>, vector<8x8xf32> -> vector<8x8xf32>
    %cst_38 = arith.constant 0.353553385 : f32
    %92 = vector.broadcast %cst_38 : f32 to vector<8x8xf32>
    %93 = arith.mulf %91, %92 : vector<8x8xf32>
    %94 = vector.broadcast %76 : vector<1x8xf32> to vector<8x8xf32>
    %95 = arith.addf %93, %94 : vector<8x8xf32>
    %c40 = arith.constant 40 : index
    %c0_39 = arith.constant 0 : index
    %96 = vector.load %arg22[%c40, %c0_39] : memref<64x8xf32, #tpu.memory_space<vmem>>, vector<8x8xf32>
    tpu.vector_store %arg22[%c40, %c0_39], %95 {strides = array<i32>} : memref<64x8xf32, #tpu.memory_space<vmem>>, vector<8x8xf32>,
    %97 = vector.extract_strided_slice %32 {offsets = [8, 16], sizes = [8, 8], strides = [1, 1]} : vector<16x96xf32> to vector<8x8xf32>
    %98 = vector.extract_strided_slice %32 {offsets = [8, 48], sizes = [8, 8], strides = [1, 1]} : vector<16x96xf32> to vector<8x8xf32>
    %99 = arith.truncf %97 : vector<8x8xf32> to vector<8x8xbf16>
    %100 = arith.truncf %98 : vector<8x8xf32> to vector<8x8xbf16>
    %cst_40 = arith.constant dense<0.000000e+00> : vector<8x8xf32>
    %101 = tpu.matmul %99, %100, %cst_40 {dimension_numbers = #tpu.dot_dimension_numbers<[1], [1], [0], [0], [0, 0, 1, 0], [], []>} : vector<8x8xbf16>, vector<8x8xbf16>, vector<8x8xf32> -> vector<8x8xf32>
    %cst_41 = arith.constant 0.353553385 : f32
    %102 = vector.broadcast %cst_41 : f32 to vector<8x8xf32>
    %103 = arith.mulf %101, %102 : vector<8x8xf32>
    %104 = vector.broadcast %76 : vector<1x8xf32> to vector<8x8xf32>
    %105 = arith.addf %103, %104 : vector<8x8xf32>
    %c48 = arith.constant 48 : index
    %c0_42 = arith.constant 0 : index
    %106 = vector.load %arg22[%c48, %c0_42] : memref<64x8xf32, #tpu.memory_space<vmem>>, vector<8x8xf32>
    tpu.vector_store %arg22[%c48, %c0_42], %105 {strides = array<i32>} : memref<64x8xf32, #tpu.memory_space<vmem>>, vector<8x8xf32>,
    %107 = vector.extract_strided_slice %32 {offsets = [8, 24], sizes = [8, 8], strides = [1, 1]} : vector<16x96xf32> to vector<8x8xf32>
    %108 = vector.extract_strided_slice %32 {offsets = [8, 56], sizes = [8, 8], strides = [1, 1]} : vector<16x96xf32> to vector<8x8xf32>
    %109 = arith.truncf %107 : vector<8x8xf32> to vector<8x8xbf16>
    %110 = arith.truncf %108 : vector<8x8xf32> to vector<8x8xbf16>
    %cst_43 = arith.constant dense<0.000000e+00> : vector<8x8xf32>
    %111 = tpu.matmul %109, %110, %cst_43 {dimension_numbers = #tpu.dot_dimension_numbers<[1], [1], [0], [0], [0, 0, 1, 0], [], []>} : vector<8x8xbf16>, vector<8x8xbf16>, vector<8x8xf32> -> vector<8x8xf32>
    %cst_44 = arith.constant 0.353553385 : f32
    %112 = vector.broadcast %cst_44 : f32 to vector<8x8xf32>
    %113 = arith.mulf %111, %112 : vector<8x8xf32>
    %114 = vector.broadcast %76 : vector<1x8xf32> to vector<8x8xf32>
    %115 = arith.addf %113, %114 : vector<8x8xf32>
    %c56 = arith.constant 56 : index
    %c0_45 = arith.constant 0 : index
    %116 = vector.load %arg22[%c56, %c0_45] : memref<64x8xf32, #tpu.memory_space<vmem>>, vector<8x8xf32>
    tpu.vector_store %arg22[%c56, %c0_45], %115 {strides = array<i32>} : memref<64x8xf32, #tpu.memory_space<vmem>>, vector<8x8xf32>,
    %c0_46 = arith.constant 0 : index
    %c0_47 = arith.constant 0 : index
    %117 = vector.load %arg22[%c0_46, %c0_47] : memref<64x8xf32, #tpu.memory_space<vmem>>, vector<64x8xf32>
    %cst_48 = arith.constant dense<0xFF800000> : vector<64xf32>
    %118 = vector.multi_reduction <maximumf>, %117, %cst_48 [1] : vector<64x8xf32> to vector<64xf32>
    %119 = vector.shape_cast %118 : vector<64xf32> to vector<64x1xf32>
    %120 = vector.broadcast %119 : vector<64x1xf32> to vector<64x8xf32>
    %121 = arith.subf %117, %120 : vector<64x8xf32>
    %122 = math.exp %121 : vector<64x8xf32>
    %cst_49 = arith.constant dense<0.000000e+00> : vector<64xf32>
    %123 = vector.multi_reduction <add>, %122, %cst_49 [1] : vector<64x8xf32> to vector<64xf32>
    %124 = vector.shape_cast %123 : vector<64xf32> to vector<64x1xf32>
    %125 = tpu.reciprocal %124 {approx = true} : vector<64x1xf32> -> vector<64x1xf32>
    %126 = vector.broadcast %125 : vector<64x1xf32> to vector<64x8xf32>
    %127 = arith.mulf %122, %126 : vector<64x8xf32>
    %128 = vector.extract_strided_slice %32 {offsets = [0, 64], sizes = [8, 8], strides = [1, 1]} : vector<16x96xf32> to vector<8x8xf32>
    %129 = vector.extract_strided_slice %127 {offsets = [0, 0], sizes = [8, 8], strides = [1, 1]} : vector<64x8xf32> to vector<8x8xf32>
    %130 = arith.truncf %129 : vector<8x8xf32> to vector<8x8xbf16>
    %131 = arith.truncf %128 : vector<8x8xf32> to vector<8x8xbf16>
    %cst_50 = arith.constant dense<0.000000e+00> : vector<8x8xf32>
    %132 = tpu.matmul %130, %131, %cst_50 {dimension_numbers = #tpu.dot_dimension_numbers<[1], [0], [0], [1], [0, 0, 1, 1], [], []>} : vector<8x8xbf16>, vector<8x8xbf16>, vector<8x8xf32> -> vector<8x8xf32>
    %c0_51 = arith.constant 0 : index
    %c0_52 = arith.constant 0 : index
    %133 = vector.load %arg21[%c0_51, %c0_52] : memref<16x32xf32, #tpu.memory_space<vmem>>, vector<8x8xf32>
    tpu.vector_store %arg21[%c0_51, %c0_52], %132 {strides = array<i32>} : memref<16x32xf32, #tpu.memory_space<vmem>>, vector<8x8xf32>,
    %134 = vector.extract_strided_slice %32 {offsets = [0, 72], sizes = [8, 8], strides = [1, 1]} : vector<16x96xf32> to vector<8x8xf32>
    %135 = vector.extract_strided_slice %127 {offsets = [8, 0], sizes = [8, 8], strides = [1, 1]} : vector<64x8xf32> to vector<8x8xf32>
    %136 = arith.truncf %135 : vector<8x8xf32> to vector<8x8xbf16>
    %137 = arith.truncf %134 : vector<8x8xf32> to vector<8x8xbf16>
    %cst_53 = arith.constant dense<0.000000e+00> : vector<8x8xf32>
    %138 = tpu.matmul %136, %137, %cst_53 {dimension_numbers = #tpu.dot_dimension_numbers<[1], [0], [0], [1], [0, 0, 1, 1], [], []>} : vector<8x8xbf16>, vector<8x8xbf16>, vector<8x8xf32> -> vector<8x8xf32>
    %c0_54 = arith.constant 0 : index
    %c8_55 = arith.constant 8 : index
    %139 = vector.load %arg21[%c0_54, %c8_55] : memref<16x32xf32, #tpu.memory_space<vmem>>, vector<8x8xf32>
    tpu.vector_store %arg21[%c0_54, %c8_55], %138 {strides = array<i32>} : memref<16x32xf32, #tpu.memory_space<vmem>>, vector<8x8xf32>,
    %140 = vector.extract_strided_slice %32 {offsets = [0, 80], sizes = [8, 8], strides = [1, 1]} : vector<16x96xf32> to vector<8x8xf32>
    %141 = vector.extract_strided_slice %127 {offsets = [16, 0], sizes = [8, 8], strides = [1, 1]} : vector<64x8xf32> to vector<8x8xf32>
    %142 = arith.truncf %141 : vector<8x8xf32> to vector<8x8xbf16>
    %143 = arith.truncf %140 : vector<8x8xf32> to vector<8x8xbf16>
    %cst_56 = arith.constant dense<0.000000e+00> : vector<8x8xf32>
    %144 = tpu.matmul %142, %143, %cst_56 {dimension_numbers = #tpu.dot_dimension_numbers<[1], [0], [0], [1], [0, 0, 1, 1], [], []>} : vector<8x8xbf16>, vector<8x8xbf16>, vector<8x8xf32> -> vector<8x8xf32>
    %c0_57 = arith.constant 0 : index
    %c16_58 = arith.constant 16 : index
    %145 = vector.load %arg21[%c0_57, %c16_58] : memref<16x32xf32, #tpu.memory_space<vmem>>, vector<8x8xf32>
    tpu.vector_store %arg21[%c0_57, %c16_58], %144 {strides = array<i32>} : memref<16x32xf32, #tpu.memory_space<vmem>>, vector<8x8xf32>,
    %146 = vector.extract_strided_slice %32 {offsets = [0, 88], sizes = [8, 8], strides = [1, 1]} : vector<16x96xf32> to vector<8x8xf32>
    %147 = vector.extract_strided_slice %127 {offsets = [24, 0], sizes = [8, 8], strides = [1, 1]} : vector<64x8xf32> to vector<8x8xf32>
    %148 = arith.truncf %147 : vector<8x8xf32> to vector<8x8xbf16>
    %149 = arith.truncf %146 : vector<8x8xf32> to vector<8x8xbf16>
    %cst_59 = arith.constant dense<0.000000e+00> : vector<8x8xf32>
    %150 = tpu.matmul %148, %149, %cst_59 {dimension_numbers = #tpu.dot_dimension_numbers<[1], [0], [0], [1], [0, 0, 1, 1], [], []>} : vector<8x8xbf16>, vector<8x8xbf16>, vector<8x8xf32> -> vector<8x8xf32>
    %c0_60 = arith.constant 0 : index
    %c24_61 = arith.constant 24 : index
    %151 = vector.load %arg21[%c0_60, %c24_61] : memref<16x32xf32, #tpu.memory_space<vmem>>, vector<8x8xf32>
    tpu.vector_store %arg21[%c0_60, %c24_61], %150 {strides = array<i32>} : memref<16x32xf32, #tpu.memory_space<vmem>>, vector<8x8xf32>,
    %152 = vector.extract_strided_slice %32 {offsets = [8, 64], sizes = [8, 8], strides = [1, 1]} : vector<16x96xf32> to vector<8x8xf32>
    %153 = vector.extract_strided_slice %127 {offsets = [32, 0], sizes = [8, 8], strides = [1, 1]} : vector<64x8xf32> to vector<8x8xf32>
    %154 = arith.truncf %153 : vector<8x8xf32> to vector<8x8xbf16>
    %155 = arith.truncf %152 : vector<8x8xf32> to vector<8x8xbf16>
    %cst_62 = arith.constant dense<0.000000e+00> : vector<8x8xf32>
    %156 = tpu.matmul %154, %155, %cst_62 {dimension_numbers = #tpu.dot_dimension_numbers<[1], [0], [0], [1], [0, 0, 1, 1], [], []>} : vector<8x8xbf16>, vector<8x8xbf16>, vector<8x8xf32> -> vector<8x8xf32>
    %c8_63 = arith.constant 8 : index
    %c0_64 = arith.constant 0 : index
    %157 = vector.load %arg21[%c8_63, %c0_64] : memref<16x32xf32, #tpu.memory_space<vmem>>, vector<8x8xf32>
    tpu.vector_store %arg21[%c8_63, %c0_64], %156 {strides = array<i32>} : memref<16x32xf32, #tpu.memory_space<vmem>>, vector<8x8xf32>,
    %158 = vector.extract_strided_slice %32 {offsets = [8, 72], sizes = [8, 8], strides = [1, 1]} : vector<16x96xf32> to vector<8x8xf32>
    %159 = vector.extract_strided_slice %127 {offsets = [40, 0], sizes = [8, 8], strides = [1, 1]} : vector<64x8xf32> to vector<8x8xf32>
    %160 = arith.truncf %159 : vector<8x8xf32> to vector<8x8xbf16>
    %161 = arith.truncf %158 : vector<8x8xf32> to vector<8x8xbf16>
    %cst_65 = arith.constant dense<0.000000e+00> : vector<8x8xf32>
    %162 = tpu.matmul %160, %161, %cst_65 {dimension_numbers = #tpu.dot_dimension_numbers<[1], [0], [0], [1], [0, 0, 1, 1], [], []>} : vector<8x8xbf16>, vector<8x8xbf16>, vector<8x8xf32> -> vector<8x8xf32>
    %c8_66 = arith.constant 8 : index
    %c8_67 = arith.constant 8 : index
    %163 = vector.load %arg21[%c8_66, %c8_67] : memref<16x32xf32, #tpu.memory_space<vmem>>, vector<8x8xf32>
    tpu.vector_store %arg21[%c8_66, %c8_67], %162 {strides = array<i32>} : memref<16x32xf32, #tpu.memory_space<vmem>>, vector<8x8xf32>,
    %164 = vector.extract_strided_slice %32 {offsets = [8, 80], sizes = [8, 8], strides = [1, 1]} : vector<16x96xf32> to vector<8x8xf32>
    %165 = vector.extract_strided_slice %127 {offsets = [48, 0], sizes = [8, 8], strides = [1, 1]} : vector<64x8xf32> to vector<8x8xf32>
    %166 = arith.truncf %165 : vector<8x8xf32> to vector<8x8xbf16>
    %167 = arith.truncf %164 : vector<8x8xf32> to vector<8x8xbf16>
    %cst_68 = arith.constant dense<0.000000e+00> : vector<8x8xf32>
    %168 = tpu.matmul %166, %167, %cst_68 {dimension_numbers = #tpu.dot_dimension_numbers<[1], [0], [0], [1], [0, 0, 1, 1], [], []>} : vector<8x8xbf16>, vector<8x8xbf16>, vector<8x8xf32> -> vector<8x8xf32>
    %c8_69 = arith.constant 8 : index
    %c16_70 = arith.constant 16 : index
    %169 = vector.load %arg21[%c8_69, %c16_70] : memref<16x32xf32, #tpu.memory_space<vmem>>, vector<8x8xf32>
    tpu.vector_store %arg21[%c8_69, %c16_70], %168 {strides = array<i32>} : memref<16x32xf32, #tpu.memory_space<vmem>>, vector<8x8xf32>,
    %170 = vector.extract_strided_slice %32 {offsets = [8, 88], sizes = [8, 8], strides = [1, 1]} : vector<16x96xf32> to vector<8x8xf32>
    %171 = vector.extract_strided_slice %127 {offsets = [56, 0], sizes = [8, 8], strides = [1, 1]} : vector<64x8xf32> to vector<8x8xf32>
    %172 = arith.truncf %171 : vector<8x8xf32> to vector<8x8xbf16>
    %173 = arith.truncf %170 : vector<8x8xf32> to vector<8x8xbf16>
    %cst_71 = arith.constant dense<0.000000e+00> : vector<8x8xf32>
    %174 = tpu.matmul %172, %173, %cst_71 {dimension_numbers = #tpu.dot_dimension_numbers<[1], [0], [0], [1], [0, 0, 1, 1], [], []>} : vector<8x8xbf16>, vector<8x8xbf16>, vector<8x8xf32> -> vector<8x8xf32>
    %c8_72 = arith.constant 8 : index
    %c24_73 = arith.constant 24 : index
    %175 = vector.load %arg21[%c8_72, %c24_73] : memref<16x32xf32, #tpu.memory_space<vmem>>, vector<8x8xf32>
    tpu.vector_store %arg21[%c8_72, %c24_73], %174 {strides = array<i32>} : memref<16x32xf32, #tpu.memory_space<vmem>>, vector<8x8xf32>,
    %c0_74 = arith.constant 0 : index
    %c0_75 = arith.constant 0 : index
    %176 = vector.load %arg21[%c0_74, %c0_75] : memref<16x32xf32, #tpu.memory_space<vmem>>, vector<16x32xf32>
    %c0_76 = arith.constant 0 : index
    %c0_77 = arith.constant 0 : index
    %c0_78 = arith.constant 0 : index
    %177 = vector.load %arg6[%c0_76, %c0_77, %c0_78] : memref<2x32x32xbf16, #tpu.memory_space<vmem>>, vector<1x32x32xbf16>
    %178 = vector.shape_cast %177 : vector<1x32x32xbf16> to vector<32x32xbf16>
    %179 = arith.truncf %176 : vector<16x32xf32> to vector<16x32xbf16>
    %cst_79 = arith.constant dense<0.000000e+00> : vector<16x32xf32>
    %180 = tpu.matmul %179, %178, %cst_79 {dimension_numbers = #tpu.dot_dimension_numbers<[1], [0], [0], [1], [0, 0, 1, 1], [], []>} : vector<16x32xbf16>, vector<32x32xbf16>, vector<16x32xf32> -> vector<16x32xf32>
    %c0_80 = arith.constant 0 : index
    %c0_81 = arith.constant 0 : index
    %c0_82 = arith.constant 0 : index
    %181 = vector.load %arg7[%c0_80, %c0_81, %c0_82] : memref<2x1x32xf32, #tpu.memory_space<vmem>>, vector<1x1x32xf32>
    %182 = vector.shape_cast %181 : vector<1x1x32xf32> to vector<1x32xf32>
    %183 = vector.broadcast %182 : vector<1x32xf32> to vector<16x32xf32>
    %184 = arith.addf %180, %183 : vector<16x32xf32>
    %185 = arith.addf %24, %184 : vector<16x32xf32>
    %c0_83 = arith.constant 0 : index
    %c0_84 = arith.constant 0 : index
    %c0_85 = arith.constant 0 : index
    %186 = vector.load %arg8[%c0_83, %c0_84, %c0_85] : memref<2x1x32xf32, #tpu.memory_space<vmem>>, vector<1x1x32xf32>
    %187 = vector.shape_cast %186 : vector<1x1x32xf32> to vector<1x32xf32>
    %c0_86 = arith.constant 0 : index
    %c0_87 = arith.constant 0 : index
    %c0_88 = arith.constant 0 : index
    %188 = vector.load %arg9[%c0_86, %c0_87, %c0_88] : memref<2x1x32xf32, #tpu.memory_space<vmem>>, vector<1x1x32xf32>
    %189 = vector.shape_cast %188 : vector<1x1x32xf32> to vector<1x32xf32>
    %cst_89 = arith.constant dense<0.000000e+00> : vector<16xf32>
    %190 = vector.multi_reduction <add>, %185, %cst_89 [1] : vector<16x32xf32> to vector<16xf32>
    %191 = vector.shape_cast %190 : vector<16xf32> to vector<16x1xf32>
    %cst_90 = arith.constant 3.200000e+01 : f32
    %192 = vector.broadcast %cst_90 : f32 to vector<16x1xf32>
    %193 = arith.divf %191, %192 : vector<16x1xf32>
    %194 = vector.broadcast %193 : vector<16x1xf32> to vector<16x32xf32>
    %195 = arith.subf %185, %194 : vector<16x32xf32>
    %196 = arith.mulf %195, %195 : vector<16x32xf32>
    %cst_91 = arith.constant dense<0.000000e+00> : vector<16xf32>
    %197 = vector.multi_reduction <add>, %196, %cst_91 [1] : vector<16x32xf32> to vector<16xf32>
    %198 = vector.shape_cast %197 : vector<16xf32> to vector<16x1xf32>
    %cst_92 = arith.constant 3.200000e+01 : f32
    %199 = vector.broadcast %cst_92 : f32 to vector<16x1xf32>
    %200 = arith.divf %198, %199 : vector<16x1xf32>
    %201 = vector.broadcast %193 : vector<16x1xf32> to vector<16x32xf32>
    %202 = arith.subf %185, %201 : vector<16x32xf32>
    %cst_93 = arith.constant 9.99999996E-13 : f32
    %203 = vector.broadcast %cst_93 : f32 to vector<16x1xf32>
    %204 = arith.addf %200, %203 : vector<16x1xf32>
    %205 = math.rsqrt %204 : vector<16x1xf32>
    %206 = vector.broadcast %205 : vector<16x1xf32> to vector<16x32xf32>
    %207 = arith.mulf %202, %206 : vector<16x32xf32>
    %208 = vector.broadcast %187 : vector<1x32xf32> to vector<16x32xf32>
    %209 = arith.mulf %207, %208 : vector<16x32xf32>
    %210 = vector.broadcast %189 : vector<1x32xf32> to vector<16x32xf32>
    %211 = arith.addf %209, %210 : vector<16x32xf32>
    %c0_94 = arith.constant 0 : index
    %c0_95 = arith.constant 0 : index
    %c0_96 = arith.constant 0 : index
    %212 = vector.load %arg10[%c0_94, %c0_95, %c0_96] : memref<2x32x64xbf16, #tpu.memory_space<vmem>>, vector<1x32x64xbf16>
    %213 = vector.shape_cast %212 : vector<1x32x64xbf16> to vector<32x64xbf16>
    %214 = arith.truncf %211 : vector<16x32xf32> to vector<16x32xbf16>
    %cst_97 = arith.constant dense<0.000000e+00> : vector<16x64xf32>
    %215 = tpu.matmul %214, %213, %cst_97 {dimension_numbers = #tpu.dot_dimension_numbers<[1], [0], [0], [1], [0, 0, 1, 1], [], []>} : vector<16x32xbf16>, vector<32x64xbf16>, vector<16x64xf32> -> vector<16x64xf32>
    %c0_98 = arith.constant 0 : index
    %c0_99 = arith.constant 0 : index
    %c0_100 = arith.constant 0 : index
    %216 = vector.load %arg11[%c0_98, %c0_99, %c0_100] : memref<2x1x64xf32, #tpu.memory_space<vmem>>, vector<1x1x64xf32>
    %217 = vector.shape_cast %216 : vector<1x1x64xf32> to vector<1x64xf32>
    %218 = vector.broadcast %217 : vector<1x64xf32> to vector<16x64xf32>
    %219 = arith.addf %215, %218 : vector<16x64xf32>
    %220 = arith.mulf %219, %219 : vector<16x64xf32>
    %221 = arith.mulf %219, %220 : vector<16x64xf32>
    %cst_101 = arith.constant 4.471500e-02 : f32
    %222 = vector.broadcast %cst_101 : f32 to vector<16x64xf32>
    %223 = arith.mulf %222, %221 : vector<16x64xf32>
    %224 = arith.addf %219, %223 : vector<16x64xf32>
    %cst_102 = arith.constant 0.797884583 : f32
    %225 = vector.broadcast %cst_102 : f32 to vector<16x64xf32>
    %226 = arith.mulf %225, %224 : vector<16x64xf32>
    %227 = math.tanh %226 : vector<16x64xf32>
    %cst_103 = arith.constant 1.000000e+00 : f32
    %228 = vector.broadcast %cst_103 : f32 to vector<16x64xf32>
    %229 = arith.addf %228, %227 : vector<16x64xf32>
    %cst_104 = arith.constant 5.000000e-01 : f32
    %230 = vector.broadcast %cst_104 : f32 to vector<16x64xf32>
    %231 = arith.mulf %230, %229 : vector<16x64xf32>
    %232 = arith.mulf %219, %231 : vector<16x64xf32>
    %c0_105 = arith.constant 0 : index
    %c0_106 = arith.constant 0 : index
    %c0_107 = arith.constant 0 : index
    %233 = vector.load %arg12[%c0_105, %c0_106, %c0_107] : memref<2x64x32xbf16, #tpu.memory_space<vmem>>, vector<1x64x32xbf16>
    %234 = vector.shape_cast %233 : vector<1x64x32xbf16> to vector<64x32xbf16>
    %235 = arith.truncf %232 : vector<16x64xf32> to vector<16x64xbf16>
    %cst_108 = arith.constant dense<0.000000e+00> : vector<16x32xf32>
    %236 = tpu.matmul %235, %234, %cst_108 {dimension_numbers = #tpu.dot_dimension_numbers<[1], [0], [0], [1], [0, 0, 1, 1], [], []>} : vector<16x64xbf16>, vector<64x32xbf16>, vector<16x32xf32> -> vector<16x32xf32>
    %c0_109 = arith.constant 0 : index
    %c0_110 = arith.constant 0 : index
    %c0_111 = arith.constant 0 : index
    %237 = vector.load %arg13[%c0_109, %c0_110, %c0_111] : memref<2x1x32xf32, #tpu.memory_space<vmem>>, vector<1x1x32xf32>
    %238 = vector.shape_cast %237 : vector<1x1x32xf32> to vector<1x32xf32>
    %239 = vector.broadcast %238 : vector<1x32xf32> to vector<16x32xf32>
    %240 = arith.addf %236, %239 : vector<16x32xf32>
    %241 = arith.addf %211, %240 : vector<16x32xf32>
    %c0_112 = arith.constant 0 : index
    %c0_113 = arith.constant 0 : index
    %c0_114 = arith.constant 0 : index
    %242 = vector.load %arg14[%c0_112, %c0_113, %c0_114] : memref<2x1x32xf32, #tpu.memory_space<vmem>>, vector<1x1x32xf32>
    %243 = vector.shape_cast %242 : vector<1x1x32xf32> to vector<1x32xf32>
    %c0_115 = arith.constant 0 : index
    %c0_116 = arith.constant 0 : index
    %c0_117 = arith.constant 0 : index
    %244 = vector.load %arg15[%c0_115, %c0_116, %c0_117] : memref<2x1x32xf32, #tpu.memory_space<vmem>>, vector<1x1x32xf32>
    %245 = vector.shape_cast %244 : vector<1x1x32xf32> to vector<1x32xf32>
    %cst_118 = arith.constant dense<0.000000e+00> : vector<16xf32>
    %246 = vector.multi_reduction <add>, %241, %cst_118 [1] : vector<16x32xf32> to vector<16xf32>
    %247 = vector.shape_cast %246 : vector<16xf32> to vector<16x1xf32>
    %cst_119 = arith.constant 3.200000e+01 : f32
    %248 = vector.broadcast %cst_119 : f32 to vector<16x1xf32>
    %249 = arith.divf %247, %248 : vector<16x1xf32>
    %250 = vector.broadcast %249 : vector<16x1xf32> to vector<16x32xf32>
    %251 = arith.subf %241, %250 : vector<16x32xf32>
    %252 = arith.mulf %251, %251 : vector<16x32xf32>
    %cst_120 = arith.constant dense<0.000000e+00> : vector<16xf32>
    %253 = vector.multi_reduction <add>, %252, %cst_120 [1] : vector<16x32xf32> to vector<16xf32>
    %254 = vector.shape_cast %253 : vector<16xf32> to vector<16x1xf32>
    %cst_121 = arith.constant 3.200000e+01 : f32
    %255 = vector.broadcast %cst_121 : f32 to vector<16x1xf32>
    %256 = arith.divf %254, %255 : vector<16x1xf32>
    %257 = vector.broadcast %249 : vector<16x1xf32> to vector<16x32xf32>
    %258 = arith.subf %241, %257 : vector<16x32xf32>
    %cst_122 = arith.constant 9.99999996E-13 : f32
    %259 = vector.broadcast %cst_122 : f32 to vector<16x1xf32>
    %260 = arith.addf %256, %259 : vector<16x1xf32>
    %261 = math.rsqrt %260 : vector<16x1xf32>
    %262 = vector.broadcast %261 : vector<16x1xf32> to vector<16x32xf32>
    %263 = arith.mulf %258, %262 : vector<16x32xf32>
    %264 = vector.broadcast %243 : vector<1x32xf32> to vector<16x32xf32>
    %265 = arith.mulf %263, %264 : vector<16x32xf32>
    %266 = vector.broadcast %245 : vector<1x32xf32> to vector<16x32xf32>
    %267 = arith.addf %265, %266 : vector<16x32xf32>
    %c1_123 = arith.constant 1 : index
    %c0_124 = arith.constant 0 : index
    %c0_125 = arith.constant 0 : index
    %268 = vector.load %arg4[%c1_123, %c0_124, %c0_125] : memref<2x32x96xbf16, #tpu.memory_space<vmem>>, vector<1x32x96xbf16>
    %269 = vector.shape_cast %268 : vector<1x32x96xbf16> to vector<32x96xbf16>
    %270 = arith.truncf %267 : vector<16x32xf32> to vector<16x32xbf16>
    %cst_126 = arith.constant dense<0.000000e+00> : vector<16x96xf32>
    %271 = tpu.matmul %270, %269, %cst_126 {dimension_numbers = #tpu.dot_dimension_numbers<[1], [0], [0], [1], [0, 0, 1, 1], [], []>} : vector<16x32xbf16>, vector<32x96xbf16>, vector<16x96xf32> -> vector<16x96xf32>
    %c1_127 = arith.constant 1 : index
    %c0_128 = arith.constant 0 : index
    %c0_129 = arith.constant 0 : index
    %272 = vector.load %arg5[%c1_127, %c0_128, %c0_129] : memref<2x1x96xf32, #tpu.memory_space<vmem>>, vector<1x1x96xf32>
    %273 = vector.shape_cast %272 : vector<1x1x96xf32> to vector<1x96xf32>
    %274 = vector.broadcast %273 : vector<1x96xf32> to vector<16x96xf32>
    %275 = arith.addf %271, %274 : vector<16x96xf32>
    %c0_130 = arith.constant 0 : index
    %c0_131 = arith.constant 0 : index
    %c0_132 = arith.constant 0 : index
    %276 = vector.load %arg1[%c0_130, %c0_131, %c0_132] : memref<2x1x8xf32, #tpu.memory_space<vmem>>, vector<1x1x8xf32>
    %277 = vector.shape_cast %276 : vector<1x1x8xf32> to vector<1x8xf32>
    %278 = vector.extract_strided_slice %275 {offsets = [0, 0], sizes = [8, 8], strides = [1, 1]} : vector<16x96xf32> to vector<8x8xf32>
    %279 = vector.extract_strided_slice %275 {offsets = [0, 32], sizes = [8, 8], strides = [1, 1]} : vector<16x96xf32> to vector<8x8xf32>
    %280 = arith.truncf %278 : vector<8x8xf32> to vector<8x8xbf16>
    %281 = arith.truncf %279 : vector<8x8xf32> to vector<8x8xbf16>
    %cst_133 = arith.constant dense<0.000000e+00> : vector<8x8xf32>
    %282 = tpu.matmul %280, %281, %cst_133 {dimension_numbers = #tpu.dot_dimension_numbers<[1], [1], [0], [0], [0, 0, 1, 0], [], []>} : vector<8x8xbf16>, vector<8x8xbf16>, vector<8x8xf32> -> vector<8x8xf32>
    %cst_134 = arith.constant 0.353553385 : f32
    %283 = vector.broadcast %cst_134 : f32 to vector<8x8xf32>
    %284 = arith.mulf %282, %283 : vector<8x8xf32>
    %285 = vector.broadcast %277 : vector<1x8xf32> to vector<8x8xf32>
    %286 = arith.addf %284, %285 : vector<8x8xf32>
    %c0_135 = arith.constant 0 : index
    %c0_136 = arith.constant 0 : index
    %287 = vector.load %arg22[%c0_135, %c0_136] : memref<64x8xf32, #tpu.memory_space<vmem>>, vector<8x8xf32>
    tpu.vector_store %arg22[%c0_135, %c0_136], %286 {strides = array<i32>} : memref<64x8xf32, #tpu.memory_space<vmem>>, vector<8x8xf32>,
    %288 = vector.extract_strided_slice %275 {offsets = [0, 8], sizes = [8, 8], strides = [1, 1]} : vector<16x96xf32> to vector<8x8xf32>
    %289 = vector.extract_strided_slice %275 {offsets = [0, 40], sizes = [8, 8], strides = [1, 1]} : vector<16x96xf32> to vector<8x8xf32>
    %290 = arith.truncf %288 : vector<8x8xf32> to vector<8x8xbf16>
    %291 = arith.truncf %289 : vector<8x8xf32> to vector<8x8xbf16>
    %cst_137 = arith.constant dense<0.000000e+00> : vector<8x8xf32>
    %292 = tpu.matmul %290, %291, %cst_137 {dimension_numbers = #tpu.dot_dimension_numbers<[1], [1], [0], [0], [0, 0, 1, 0], [], []>} : vector<8x8xbf16>, vector<8x8xbf16>, vector<8x8xf32> -> vector<8x8xf32>
    %cst_138 = arith.constant 0.353553385 : f32
    %293 = vector.broadcast %cst_138 : f32 to vector<8x8xf32>
    %294 = arith.mulf %292, %293 : vector<8x8xf32>
    %295 = vector.broadcast %277 : vector<1x8xf32> to vector<8x8xf32>
    %296 = arith.addf %294, %295 : vector<8x8xf32>
    %c8_139 = arith.constant 8 : index
    %c0_140 = arith.constant 0 : index
    %297 = vector.load %arg22[%c8_139, %c0_140] : memref<64x8xf32, #tpu.memory_space<vmem>>, vector<8x8xf32>
    tpu.vector_store %arg22[%c8_139, %c0_140], %296 {strides = array<i32>} : memref<64x8xf32, #tpu.memory_space<vmem>>, vector<8x8xf32>,
    %298 = vector.extract_strided_slice %275 {offsets = [0, 16], sizes = [8, 8], strides = [1, 1]} : vector<16x96xf32> to vector<8x8xf32>
    %299 = vector.extract_strided_slice %275 {offsets = [0, 48], sizes = [8, 8], strides = [1, 1]} : vector<16x96xf32> to vector<8x8xf32>
    %300 = arith.truncf %298 : vector<8x8xf32> to vector<8x8xbf16>
    %301 = arith.truncf %299 : vector<8x8xf32> to vector<8x8xbf16>
    %cst_141 = arith.constant dense<0.000000e+00> : vector<8x8xf32>
    %302 = tpu.matmul %300, %301, %cst_141 {dimension_numbers = #tpu.dot_dimension_numbers<[1], [1], [0], [0], [0, 0, 1, 0], [], []>} : vector<8x8xbf16>, vector<8x8xbf16>, vector<8x8xf32> -> vector<8x8xf32>
    %cst_142 = arith.constant 0.353553385 : f32
    %303 = vector.broadcast %cst_142 : f32 to vector<8x8xf32>
    %304 = arith.mulf %302, %303 : vector<8x8xf32>
    %305 = vector.broadcast %277 : vector<1x8xf32> to vector<8x8xf32>
    %306 = arith.addf %304, %305 : vector<8x8xf32>
    %c16_143 = arith.constant 16 : index
    %c0_144 = arith.constant 0 : index
    %307 = vector.load %arg22[%c16_143, %c0_144] : memref<64x8xf32, #tpu.memory_space<vmem>>, vector<8x8xf32>
    tpu.vector_store %arg22[%c16_143, %c0_144], %306 {strides = array<i32>} : memref<64x8xf32, #tpu.memory_space<vmem>>, vector<8x8xf32>,
    %308 = vector.extract_strided_slice %275 {offsets = [0, 24], sizes = [8, 8], strides = [1, 1]} : vector<16x96xf32> to vector<8x8xf32>
    %309 = vector.extract_strided_slice %275 {offsets = [0, 56], sizes = [8, 8], strides = [1, 1]} : vector<16x96xf32> to vector<8x8xf32>
    %310 = arith.truncf %308 : vector<8x8xf32> to vector<8x8xbf16>
    %311 = arith.truncf %309 : vector<8x8xf32> to vector<8x8xbf16>
    %cst_145 = arith.constant dense<0.000000e+00> : vector<8x8xf32>
    %312 = tpu.matmul %310, %311, %cst_145 {dimension_numbers = #tpu.dot_dimension_numbers<[1], [1], [0], [0], [0, 0, 1, 0], [], []>} : vector<8x8xbf16>, vector<8x8xbf16>, vector<8x8xf32> -> vector<8x8xf32>
    %cst_146 = arith.constant 0.353553385 : f32
    %313 = vector.broadcast %cst_146 : f32 to vector<8x8xf32>
    %314 = arith.mulf %312, %313 : vector<8x8xf32>
    %315 = vector.broadcast %277 : vector<1x8xf32> to vector<8x8xf32>
    %316 = arith.addf %314, %315 : vector<8x8xf32>
    %c24_147 = arith.constant 24 : index
    %c0_148 = arith.constant 0 : index
    %317 = vector.load %arg22[%c24_147, %c0_148] : memref<64x8xf32, #tpu.memory_space<vmem>>, vector<8x8xf32>
    tpu.vector_store %arg22[%c24_147, %c0_148], %316 {strides = array<i32>} : memref<64x8xf32, #tpu.memory_space<vmem>>, vector<8x8xf32>,
    %c1_149 = arith.constant 1 : index
    %c0_150 = arith.constant 0 : index
    %c0_151 = arith.constant 0 : index
    %318 = vector.load %arg1[%c1_149, %c0_150, %c0_151] : memref<2x1x8xf32, #tpu.memory_space<vmem>>, vector<1x1x8xf32>
    %319 = vector.shape_cast %318 : vector<1x1x8xf32> to vector<1x8xf32>
    %320 = vector.extract_strided_slice %275 {offsets = [8, 0], sizes = [8, 8], strides = [1, 1]} : vector<16x96xf32> to vector<8x8xf32>
    %321 = vector.extract_strided_slice %275 {offsets = [8, 32], sizes = [8, 8], strides = [1, 1]} : vector<16x96xf32> to vector<8x8xf32>
    %322 = arith.truncf %320 : vector<8x8xf32> to vector<8x8xbf16>
    %323 = arith.truncf %321 : vector<8x8xf32> to vector<8x8xbf16>
    %cst_152 = arith.constant dense<0.000000e+00> : vector<8x8xf32>
    %324 = tpu.matmul %322, %323, %cst_152 {dimension_numbers = #tpu.dot_dimension_numbers<[1], [1], [0], [0], [0, 0, 1, 0], [], []>} : vector<8x8xbf16>, vector<8x8xbf16>, vector<8x8xf32> -> vector<8x8xf32>
    %cst_153 = arith.constant 0.353553385 : f32
    %325 = vector.broadcast %cst_153 : f32 to vector<8x8xf32>
    %326 = arith.mulf %324, %325 : vector<8x8xf32>
    %327 = vector.broadcast %319 : vector<1x8xf32> to vector<8x8xf32>
    %328 = arith.addf %326, %327 : vector<8x8xf32>
    %c32_154 = arith.constant 32 : index
    %c0_155 = arith.constant 0 : index
    %329 = vector.load %arg22[%c32_154, %c0_155] : memref<64x8xf32, #tpu.memory_space<vmem>>, vector<8x8xf32>
    tpu.vector_store %arg22[%c32_154, %c0_155], %328 {strides = array<i32>} : memref<64x8xf32, #tpu.memory_space<vmem>>, vector<8x8xf32>,
    %330 = vector.extract_strided_slice %275 {offsets = [8, 8], sizes = [8, 8], strides = [1, 1]} : vector<16x96xf32> to vector<8x8xf32>
    %331 = vector.extract_strided_slice %275 {offsets = [8, 40], sizes = [8, 8], strides = [1, 1]} : vector<16x96xf32> to vector<8x8xf32>
    %332 = arith.truncf %330 : vector<8x8xf32> to vector<8x8xbf16>
    %333 = arith.truncf %331 : vector<8x8xf32> to vector<8x8xbf16>
    %cst_156 = arith.constant dense<0.000000e+00> : vector<8x8xf32>
    %334 = tpu.matmul %332, %333, %cst_156 {dimension_numbers = #tpu.dot_dimension_numbers<[1], [1], [0], [0], [0, 0, 1, 0], [], []>} : vector<8x8xbf16>, vector<8x8xbf16>, vector<8x8xf32> -> vector<8x8xf32>
    %cst_157 = arith.constant 0.353553385 : f32
    %335 = vector.broadcast %cst_157 : f32 to vector<8x8xf32>
    %336 = arith.mulf %334, %335 : vector<8x8xf32>
    %337 = vector.broadcast %319 : vector<1x8xf32> to vector<8x8xf32>
    %338 = arith.addf %336, %337 : vector<8x8xf32>
    %c40_158 = arith.constant 40 : index
    %c0_159 = arith.constant 0 : index
    %339 = vector.load %arg22[%c40_158, %c0_159] : memref<64x8xf32, #tpu.memory_space<vmem>>, vector<8x8xf32>
    tpu.vector_store %arg22[%c40_158, %c0_159], %338 {strides = array<i32>} : memref<64x8xf32, #tpu.memory_space<vmem>>, vector<8x8xf32>,
    %340 = vector.extract_strided_slice %275 {offsets = [8, 16], sizes = [8, 8], strides = [1, 1]} : vector<16x96xf32> to vector<8x8xf32>
    %341 = vector.extract_strided_slice %275 {offsets = [8, 48], sizes = [8, 8], strides = [1, 1]} : vector<16x96xf32> to vector<8x8xf32>
    %342 = arith.truncf %340 : vector<8x8xf32> to vector<8x8xbf16>
    %343 = arith.truncf %341 : vector<8x8xf32> to vector<8x8xbf16>
    %cst_160 = arith.constant dense<0.000000e+00> : vector<8x8xf32>
    %344 = tpu.matmul %342, %343, %cst_160 {dimension_numbers = #tpu.dot_dimension_numbers<[1], [1], [0], [0], [0, 0, 1, 0], [], []>} : vector<8x8xbf16>, vector<8x8xbf16>, vector<8x8xf32> -> vector<8x8xf32>
    %cst_161 = arith.constant 0.353553385 : f32
    %345 = vector.broadcast %cst_161 : f32 to vector<8x8xf32>
    %346 = arith.mulf %344, %345 : vector<8x8xf32>
    %347 = vector.broadcast %319 : vector<1x8xf32> to vector<8x8xf32>
    %348 = arith.addf %346, %347 : vector<8x8xf32>
    %c48_162 = arith.constant 48 : index
    %c0_163 = arith.constant 0 : index
    %349 = vector.load %arg22[%c48_162, %c0_163] : memref<64x8xf32, #tpu.memory_space<vmem>>, vector<8x8xf32>
    tpu.vector_store %arg22[%c48_162, %c0_163], %348 {strides = array<i32>} : memref<64x8xf32, #tpu.memory_space<vmem>>, vector<8x8xf32>,
    %350 = vector.extract_strided_slice %275 {offsets = [8, 24], sizes = [8, 8], strides = [1, 1]} : vector<16x96xf32> to vector<8x8xf32>
    %351 = vector.extract_strided_slice %275 {offsets = [8, 56], sizes = [8, 8], strides = [1, 1]} : vector<16x96xf32> to vector<8x8xf32>
    %352 = arith.truncf %350 : vector<8x8xf32> to vector<8x8xbf16>
    %353 = arith.truncf %351 : vector<8x8xf32> to vector<8x8xbf16>
    %cst_164 = arith.constant dense<0.000000e+00> : vector<8x8xf32>
    %354 = tpu.matmul %352, %353, %cst_164 {dimension_numbers = #tpu.dot_dimension_numbers<[1], [1], [0], [0], [0, 0, 1, 0], [], []>} : vector<8x8xbf16>, vector<8x8xbf16>, vector<8x8xf32> -> vector<8x8xf32>
    %cst_165 = arith.constant 0.353553385 : f32
    %355 = vector.broadcast %cst_165 : f32 to vector<8x8xf32>
    %356 = arith.mulf %354, %355 : vector<8x8xf32>
    %357 = vector.broadcast %319 : vector<1x8xf32> to vector<8x8xf32>
    %358 = arith.addf %356, %357 : vector<8x8xf32>
    %c56_166 = arith.constant 56 : index
    %c0_167 = arith.constant 0 : index
    %359 = vector.load %arg22[%c56_166, %c0_167] : memref<64x8xf32, #tpu.memory_space<vmem>>, vector<8x8xf32>
    tpu.vector_store %arg22[%c56_166, %c0_167], %358 {strides = array<i32>} : memref<64x8xf32, #tpu.memory_space<vmem>>, vector<8x8xf32>,
    %c0_168 = arith.constant 0 : index
    %c0_169 = arith.constant 0 : index
    %360 = vector.load %arg22[%c0_168, %c0_169] : memref<64x8xf32, #tpu.memory_space<vmem>>, vector<64x8xf32>
    %cst_170 = arith.constant dense<0xFF800000> : vector<64xf32>
    %361 = vector.multi_reduction <maximumf>, %360, %cst_170 [1] : vector<64x8xf32> to vector<64xf32>
    %362 = vector.shape_cast %361 : vector<64xf32> to vector<64x1xf32>
    %363 = vector.broadcast %362 : vector<64x1xf32> to vector<64x8xf32>
    %364 = arith.subf %360, %363 : vector<64x8xf32>
    %365 = math.exp %364 : vector<64x8xf32>
    %cst_171 = arith.constant dense<0.000000e+00> : vector<64xf32>
    %366 = vector.multi_reduction <add>, %365, %cst_171 [1] : vector<64x8xf32> to vector<64xf32>
    %367 = vector.shape_cast %366 : vector<64xf32> to vector<64x1xf32>
    %368 = tpu.reciprocal %367 {approx = true} : vector<64x1xf32> -> vector<64x1xf32>
    %369 = vector.broadcast %368 : vector<64x1xf32> to vector<64x8xf32>
    %370 = arith.mulf %365, %369 : vector<64x8xf32>
    %371 = vector.extract_strided_slice %275 {offsets = [0, 64], sizes = [8, 8], strides = [1, 1]} : vector<16x96xf32> to vector<8x8xf32>
    %372 = vector.extract_strided_slice %370 {offsets = [0, 0], sizes = [8, 8], strides = [1, 1]} : vector<64x8xf32> to vector<8x8xf32>
    %373 = arith.truncf %372 : vector<8x8xf32> to vector<8x8xbf16>
    %374 = arith.truncf %371 : vector<8x8xf32> to vector<8x8xbf16>
    %cst_172 = arith.constant dense<0.000000e+00> : vector<8x8xf32>
    %375 = tpu.matmul %373, %374, %cst_172 {dimension_numbers = #tpu.dot_dimension_numbers<[1], [0], [0], [1], [0, 0, 1, 1], [], []>} : vector<8x8xbf16>, vector<8x8xbf16>, vector<8x8xf32> -> vector<8x8xf32>
    %c0_173 = arith.constant 0 : index
    %c0_174 = arith.constant 0 : index
    %376 = vector.load %arg21[%c0_173, %c0_174] : memref<16x32xf32, #tpu.memory_space<vmem>>, vector<8x8xf32>
    tpu.vector_store %arg21[%c0_173, %c0_174], %375 {strides = array<i32>} : memref<16x32xf32, #tpu.memory_space<vmem>>, vector<8x8xf32>,
    %377 = vector.extract_strided_slice %275 {offsets = [0, 72], sizes = [8, 8], strides = [1, 1]} : vector<16x96xf32> to vector<8x8xf32>
    %378 = vector.extract_strided_slice %370 {offsets = [8, 0], sizes = [8, 8], strides = [1, 1]} : vector<64x8xf32> to vector<8x8xf32>
    %379 = arith.truncf %378 : vector<8x8xf32> to vector<8x8xbf16>
    %380 = arith.truncf %377 : vector<8x8xf32> to vector<8x8xbf16>
    %cst_175 = arith.constant dense<0.000000e+00> : vector<8x8xf32>
    %381 = tpu.matmul %379, %380, %cst_175 {dimension_numbers = #tpu.dot_dimension_numbers<[1], [0], [0], [1], [0, 0, 1, 1], [], []>} : vector<8x8xbf16>, vector<8x8xbf16>, vector<8x8xf32> -> vector<8x8xf32>
    %c0_176 = arith.constant 0 : index
    %c8_177 = arith.constant 8 : index
    %382 = vector.load %arg21[%c0_176, %c8_177] : memref<16x32xf32, #tpu.memory_space<vmem>>, vector<8x8xf32>
    tpu.vector_store %arg21[%c0_176, %c8_177], %381 {strides = array<i32>} : memref<16x32xf32, #tpu.memory_space<vmem>>, vector<8x8xf32>,
    %383 = vector.extract_strided_slice %275 {offsets = [0, 80], sizes = [8, 8], strides = [1, 1]} : vector<16x96xf32> to vector<8x8xf32>
    %384 = vector.extract_strided_slice %370 {offsets = [16, 0], sizes = [8, 8], strides = [1, 1]} : vector<64x8xf32> to vector<8x8xf32>
    %385 = arith.truncf %384 : vector<8x8xf32> to vector<8x8xbf16>
    %386 = arith.truncf %383 : vector<8x8xf32> to vector<8x8xbf16>
    %cst_178 = arith.constant dense<0.000000e+00> : vector<8x8xf32>
    %387 = tpu.matmul %385, %386, %cst_178 {dimension_numbers = #tpu.dot_dimension_numbers<[1], [0], [0], [1], [0, 0, 1, 1], [], []>} : vector<8x8xbf16>, vector<8x8xbf16>, vector<8x8xf32> -> vector<8x8xf32>
    %c0_179 = arith.constant 0 : index
    %c16_180 = arith.constant 16 : index
    %388 = vector.load %arg21[%c0_179, %c16_180] : memref<16x32xf32, #tpu.memory_space<vmem>>, vector<8x8xf32>
    tpu.vector_store %arg21[%c0_179, %c16_180], %387 {strides = array<i32>} : memref<16x32xf32, #tpu.memory_space<vmem>>, vector<8x8xf32>,
    %389 = vector.extract_strided_slice %275 {offsets = [0, 88], sizes = [8, 8], strides = [1, 1]} : vector<16x96xf32> to vector<8x8xf32>
    %390 = vector.extract_strided_slice %370 {offsets = [24, 0], sizes = [8, 8], strides = [1, 1]} : vector<64x8xf32> to vector<8x8xf32>
    %391 = arith.truncf %390 : vector<8x8xf32> to vector<8x8xbf16>
    %392 = arith.truncf %389 : vector<8x8xf32> to vector<8x8xbf16>
    %cst_181 = arith.constant dense<0.000000e+00> : vector<8x8xf32>
    %393 = tpu.matmul %391, %392, %cst_181 {dimension_numbers = #tpu.dot_dimension_numbers<[1], [0], [0], [1], [0, 0, 1, 1], [], []>} : vector<8x8xbf16>, vector<8x8xbf16>, vector<8x8xf32> -> vector<8x8xf32>
    %c0_182 = arith.constant 0 : index
    %c24_183 = arith.constant 24 : index
    %394 = vector.load %arg21[%c0_182, %c24_183] : memref<16x32xf32, #tpu.memory_space<vmem>>, vector<8x8xf32>
    tpu.vector_store %arg21[%c0_182, %c24_183], %393 {strides = array<i32>} : memref<16x32xf32, #tpu.memory_space<vmem>>, vector<8x8xf32>,
    %395 = vector.extract_strided_slice %275 {offsets = [8, 64], sizes = [8, 8], strides = [1, 1]} : vector<16x96xf32> to vector<8x8xf32>
    %396 = vector.extract_strided_slice %370 {offsets = [32, 0], sizes = [8, 8], strides = [1, 1]} : vector<64x8xf32> to vector<8x8xf32>
    %397 = arith.truncf %396 : vector<8x8xf32> to vector<8x8xbf16>
    %398 = arith.truncf %395 : vector<8x8xf32> to vector<8x8xbf16>
    %cst_184 = arith.constant dense<0.000000e+00> : vector<8x8xf32>
    %399 = tpu.matmul %397, %398, %cst_184 {dimension_numbers = #tpu.dot_dimension_numbers<[1], [0], [0], [1], [0, 0, 1, 1], [], []>} : vector<8x8xbf16>, vector<8x8xbf16>, vector<8x8xf32> -> vector<8x8xf32>
    %c8_185 = arith.constant 8 : index
    %c0_186 = arith.constant 0 : index
    %400 = vector.load %arg21[%c8_185, %c0_186] : memref<16x32xf32, #tpu.memory_space<vmem>>, vector<8x8xf32>
    tpu.vector_store %arg21[%c8_185, %c0_186], %399 {strides = array<i32>} : memref<16x32xf32, #tpu.memory_space<vmem>>, vector<8x8xf32>,
    %401 = vector.extract_strided_slice %275 {offsets = [8, 72], sizes = [8, 8], strides = [1, 1]} : vector<16x96xf32> to vector<8x8xf32>
    %402 = vector.extract_strided_slice %370 {offsets = [40, 0], sizes = [8, 8], strides = [1, 1]} : vector<64x8xf32> to vector<8x8xf32>
    %403 = arith.truncf %402 : vector<8x8xf32> to vector<8x8xbf16>
    %404 = arith.truncf %401 : vector<8x8xf32> to vector<8x8xbf16>
    %cst_187 = arith.constant dense<0.000000e+00> : vector<8x8xf32>
    %405 = tpu.matmul %403, %404, %cst_187 {dimension_numbers = #tpu.dot_dimension_numbers<[1], [0], [0], [1], [0, 0, 1, 1], [], []>} : vector<8x8xbf16>, vector<8x8xbf16>, vector<8x8xf32> -> vector<8x8xf32>
    %c8_188 = arith.constant 8 : index
    %c8_189 = arith.constant 8 : index
    %406 = vector.load %arg21[%c8_188, %c8_189] : memref<16x32xf32, #tpu.memory_space<vmem>>, vector<8x8xf32>
    tpu.vector_store %arg21[%c8_188, %c8_189], %405 {strides = array<i32>} : memref<16x32xf32, #tpu.memory_space<vmem>>, vector<8x8xf32>,
    %407 = vector.extract_strided_slice %275 {offsets = [8, 80], sizes = [8, 8], strides = [1, 1]} : vector<16x96xf32> to vector<8x8xf32>
    %408 = vector.extract_strided_slice %370 {offsets = [48, 0], sizes = [8, 8], strides = [1, 1]} : vector<64x8xf32> to vector<8x8xf32>
    %409 = arith.truncf %408 : vector<8x8xf32> to vector<8x8xbf16>
    %410 = arith.truncf %407 : vector<8x8xf32> to vector<8x8xbf16>
    %cst_190 = arith.constant dense<0.000000e+00> : vector<8x8xf32>
    %411 = tpu.matmul %409, %410, %cst_190 {dimension_numbers = #tpu.dot_dimension_numbers<[1], [0], [0], [1], [0, 0, 1, 1], [], []>} : vector<8x8xbf16>, vector<8x8xbf16>, vector<8x8xf32> -> vector<8x8xf32>
    %c8_191 = arith.constant 8 : index
    %c16_192 = arith.constant 16 : index
    %412 = vector.load %arg21[%c8_191, %c16_192] : memref<16x32xf32, #tpu.memory_space<vmem>>, vector<8x8xf32>
    tpu.vector_store %arg21[%c8_191, %c16_192], %411 {strides = array<i32>} : memref<16x32xf32, #tpu.memory_space<vmem>>, vector<8x8xf32>,
    %413 = vector.extract_strided_slice %275 {offsets = [8, 88], sizes = [8, 8], strides = [1, 1]} : vector<16x96xf32> to vector<8x8xf32>
    %414 = vector.extract_strided_slice %370 {offsets = [56, 0], sizes = [8, 8], strides = [1, 1]} : vector<64x8xf32> to vector<8x8xf32>
    %415 = arith.truncf %414 : vector<8x8xf32> to vector<8x8xbf16>
    %416 = arith.truncf %413 : vector<8x8xf32> to vector<8x8xbf16>
    %cst_193 = arith.constant dense<0.000000e+00> : vector<8x8xf32>
    %417 = tpu.matmul %415, %416, %cst_193 {dimension_numbers = #tpu.dot_dimension_numbers<[1], [0], [0], [1], [0, 0, 1, 1], [], []>} : vector<8x8xbf16>, vector<8x8xbf16>, vector<8x8xf32> -> vector<8x8xf32>
    %c8_194 = arith.constant 8 : index
    %c24_195 = arith.constant 24 : index
    %418 = vector.load %arg21[%c8_194, %c24_195] : memref<16x32xf32, #tpu.memory_space<vmem>>, vector<8x8xf32>
    tpu.vector_store %arg21[%c8_194, %c24_195], %417 {strides = array<i32>} : memref<16x32xf32, #tpu.memory_space<vmem>>, vector<8x8xf32>,
    %c0_196 = arith.constant 0 : index
    %c0_197 = arith.constant 0 : index
    %419 = vector.load %arg21[%c0_196, %c0_197] : memref<16x32xf32, #tpu.memory_space<vmem>>, vector<16x32xf32>
    %c1_198 = arith.constant 1 : index
    %c0_199 = arith.constant 0 : index
    %c0_200 = arith.constant 0 : index
    %420 = vector.load %arg6[%c1_198, %c0_199, %c0_200] : memref<2x32x32xbf16, #tpu.memory_space<vmem>>, vector<1x32x32xbf16>
    %421 = vector.shape_cast %420 : vector<1x32x32xbf16> to vector<32x32xbf16>
    %422 = arith.truncf %419 : vector<16x32xf32> to vector<16x32xbf16>
    %cst_201 = arith.constant dense<0.000000e+00> : vector<16x32xf32>
    %423 = tpu.matmul %422, %421, %cst_201 {dimension_numbers = #tpu.dot_dimension_numbers<[1], [0], [0], [1], [0, 0, 1, 1], [], []>} : vector<16x32xbf16>, vector<32x32xbf16>, vector<16x32xf32> -> vector<16x32xf32>
    %c1_202 = arith.constant 1 : index
    %c0_203 = arith.constant 0 : index
    %c0_204 = arith.constant 0 : index
    %424 = vector.load %arg7[%c1_202, %c0_203, %c0_204] : memref<2x1x32xf32, #tpu.memory_space<vmem>>, vector<1x1x32xf32>
    %425 = vector.shape_cast %424 : vector<1x1x32xf32> to vector<1x32xf32>
    %426 = vector.broadcast %425 : vector<1x32xf32> to vector<16x32xf32>
    %427 = arith.addf %423, %426 : vector<16x32xf32>
    %428 = arith.addf %267, %427 : vector<16x32xf32>
    %c1_205 = arith.constant 1 : index
    %c0_206 = arith.constant 0 : index
    %c0_207 = arith.constant 0 : index
    %429 = vector.load %arg8[%c1_205, %c0_206, %c0_207] : memref<2x1x32xf32, #tpu.memory_space<vmem>>, vector<1x1x32xf32>
    %430 = vector.shape_cast %429 : vector<1x1x32xf32> to vector<1x32xf32>
    %c1_208 = arith.constant 1 : index
    %c0_209 = arith.constant 0 : index
    %c0_210 = arith.constant 0 : index
    %431 = vector.load %arg9[%c1_208, %c0_209, %c0_210] : memref<2x1x32xf32, #tpu.memory_space<vmem>>, vector<1x1x32xf32>
    %432 = vector.shape_cast %431 : vector<1x1x32xf32> to vector<1x32xf32>
    %cst_211 = arith.constant dense<0.000000e+00> : vector<16xf32>
    %433 = vector.multi_reduction <add>, %428, %cst_211 [1] : vector<16x32xf32> to vector<16xf32>
    %434 = vector.shape_cast %433 : vector<16xf32> to vector<16x1xf32>
    %cst_212 = arith.constant 3.200000e+01 : f32
    %435 = vector.broadcast %cst_212 : f32 to vector<16x1xf32>
    %436 = arith.divf %434, %435 : vector<16x1xf32>
    %437 = vector.broadcast %436 : vector<16x1xf32> to vector<16x32xf32>
    %438 = arith.subf %428, %437 : vector<16x32xf32>
    %439 = arith.mulf %438, %438 : vector<16x32xf32>
    %cst_213 = arith.constant dense<0.000000e+00> : vector<16xf32>
    %440 = vector.multi_reduction <add>, %439, %cst_213 [1] : vector<16x32xf32> to vector<16xf32>
    %441 = vector.shape_cast %440 : vector<16xf32> to vector<16x1xf32>
    %cst_214 = arith.constant 3.200000e+01 : f32
    %442 = vector.broadcast %cst_214 : f32 to vector<16x1xf32>
    %443 = arith.divf %441, %442 : vector<16x1xf32>
    %444 = vector.broadcast %436 : vector<16x1xf32> to vector<16x32xf32>
    %445 = arith.subf %428, %444 : vector<16x32xf32>
    %cst_215 = arith.constant 9.99999996E-13 : f32
    %446 = vector.broadcast %cst_215 : f32 to vector<16x1xf32>
    %447 = arith.addf %443, %446 : vector<16x1xf32>
    %448 = math.rsqrt %447 : vector<16x1xf32>
    %449 = vector.broadcast %448 : vector<16x1xf32> to vector<16x32xf32>
    %450 = arith.mulf %445, %449 : vector<16x32xf32>
    %451 = vector.broadcast %430 : vector<1x32xf32> to vector<16x32xf32>
    %452 = arith.mulf %450, %451 : vector<16x32xf32>
    %453 = vector.broadcast %432 : vector<1x32xf32> to vector<16x32xf32>
    %454 = arith.addf %452, %453 : vector<16x32xf32>
    %c1_216 = arith.constant 1 : index
    %c0_217 = arith.constant 0 : index
    %c0_218 = arith.constant 0 : index
    %455 = vector.load %arg10[%c1_216, %c0_217, %c0_218] : memref<2x32x64xbf16, #tpu.memory_space<vmem>>, vector<1x32x64xbf16>
    %456 = vector.shape_cast %455 : vector<1x32x64xbf16> to vector<32x64xbf16>
    %457 = arith.truncf %454 : vector<16x32xf32> to vector<16x32xbf16>
    %cst_219 = arith.constant dense<0.000000e+00> : vector<16x64xf32>
    %458 = tpu.matmul %457, %456, %cst_219 {dimension_numbers = #tpu.dot_dimension_numbers<[1], [0], [0], [1], [0, 0, 1, 1], [], []>} : vector<16x32xbf16>, vector<32x64xbf16>, vector<16x64xf32> -> vector<16x64xf32>
    %c1_220 = arith.constant 1 : index
    %c0_221 = arith.constant 0 : index
    %c0_222 = arith.constant 0 : index
    %459 = vector.load %arg11[%c1_220, %c0_221, %c0_222] : memref<2x1x64xf32, #tpu.memory_space<vmem>>, vector<1x1x64xf32>
    %460 = vector.shape_cast %459 : vector<1x1x64xf32> to vector<1x64xf32>
    %461 = vector.broadcast %460 : vector<1x64xf32> to vector<16x64xf32>
    %462 = arith.addf %458, %461 : vector<16x64xf32>
    %463 = arith.mulf %462, %462 : vector<16x64xf32>
    %464 = arith.mulf %462, %463 : vector<16x64xf32>
    %cst_223 = arith.constant 4.471500e-02 : f32
    %465 = vector.broadcast %cst_223 : f32 to vector<16x64xf32>
    %466 = arith.mulf %465, %464 : vector<16x64xf32>
    %467 = arith.addf %462, %466 : vector<16x64xf32>
    %cst_224 = arith.constant 0.797884583 : f32
    %468 = vector.broadcast %cst_224 : f32 to vector<16x64xf32>
    %469 = arith.mulf %468, %467 : vector<16x64xf32>
    %470 = math.tanh %469 : vector<16x64xf32>
    %cst_225 = arith.constant 1.000000e+00 : f32
    %471 = vector.broadcast %cst_225 : f32 to vector<16x64xf32>
    %472 = arith.addf %471, %470 : vector<16x64xf32>
    %cst_226 = arith.constant 5.000000e-01 : f32
    %473 = vector.broadcast %cst_226 : f32 to vector<16x64xf32>
    %474 = arith.mulf %473, %472 : vector<16x64xf32>
    %475 = arith.mulf %462, %474 : vector<16x64xf32>
    %c1_227 = arith.constant 1 : index
    %c0_228 = arith.constant 0 : index
    %c0_229 = arith.constant 0 : index
    %476 = vector.load %arg12[%c1_227, %c0_228, %c0_229] : memref<2x64x32xbf16, #tpu.memory_space<vmem>>, vector<1x64x32xbf16>
    %477 = vector.shape_cast %476 : vector<1x64x32xbf16> to vector<64x32xbf16>
    %478 = arith.truncf %475 : vector<16x64xf32> to vector<16x64xbf16>
    %cst_230 = arith.constant dense<0.000000e+00> : vector<16x32xf32>
    %479 = tpu.matmul %478, %477, %cst_230 {dimension_numbers = #tpu.dot_dimension_numbers<[1], [0], [0], [1], [0, 0, 1, 1], [], []>} : vector<16x64xbf16>, vector<64x32xbf16>, vector<16x32xf32> -> vector<16x32xf32>
    %c1_231 = arith.constant 1 : index
    %c0_232 = arith.constant 0 : index
    %c0_233 = arith.constant 0 : index
    %480 = vector.load %arg13[%c1_231, %c0_232, %c0_233] : memref<2x1x32xf32, #tpu.memory_space<vmem>>, vector<1x1x32xf32>
    %481 = vector.shape_cast %480 : vector<1x1x32xf32> to vector<1x32xf32>
    %482 = vector.broadcast %481 : vector<1x32xf32> to vector<16x32xf32>
    %483 = arith.addf %479, %482 : vector<16x32xf32>
    %484 = arith.addf %454, %483 : vector<16x32xf32>
    %c1_234 = arith.constant 1 : index
    %c0_235 = arith.constant 0 : index
    %c0_236 = arith.constant 0 : index
    %485 = vector.load %arg14[%c1_234, %c0_235, %c0_236] : memref<2x1x32xf32, #tpu.memory_space<vmem>>, vector<1x1x32xf32>
    %486 = vector.shape_cast %485 : vector<1x1x32xf32> to vector<1x32xf32>
    %c1_237 = arith.constant 1 : index
    %c0_238 = arith.constant 0 : index
    %c0_239 = arith.constant 0 : index
    %487 = vector.load %arg15[%c1_237, %c0_238, %c0_239] : memref<2x1x32xf32, #tpu.memory_space<vmem>>, vector<1x1x32xf32>
    %488 = vector.shape_cast %487 : vector<1x1x32xf32> to vector<1x32xf32>
    %cst_240 = arith.constant dense<0.000000e+00> : vector<16xf32>
    %489 = vector.multi_reduction <add>, %484, %cst_240 [1] : vector<16x32xf32> to vector<16xf32>
    %490 = vector.shape_cast %489 : vector<16xf32> to vector<16x1xf32>
    %cst_241 = arith.constant 3.200000e+01 : f32
    %491 = vector.broadcast %cst_241 : f32 to vector<16x1xf32>
    %492 = arith.divf %490, %491 : vector<16x1xf32>
    %493 = vector.broadcast %492 : vector<16x1xf32> to vector<16x32xf32>
    %494 = arith.subf %484, %493 : vector<16x32xf32>
    %495 = arith.mulf %494, %494 : vector<16x32xf32>
    %cst_242 = arith.constant dense<0.000000e+00> : vector<16xf32>
    %496 = vector.multi_reduction <add>, %495, %cst_242 [1] : vector<16x32xf32> to vector<16xf32>
    %497 = vector.shape_cast %496 : vector<16xf32> to vector<16x1xf32>
    %cst_243 = arith.constant 3.200000e+01 : f32
    %498 = vector.broadcast %cst_243 : f32 to vector<16x1xf32>
    %499 = arith.divf %497, %498 : vector<16x1xf32>
    %500 = vector.broadcast %492 : vector<16x1xf32> to vector<16x32xf32>
    %501 = arith.subf %484, %500 : vector<16x32xf32>
    %cst_244 = arith.constant 9.99999996E-13 : f32
    %502 = vector.broadcast %cst_244 : f32 to vector<16x1xf32>
    %503 = arith.addf %499, %502 : vector<16x1xf32>
    %504 = math.rsqrt %503 : vector<16x1xf32>
    %505 = vector.broadcast %504 : vector<16x1xf32> to vector<16x32xf32>
    %506 = arith.mulf %501, %505 : vector<16x32xf32>
    %507 = vector.broadcast %486 : vector<1x32xf32> to vector<16x32xf32>
    %508 = arith.mulf %506, %507 : vector<16x32xf32>
    %509 = vector.broadcast %488 : vector<1x32xf32> to vector<16x32xf32>
    %510 = arith.addf %508, %509 : vector<16x32xf32>
    %511 = vector.shape_cast %510 : vector<16x32xf32> to vector<2x8x32xf32>
    %512 = vector.extract_strided_slice %511 {offsets = [0, 0, 0], sizes = [2, 1, 32], strides = [1, 1, 1]} : vector<2x8x32xf32> to vector<2x1x32xf32>
    %513 = vector.shape_cast %512 : vector<2x1x32xf32> to vector<2x32xf32>
    %c0_245 = arith.constant 0 : index
    %c0_246 = arith.constant 0 : index
    %514 = vector.load %arg16[%c0_245, %c0_246] : memref<32x32xbf16, #tpu.memory_space<vmem>>, vector<32x32xbf16>
    %515 = arith.truncf %513 : vector<2x32xf32> to vector<2x32xbf16>
    %cst_247 = arith.constant dense<0.000000e+00> : vector<2x32xf32>
    %516 = tpu.matmul %515, %514, %cst_247 {dimension_numbers = #tpu.dot_dimension_numbers<[1], [0], [0], [1], [0, 0, 1, 1], [], []>} : vector<2x32xbf16>, vector<32x32xbf16>, vector<2x32xf32> -> vector<2x32xf32>
    %c0_248 = arith.constant 0 : index
    %c0_249 = arith.constant 0 : index
    %517 = vector.load %arg17[%c0_248, %c0_249] : memref<1x32xf32, #tpu.memory_space<vmem>>, vector<1x32xf32>
    %518 = vector.broadcast %517 : vector<1x32xf32> to vector<2x32xf32>
    %519 = arith.addf %516, %518 : vector<2x32xf32>
    %520 = math.tanh %519 : vector<2x32xf32>
    %c0_250 = arith.constant 0 : index
    %c0_251 = arith.constant 0 : index
    %521 = vector.load %arg18[%c0_250, %c0_251] : memref<32x3xbf16, #tpu.memory_space<vmem>>, vector<32x3xbf16>
    %522 = arith.truncf %520 : vector<2x32xf32> to vector<2x32xbf16>
    %cst_252 = arith.constant dense<0.000000e+00> : vector<2x3xf32>
    %523 = tpu.matmul %522, %521, %cst_252 {dimension_numbers = #tpu.dot_dimension_numbers<[1], [0], [0], [1], [0, 0, 1, 1], [], []>} : vector<2x32xbf16>, vector<32x3xbf16>, vector<2x3xf32> -> vector<2x3xf32>
    %c0_253 = arith.constant 0 : index
    %c0_254 = arith.constant 0 : index
    %524 = vector.load %arg19[%c0_253, %c0_254] : memref<1x3xf32, #tpu.memory_space<vmem>>, vector<1x3xf32>
    %525 = vector.broadcast %524 : vector<1x3xf32> to vector<2x3xf32>
    %526 = arith.addf %523, %525 : vector<2x3xf32>
    %c0_255 = arith.constant 0 : index
    %c0_256 = arith.constant 0 : index
    %527 = vector.load %arg20[%c0_255, %c0_256] : memref<2x3xf32, #tpu.memory_space<vmem>>, vector<2x3xf32>
    tpu.vector_store %arg20[%c0_255, %c0_256], %526 {strides = array<i32>} : memref<2x3xf32, #tpu.memory_space<vmem>>, vector<2x3xf32>,
    return
  }
}

</mosaic_0001>

<llo_original>
// kernel: sentiment_classifier_forward.1
$region0: #{sentiment_classifier_forward.1}
  #allocation0 [shape = 'u32[]', space=smem, size = 0x4, offset = 0x4, fixed_abs, tag = 'smem constant byte address 0x4 - core index']
  #allocation1 [shape = 'u32[144,128]{1,0:T(1,128)}', space=vmem, size = 0x12000, scoped, tag = 'internal scratch']
  #allocation2 [shape = 'f32[16,32]{1,0:T(8,128)}', space=vmem, size = 0x2000, scoped, tag = 'scratch operand']
  #allocation3 [shape = 'f32[64,8]{1,0:T(8,128)}', space=vmem, size = 0x8000, scoped, tag = 'scratch operand']
  %s0 = inlined_call_operand.vmem [shape: f32[16,32], index: 0, kind: input, shape index: {}]
  %s1 = inlined_call_operand.vmem [shape: f32[2,1,8], index: 1, kind: input, shape index: {}]
  %s2 = inlined_call_operand.vmem [shape: f32[1,32], index: 2, kind: input, shape index: {}]
  %s3 = inlined_call_operand.vmem [shape: f32[1,32], index: 3, kind: input, shape index: {}]
  %s4 = inlined_call_operand.vmem [shape: bf16[2,32,96], index: 4, kind: input, shape index: {}]
  %s5 = inlined_call_operand.vmem [shape: f32[2,1,96], index: 5, kind: input, shape index: {}]
  %s6 = inlined_call_operand.vmem [shape: bf16[2,32,32], index: 6, kind: input, shape index: {}]
  %s7 = inlined_call_operand.vmem [shape: f32[2,1,32], index: 7, kind: input, shape index: {}]
  %s8 = inlined_call_operand.vmem [shape: f32[2,1,32], index: 8, kind: input, shape index: {}]
  %s9 = inlined_call_operand.vmem [shape: f32[2,1,32], index: 9, kind: input, shape index: {}]
  %s10 = inlined_call_operand.vmem [shape: bf16[2,32,64], index: 10, kind: input, shape index: {}]
  %s11 = inlined_call_operand.vmem [shape: f32[2,1,64], index: 11, kind: input, shape index: {}]
  %s12 = inlined_call_operand.vmem [shape: bf16[2,64,32], index: 12, kind: input, shape index: {}]
  %s13 = inlined_call_operand.vmem [shape: f32[2,1,32], index: 13, kind: input, shape index: {}]
  %s14 = inlined_call_operand.vmem [shape: f32[2,1,32], index: 14, kind: input, shape index: {}]
  %s15 = inlined_call_operand.vmem [shape: f32[2,1,32], index: 15, kind: input, shape index: {}]
  %s16 = inlined_call_operand.vmem [shape: bf16[32,32], index: 16, kind: input, shape index: {}]
  %s17 = inlined_call_operand.vmem [shape: f32[1,32], index: 17, kind: input, shape index: {}]
  %s18 = inlined_call_operand.vmem [shape: bf16[32,3], index: 18, kind: input, shape index: {}]
  %s19 = inlined_call_operand.vmem [shape: f32[1,3], index: 19, kind: input, shape index: {}]
  %s20 = inlined_call_operand.hbm [shape: f32[2,3], index: 20, kind: output, shape index: {}]
  %s21 = sld [smem:[#allocation0]]
  $region90: #{sentiment_classifier_forward.1} parent=0
    _
  %s23 = ssub.s32 1, %s21
  %s24 = scalar_select 0, %s23, %s21
  $region1: #{sentiment_classifier_forward.1} parent=0
    #allocation4 [shape = 'u8[1024]{0}', space=vmem, size = 0x400, scoped, tag = 'output window, operand 0, single buffered']
    #allocation5 [shape = 's32[1]{0}', space=sflag, size = 0x4, scoped, tag = 'scoped memory for sentiment_classifier_forward.1']
    %25 = vsyncpa [#allocation5], 0
    // Predicated region
    $region2: #{sentiment_classifier_forward.1} parent=1 // pred_check
      _
    $region3: #{sentiment_classifier_forward.1} parent=1 // pred_check_branch
      %27 = sbr.rel (0) target = $region5
    $region4: #{sentiment_classifier_forward.1} parent=1 // pred_region
      _
    $region5: #{sentiment_classifier_forward.1} parent=1 // pred_fallthru
      _
    // Predicated region
    $region6: #{sentiment_classifier_forward.1} parent=1 // pred_check
      _
    $region7: #{sentiment_classifier_forward.1} parent=1 // pred_check_branch
      %29 = sbr.rel (0) target = $region9
    $region8: #{sentiment_classifier_forward.1} parent=1 // pred_region
      _
    $region9: #{sentiment_classifier_forward.1} parent=1 // pred_fallthru
      _
    // Predicated region
    $region10: #{sentiment_classifier_forward.1} parent=1 // pred_check
      _
    $region11: #{sentiment_classifier_forward.1} parent=1 // pred_check_branch
      %31 = sbr.rel (0) target = $region13
    $region12: #{sentiment_classifier_forward.1} parent=1 // pred_region
      _
    $region13: #{sentiment_classifier_forward.1} parent=1 // pred_fallthru
      _
    // Predicated region
    $region14: #{sentiment_classifier_forward.1} parent=1 // pred_check
      _
    $region15: #{sentiment_classifier_forward.1} parent=1 // pred_check_branch
      %33 = sbr.rel (0) target = $region17
    $region16: #{sentiment_classifier_forward.1} parent=1 // pred_region
      _
    $region17: #{sentiment_classifier_forward.1} parent=1 // pred_fallthru
      _
    // Predicated region
    $region18: #{sentiment_classifier_forward.1} parent=1 // pred_check
      _
    $region19: #{sentiment_classifier_forward.1} parent=1 // pred_check_branch
      %35 = sbr.rel (0) target = $region21
    $region20: #{sentiment_classifier_forward.1} parent=1 // pred_region
      _
    $region21: #{sentiment_classifier_forward.1} parent=1 // pred_fallthru
      _
    // Predicated region
    $region22: #{sentiment_classifier_forward.1} parent=1 // pred_check
      _
    $region23: #{sentiment_classifier_forward.1} parent=1 // pred_check_branch
      %37 = sbr.rel (0) target = $region25
    $region24: #{sentiment_classifier_forward.1} parent=1 // pred_region
      _
    $region25: #{sentiment_classifier_forward.1} parent=1 // pred_fallthru
      _
    // Predicated region
    $region26: #{sentiment_classifier_forward.1} parent=1 // pred_check
      _
    $region27: #{sentiment_classifier_forward.1} parent=1 // pred_check_branch
      %39 = sbr.rel (0) target = $region29
    $region28: #{sentiment_classifier_forward.1} parent=1 // pred_region
      _
    $region29: #{sentiment_classifier_forward.1} parent=1 // pred_fallthru
      _
    // Predicated region
    $region30: #{sentiment_classifier_forward.1} parent=1 // pred_check
      _
    $region31: #{sentiment_classifier_forward.1} parent=1 // pred_check_branch
      %41 = sbr.rel (0) target = $region33
    $region32: #{sentiment_classifier_forward.1} parent=1 // pred_region
      _
    $region33: #{sentiment_classifier_forward.1} parent=1 // pred_fallthru
      _
    // Predicated region
    $region34: #{sentiment_classifier_forward.1} parent=1 // pred_check
      _
    $region35: #{sentiment_classifier_forward.1} parent=1 // pred_check_branch
      %43 = sbr.rel (0) target = $region37
    $region36: #{sentiment_classifier_forward.1} parent=1 // pred_region
      _
    $region37: #{sentiment_classifier_forward.1} parent=1 // pred_fallthru
      _
    // Predicated region
    $region38: #{sentiment_classifier_forward.1} parent=1 // pred_check
      _
    $region39: #{sentiment_classifier_forward.1} parent=1 // pred_check_branch
      %45 = sbr.rel (0) target = $region41
    $region40: #{sentiment_classifier_forward.1} parent=1 // pred_region
      _
    $region41: #{sentiment_classifier_forward.1} parent=1 // pred_fallthru
      _
    // Predicated region
    $region42: #{sentiment_classifier_forward.1} parent=1 // pred_check
      _
    $region43: #{sentiment_classifier_forward.1} parent=1 // pred_check_branch
      %47 = sbr.rel (0) target = $region45
    $region44: #{sentiment_classifier_forward.1} parent=1 // pred_region
      _
    $region45: #{sentiment_classifier_forward.1} parent=1 // pred_fallthru
      _
    // Predicated region
    $region46: #{sentiment_classifier_forward.1} parent=1 // pred_check
      _
    $region47: #{sentiment_classifier_forward.1} parent=1 // pred_check_branch
      %49 = sbr.rel (0) target = $region49
    $region48: #{sentiment_classifier_forward.1} parent=1 // pred_region
      _
    $region49: #{sentiment_classifier_forward.1} parent=1 // pred_fallthru
      _
    // Predicated region
    $region50: #{sentiment_classifier_forward.1} parent=1 // pred_check
      _
    $region51: #{sentiment_classifier_forward.1} parent=1 // pred_check_branch
      %51 = sbr.rel (0) target = $region53
    $region52: #{sentiment_classifier_forward.1} parent=1 // pred_region
      _
    $region53: #{sentiment_classifier_forward.1} parent=1 // pred_fallthru
      _
    // Predicated region
    $region54: #{sentiment_classifier_forward.1} parent=1 // pred_check
      _
    $region55: #{sentiment_classifier_forward.1} parent=1 // pred_check_branch
      %53 = sbr.rel (0) target = $region57
    $region56: #{sentiment_classifier_forward.1} parent=1 // pred_region
      _
    $region57: #{sentiment_classifier_forward.1} parent=1 // pred_fallthru
      _
    // Predicated region
    $region58: #{sentiment_classifier_forward.1} parent=1 // pred_check
      _
    $region59: #{sentiment_classifier_forward.1} parent=1 // pred_check_branch
      %55 = sbr.rel (0) target = $region61
    $region60: #{sentiment_classifier_forward.1} parent=1 // pred_region
      _
    $region61: #{sentiment_classifier_forward.1} parent=1 // pred_fallthru
      _
    // Predicated region
    $region62: #{sentiment_classifier_forward.1} parent=1 // pred_check
      _
    $region63: #{sentiment_classifier_forward.1} parent=1 // pred_check_branch
      %57 = sbr.rel (0) target = $region65
    $region64: #{sentiment_classifier_forward.1} parent=1 // pred_region
      _
    $region65: #{sentiment_classifier_forward.1} parent=1 // pred_fallthru
      _
    // Predicated region
    $region66: #{sentiment_classifier_forward.1} parent=1 // pred_check
      _
    $region67: #{sentiment_classifier_forward.1} parent=1 // pred_check_branch
      %59 = sbr.rel (0) target = $region69
    $region68: #{sentiment_classifier_forward.1} parent=1 // pred_region
      _
    $region69: #{sentiment_classifier_forward.1} parent=1 // pred_fallthru
      _
    // Predicated region
    $region70: #{sentiment_classifier_forward.1} parent=1 // pred_check
      _
    $region71: #{sentiment_classifier_forward.1} parent=1 // pred_check_branch
      %61 = sbr.rel (0) target = $region73
    $region72: #{sentiment_classifier_forward.1} parent=1 // pred_region
      _
    $region73: #{sentiment_classifier_forward.1} parent=1 // pred_fallthru
      _
    // Predicated region
    $region74: #{sentiment_classifier_forward.1} parent=1 // pred_check
      _
    $region75: #{sentiment_classifier_forward.1} parent=1 // pred_check_branch
      %63 = sbr.rel (0) target = $region77
    $region76: #{sentiment_classifier_forward.1} parent=1 // pred_region
      _
    $region77: #{sentiment_classifier_forward.1} parent=1 // pred_fallthru
      _
    // Predicated region
    $region78: #{sentiment_classifier_forward.1} parent=1 // pred_check
      _
    $region79: #{sentiment_classifier_forward.1} parent=1 // pred_check_branch
      %65 = sbr.rel (0) target = $region81
    $region80: #{sentiment_classifier_forward.1} parent=1 // pred_region
      _
    $region81: #{sentiment_classifier_forward.1} parent=1 // pred_fallthru
      _
    %v67 = vld [vmem:[%s0] sm:$0xff]
    %v68 = vld [vmem:[%s0 + $0x8] sm:$0xff]
    %v69 = vld [vmem:[%s2] sm:$0x1]
    %v70 = vld [vmem:[%s3] sm:$0x1]
    %vm71 = vcmask 261120
    %v72 = vsel %vm71, %v67, 0.0
    %73 = vadd.xlane.f32.xlu0 %v72
    %v74 = vpop.xlane.xlu0 %73
    %v75 = vsel %vm71, %v68, 0.0
    %76 = vadd.xlane.f32.xlu0 %v75
    %v77 = vpop.xlane.xlu0 %76
    %v78 = vrcp.pop 32.0
    %v79 = vmul.f32 %v74, %v78
    %v80 = vmul.f32 %v77, %v78
    %v81 = vsub.f32 %v67, %v79
    %v82 = vsub.f32 %v68, %v80
    %v83 = vmul.f32 %v81, %v81
    %v84 = vmul.f32 %v82, %v82
    %v85 = vsel %vm71, %v83, 0.0
    %86 = vadd.xlane.f32.xlu0 %v85
    %v87 = vpop.xlane.xlu0 %86
    %v88 = vsel %vm71, %v84, 0.0
    %89 = vadd.xlane.f32.xlu0 %v88
    %v90 = vpop.xlane.xlu0 %89
    %v91 = vmul.f32 %v87, %v78
    %v92 = vmul.f32 %v90, %v78
    %v93 = vadd.f32 %v91, 1e-12
    %v94 = vadd.f32 %v92, 1e-12
    %v95 = vrsqrt.pop %v93
    %v96 = vrsqrt.pop %v94
    %v97 = vmul.f32 %v81, %v95
    %v98 = vmul.f32 %v82, %v96
    %v100 = vlaneseq
    %v101 = vshrl.u32 %v100, 7
    %v102 = vsub.s32 0, %v101
    %v103 = vrot.slane %v69, %v102
    %v105 = vmul.f32 %v97, %v103
    %v106 = vmul.f32 %v98, %v103
    %v108 = vlaneseq
    %v109 = vshrl.u32 %v108, 7
    %v110 = vsub.s32 0, %v109
    %v111 = vrot.slane %v70, %v110
    %v113 = vadd.f32 %v105, %v111
    %v114 = vadd.f32 %v106, %v111
    %v115 = vld [vmem:[%s4] sm:$0xf]
    %v116 = vld [vmem:[%s4 + $0x4] sm:$0xf]
    %v117 = vld [vmem:[%s4 + $0x8] sm:$0xf]
    %v118 = vld [vmem:[%s4 + $0xc] sm:$0xf]
    %v119 = vpack.c.bf16 %v114, %v113
    %v120 = vld [vmem:[%s5] sm:$0x1]
    %v122 = vlaneseq
    %v123 = vshrl.u32 %v122, 7
    %v124 = vsub.s32 0, %v123
    %v125 = vrot.slane %v120, %v124
    %v131 = vunpack.c.l.b16 %v115
    %v132 = vunpack.c.l.b16 %v116
    %v133 = vunpack.c.l.b16 %v117
    %v134 = vunpack.c.l.b16 %v118
    %v135 = vpack.c.b16 %v132, %v131
    %v136 = vpack.c.b16 %v134, %v133
    %v140 = vsel %vm71, %v119, 0
    %142 = vmatprep.subr.bf16.mxu0 0
    %143 = vmatpush1.bf16.msra.mxu0 %v135
    %144 = vmatprep.subr.bf16.mxu0 0
    %145 = vmatpush1.bf16.msra.mxu0 %v136
    %146 = vmatprep.subr.bf16.mxu0 0
    %147 = vmatpush1.bf16.msra.mxu0 0
    %148 = vmatprep.subr.bf16.mxu0 0
    %149 = vmatpush1.bf16.msra.mxu0 0
    %150 = vmatprep.subr.bf16.mxu0 0
    %151 = vmatpush1.bf16.msra.mxu0 0
    %152 = vmatprep.subr.bf16.mxu0 0
    %153 = vmatpush1.bf16.msra.mxu0 0
    %154 = vmatprep.subr.bf16.mxu0 0
    %155 = vmatpush1.bf16.msra.mxu0 0
    %156 = vmatprep.subr.bf16.mxu0 0
    %157 = vmatpush1.bf16.msra.mxu0 0
    %158 = vmatprep.subr.bf16.mxu0 0
    %159 = vmatpush1.bf16.msra.mxu0 0
    %160 = vmatprep.subr.bf16.mxu0 0
    %161 = vmatpush1.bf16.msra.mxu0 0
    %162 = vmatprep.subr.bf16.mxu0 0
    %163 = vmatpush1.bf16.msra.mxu0 0
    %164 = vmatprep.subr.bf16.mxu0 0
    %165 = vmatpush1.bf16.msra.mxu0 0
    %166 = vmatprep.subr.bf16.mxu0 0
    %167 = vmatpush1.bf16.msra.mxu0 0
    %168 = vmatprep.subr.bf16.mxu0 0
    %169 = vmatpush1.bf16.msra.mxu0 0
    %170 = vmatprep.subr.bf16.mxu0 0
    %171 = vmatpush1.bf16.msra.mxu0 0
    %172 = vmatprep.subr.bf16.mxu0 0
    %173 = vmatpush1.bf16.msra.mxu0 0
    %174 = vmatprep.mubr.bf16.mxu0 0
    %175 = vmatmul.mubr.bf16.gmra.mrb[0].mxu0 %v140
    %v176 = vpop.f32.mrb[0].mxu0
    %v177 = vadd.f32 %v125, %v176
    %v178 = vpop.f32.mrb[0].mxu0
    %v179 = vpop.f32.mrb[0].mxu0
    %v180 = vadd.f32 %v125, %v179
    %v181 = vpop.f32.mrb[0].mxu0
    %182 = vdwg.mxu0
    %v183 = vld [vmem:[%s1] sm:$0x1]
    %v184 = vpack.c.bf16 %v177, %v177
    %186 = vrot.lane.b32.xlu0 %v184, 96
    %v187 = vpop.permute.xlu0 %186
    %vm188 = vcmask 64512
    %v190 = vsel %vm188, %v184, 0
    %v193 = vsel %vm188, %v187, 0
    %195 = vmatprep.subr.bf16.mxu0 0
    %196 = vmatpush1.bf16.xpose.msra.mxu0 %v193
    %197 = vmatprep.subr.bf16.mxu0 0
    %198 = vmatpush1.bf16.xpose.msra.mxu0 0
    %199 = vmatprep.subr.bf16.mxu0 0
    %200 = vmatpush1.bf16.xpose.msra.mxu0 0
    %201 = vmatprep.subr.bf16.mxu0 0
    %202 = vmatpush1.bf16.xpose.msra.mxu0 0
    %203 = vmatprep.subr.bf16.mxu0 0
    %204 = vmatpush1.bf16.xpose.msra.mxu0 0
    %205 = vmatprep.subr.bf16.mxu0 0
    %206 = vmatpush1.bf16.xpose.msra.mxu0 0
    %207 = vmatprep.subr.bf16.mxu0 0
    %208 = vmatpush1.bf16.xpose.msra.mxu0 0
    %209 = vmatprep.subr.bf16.mxu0 0
    %210 = vmatpush1.bf16.xpose.msra.mxu0 0
    %211 = vmatprep.subr.bf16.mxu0 0
    %212 = vmatpush1.bf16.xpose.msra.mxu0 0
    %213 = vmatprep.subr.bf16.mxu0 0
    %214 = vmatpush1.bf16.xpose.msra.mxu0 0
    %215 = vmatprep.subr.bf16.mxu0 0
    %216 = vmatpush1.bf16.xpose.msra.mxu0 0
    %217 = vmatprep.subr.bf16.mxu0 0
    %218 = vmatpush1.bf16.xpose.msra.mxu0 0
    %219 = vmatprep.subr.bf16.mxu0 0
    %220 = vmatpush1.bf16.xpose.msra.mxu0 0
    %221 = vmatprep.subr.bf16.mxu0 0
    %222 = vmatpush1.bf16.xpose.msra.mxu0 0
    %223 = vmatprep.subr.bf16.mxu0 0
    %224 = vmatpush1.bf16.xpose.msra.mxu0 0
    %225 = vmatprep.subr.bf16.mxu0 0
    %226 = vmatpush1.bf16.xpose.msra.mxu0 0
    %227 = vmatprep.mubr.bf16.mxu0 0
    %228 = vmatmul.mubr.bf16.gmra.mrb[0].mxu0 %v190
    %v229 = vpop.f32.mrb[0].mxu0
    %v230 = vadd.f32 0.0, %v229
    %v231 = vpop.f32.mrb[0].mxu0
    %v232 = vpop.f32.mrb[0].mxu0
    %v233 = vpop.f32.mrb[0].mxu0
    %234 = vdwg.mxu0
    %v235 = vmul.f32 %v230, 0.35355338
    %v237 = vlaneseq
    %v238 = vshrl.u32 %v237, 7
    %v239 = vsub.s32 0, %v238
    %v240 = vrot.slane %v183, %v239
    %v242 = vadd.f32 %v235, %v240
    %243 = vst.msk [vmem:[#allocation3] sm:$0xff] %vm188, %v242
    %244 = vrot.lane.b32.xlu0 %v184, 120
    %v245 = vpop.permute.xlu0 %244
    %246 = vrot.lane.b32.xlu0 %v184, 88
    %v247 = vpop.permute.xlu0 %246
    %v249 = vsel %vm188, %v245, 0
    %v252 = vsel %vm188, %v247, 0
    %254 = vmatprep.subr.bf16.mxu0 0
    %255 = vmatpush1.bf16.xpose.msra.mxu0 %v252
    %256 = vmatprep.subr.bf16.mxu0 0
    %257 = vmatpush1.bf16.xpose.msra.mxu0 0
    %258 = vmatprep.subr.bf16.mxu0 0
    %259 = vmatpush1.bf16.xpose.msra.mxu0 0
    %260 = vmatprep.subr.bf16.mxu0 0
    %261 = vmatpush1.bf16.xpose.msra.mxu0 0
    %262 = vmatprep.subr.bf16.mxu0 0
    %263 = vmatpush1.bf16.xpose.msra.mxu0 0
    %264 = vmatprep.subr.bf16.mxu0 0
    %265 = vmatpush1.bf16.xpose.msra.mxu0 0
    %266 = vmatprep.subr.bf16.mxu0 0
    %267 = vmatpush1.bf16.xpose.msra.mxu0 0
    %268 = vmatprep.subr.bf16.mxu0 0
    %269 = vmatpush1.bf16.xpose.msra.mxu0 0
    %270 = vmatprep.subr.bf16.mxu0 0
    %271 = vmatpush1.bf16.xpose.msra.mxu0 0
    %272 = vmatprep.subr.bf16.mxu0 0
    %273 = vmatpush1.bf16.xpose.msra.mxu0 0
    %274 = vmatprep.subr.bf16.mxu0 0
    %275 = vmatpush1.bf16.xpose.msra.mxu0 0
    %276 = vmatprep.subr.bf16.mxu0 0
    %277 = vmatpush1.bf16.xpose.msra.mxu0 0
    %278 = vmatprep.subr.bf16.mxu0 0
    %279 = vmatpush1.bf16.xpose.msra.mxu0 0
    %280 = vmatprep.subr.bf16.mxu0 0
    %281 = vmatpush1.bf16.xpose.msra.mxu0 0
    %282 = vmatprep.subr.bf16.mxu0 0
    %283 = vmatpush1.bf16.xpose.msra.mxu0 0
    %284 = vmatprep.subr.bf16.mxu0 0
    %285 = vmatpush1.bf16.xpose.msra.mxu0 0
    %286 = vmatprep.mubr.bf16.mxu0 0
    %287 = vmatmul.mubr.bf16.gmra.mrb[0].mxu0 %v249
    %v288 = vpop.f32.mrb[0].mxu0
    %v289 = vadd.f32 0.0, %v288
    %v290 = vpop.f32.mrb[0].mxu0
    %v291 = vpop.f32.mrb[0].mxu0
    %v292 = vpop.f32.mrb[0].mxu0
    %293 = vdwg.mxu0
    %v294 = vmul.f32 %v289, 0.35355338
    %v295 = vadd.f32 %v294, %v240
    %296 = vst.msk [vmem:[#allocation3 + $0x8] sm:$0xff] %vm188, %v295
    %297 = vrot.lane.b32.xlu0 %v184, 112
    %v298 = vpop.permute.xlu0 %297
    %299 = vrot.lane.b32.xlu0 %v184, 80
    %v300 = vpop.permute.xlu0 %299
    %v302 = vsel %vm188, %v298, 0
    %v305 = vsel %vm188, %v300, 0
    %307 = vmatprep.subr.bf16.mxu0 0
    %308 = vmatpush1.bf16.xpose.msra.mxu0 %v305
    %309 = vmatprep.subr.bf16.mxu0 0
    %310 = vmatpush1.bf16.xpose.msra.mxu0 0
    %311 = vmatprep.subr.bf16.mxu0 0
    %312 = vmatpush1.bf16.xpose.msra.mxu0 0
    %313 = vmatprep.subr.bf16.mxu0 0
    %314 = vmatpush1.bf16.xpose.msra.mxu0 0
    %315 = vmatprep.subr.bf16.mxu0 0
    %316 = vmatpush1.bf16.xpose.msra.mxu0 0
    %317 = vmatprep.subr.bf16.mxu0 0
    %318 = vmatpush1.bf16.xpose.msra.mxu0 0
    %319 = vmatprep.subr.bf16.mxu0 0
    %320 = vmatpush1.bf16.xpose.msra.mxu0 0
    %321 = vmatprep.subr.bf16.mxu0 0
    %322 = vmatpush1.bf16.xpose.msra.mxu0 0
    %323 = vmatprep.subr.bf16.mxu0 0
    %324 = vmatpush1.bf16.xpose.msra.mxu0 0
    %325 = vmatprep.subr.bf16.mxu0 0
    %326 = vmatpush1.bf16.xpose.msra.mxu0 0
    %327 = vmatprep.subr.bf16.mxu0 0
    %328 = vmatpush1.bf16.xpose.msra.mxu0 0
    %329 = vmatprep.subr.bf16.mxu0 0
    %330 = vmatpush1.bf16.xpose.msra.mxu0 0
    %331 = vmatprep.subr.bf16.mxu0 0
    %332 = vmatpush1.bf16.xpose.msra.mxu0 0
    %333 = vmatprep.subr.bf16.mxu0 0
    %334 = vmatpush1.bf16.xpose.msra.mxu0 0
    %335 = vmatprep.subr.bf16.mxu0 0
    %336 = vmatpush1.bf16.xpose.msra.mxu0 0
    %337 = vmatprep.subr.bf16.mxu0 0
    %338 = vmatpush1.bf16.xpose.msra.mxu0 0
    %339 = vmatprep.mubr.bf16.mxu0 0
    %340 = vmatmul.mubr.bf16.gmra.mrb[0].mxu0 %v302
    %v341 = vpop.f32.mrb[0].mxu0
    %v342 = vadd.f32 0.0, %v341
    %v343 = vpop.f32.mrb[0].mxu0
    %v344 = vpop.f32.mrb[0].mxu0
    %v345 = vpop.f32.mrb[0].mxu0
    %346 = vdwg.mxu0
    %v347 = vmul.f32 %v342, 0.35355338
    %v348 = vadd.f32 %v347, %v240
    %349 = vst.msk [vmem:[#allocation3 + $0x10] sm:$0xff] %vm188, %v348
    %350 = vrot.lane.b32.xlu0 %v184, 104
    %v351 = vpop.permute.xlu0 %350
    %352 = vrot.lane.b32.xlu0 %v184, 72
    %v353 = vpop.permute.xlu0 %352
    %v355 = vsel %vm188, %v351, 0
    %v358 = vsel %vm188, %v353, 0
    %360 = vmatprep.subr.bf16.mxu0 0
    %361 = vmatpush1.bf16.xpose.msra.mxu0 %v358
    %362 = vmatprep.subr.bf16.mxu0 0
    %363 = vmatpush1.bf16.xpose.msra.mxu0 0
    %364 = vmatprep.subr.bf16.mxu0 0
    %365 = vmatpush1.bf16.xpose.msra.mxu0 0
    %366 = vmatprep.subr.bf16.mxu0 0
    %367 = vmatpush1.bf16.xpose.msra.mxu0 0
    %368 = vmatprep.subr.bf16.mxu0 0
    %369 = vmatpush1.bf16.xpose.msra.mxu0 0
    %370 = vmatprep.subr.bf16.mxu0 0
    %371 = vmatpush1.bf16.xpose.msra.mxu0 0
    %372 = vmatprep.subr.bf16.mxu0 0
    %373 = vmatpush1.bf16.xpose.msra.mxu0 0
    %374 = vmatprep.subr.bf16.mxu0 0
    %375 = vmatpush1.bf16.xpose.msra.mxu0 0
    %376 = vmatprep.subr.bf16.mxu0 0
    %377 = vmatpush1.bf16.xpose.msra.mxu0 0
    %378 = vmatprep.subr.bf16.mxu0 0
    %379 = vmatpush1.bf16.xpose.msra.mxu0 0
    %380 = vmatprep.subr.bf16.mxu0 0
    %381 = vmatpush1.bf16.xpose.msra.mxu0 0
    %382 = vmatprep.subr.bf16.mxu0 0
    %383 = vmatpush1.bf16.xpose.msra.mxu0 0
    %384 = vmatprep.subr.bf16.mxu0 0
    %385 = vmatpush1.bf16.xpose.msra.mxu0 0
    %386 = vmatprep.subr.bf16.mxu0 0
    %387 = vmatpush1.bf16.xpose.msra.mxu0 0
    %388 = vmatprep.subr.bf16.mxu0 0
    %389 = vmatpush1.bf16.xpose.msra.mxu0 0
    %390 = vmatprep.subr.bf16.mxu0 0
    %391 = vmatpush1.bf16.xpose.msra.mxu0 0
    %392 = vmatprep.mubr.bf16.mxu0 0
    %393 = vmatmul.mubr.bf16.gmra.mrb[0].mxu0 %v355
    %v394 = vpop.f32.mrb[0].mxu0
    %v395 = vadd.f32 0.0, %v394
    %v396 = vpop.f32.mrb[0].mxu0
    %v397 = vpop.f32.mrb[0].mxu0
    %v398 = vpop.f32.mrb[0].mxu0
    %399 = vdwg.mxu0
    %v400 = vmul.f32 %v395, 0.35355338
    %v401 = vadd.f32 %v400, %v240
    %402 = vst.msk [vmem:[#allocation3 + $0x18] sm:$0xff] %vm188, %v401
    %s403 = scalar_lea.vmem %s1, 1
    %v404 = vld [vmem:[%s403] sm:$0x1]
    %v405 = vpack.c.bf16 %v180, %v180
    %407 = vrot.lane.b32.xlu0 %v405, 96
    %v408 = vpop.permute.xlu0 %407
    %v410 = vsel %vm188, %v405, 0
    %v413 = vsel %vm188, %v408, 0
    %415 = vmatprep.subr.bf16.mxu0 0
    %416 = vmatpush1.bf16.xpose.msra.mxu0 %v413
    %417 = vmatprep.subr.bf16.mxu0 0
    %418 = vmatpush1.bf16.xpose.msra.mxu0 0
    %419 = vmatprep.subr.bf16.mxu0 0
    %420 = vmatpush1.bf16.xpose.msra.mxu0 0
    %421 = vmatprep.subr.bf16.mxu0 0
    %422 = vmatpush1.bf16.xpose.msra.mxu0 0
    %423 = vmatprep.subr.bf16.mxu0 0
    %424 = vmatpush1.bf16.xpose.msra.mxu0 0
    %425 = vmatprep.subr.bf16.mxu0 0
    %426 = vmatpush1.bf16.xpose.msra.mxu0 0
    %427 = vmatprep.subr.bf16.mxu0 0
    %428 = vmatpush1.bf16.xpose.msra.mxu0 0
    %429 = vmatprep.subr.bf16.mxu0 0
    %430 = vmatpush1.bf16.xpose.msra.mxu0 0
    %431 = vmatprep.subr.bf16.mxu0 0
    %432 = vmatpush1.bf16.xpose.msra.mxu0 0
    %433 = vmatprep.subr.bf16.mxu0 0
    %434 = vmatpush1.bf16.xpose.msra.mxu0 0
    %435 = vmatprep.subr.bf16.mxu0 0
    %436 = vmatpush1.bf16.xpose.msra.mxu0 0
    %437 = vmatprep.subr.bf16.mxu0 0
    %438 = vmatpush1.bf16.xpose.msra.mxu0 0
    %439 = vmatprep.subr.bf16.mxu0 0
    %440 = vmatpush1.bf16.xpose.msra.mxu0 0
    %441 = vmatprep.subr.bf16.mxu0 0
    %442 = vmatpush1.bf16.xpose.msra.mxu0 0
    %443 = vmatprep.subr.bf16.mxu0 0
    %444 = vmatpush1.bf16.xpose.msra.mxu0 0
    %445 = vmatprep.subr.bf16.mxu0 0
    %446 = vmatpush1.bf16.xpose.msra.mxu0 0
    %447 = vmatprep.mubr.bf16.mxu0 0
    %448 = vmatmul.mubr.bf16.gmra.mrb[0].mxu0 %v410
    %v449 = vpop.f32.mrb[0].mxu0
    %v450 = vadd.f32 0.0, %v449
    %v451 = vpop.f32.mrb[0].mxu0
    %v452 = vpop.f32.mrb[0].mxu0
    %v453 = vpop.f32.mrb[0].mxu0
    %454 = vdwg.mxu0
    %v455 = vmul.f32 %v450, 0.35355338
    %v457 = vlaneseq
    %v458 = vshrl.u32 %v457, 7
    %v459 = vsub.s32 0, %v458
    %v460 = vrot.slane %v404, %v459
    %v462 = vadd.f32 %v455, %v460
    %463 = vst.msk [vmem:[#allocation3 + $0x20] sm:$0xff] %vm188, %v462
    %464 = vrot.lane.b32.xlu0 %v405, 120
    %v465 = vpop.permute.xlu0 %464
    %466 = vrot.lane.b32.xlu0 %v405, 88
    %v467 = vpop.permute.xlu0 %466
    %v469 = vsel %vm188, %v465, 0
    %v472 = vsel %vm188, %v467, 0
    %474 = vmatprep.subr.bf16.mxu0 0
    %475 = vmatpush1.bf16.xpose.msra.mxu0 %v472
    %476 = vmatprep.subr.bf16.mxu0 0
    %477 = vmatpush1.bf16.xpose.msra.mxu0 0
    %478 = vmatprep.subr.bf16.mxu0 0
    %479 = vmatpush1.bf16.xpose.msra.mxu0 0
    %480 = vmatprep.subr.bf16.mxu0 0
    %481 = vmatpush1.bf16.xpose.msra.mxu0 0
    %482 = vmatprep.subr.bf16.mxu0 0
    %483 = vmatpush1.bf16.xpose.msra.mxu0 0
    %484 = vmatprep.subr.bf16.mxu0 0
    %485 = vmatpush1.bf16.xpose.msra.mxu0 0
    %486 = vmatprep.subr.bf16.mxu0 0
    %487 = vmatpush1.bf16.xpose.msra.mxu0 0
    %488 = vmatprep.subr.bf16.mxu0 0
    %489 = vmatpush1.bf16.xpose.msra.mxu0 0
    %490 = vmatprep.subr.bf16.mxu0 0
    %491 = vmatpush1.bf16.xpose.msra.mxu0 0
    %492 = vmatprep.subr.bf16.mxu0 0
    %493 = vmatpush1.bf16.xpose.msra.mxu0 0
    %494 = vmatprep.subr.bf16.mxu0 0
    %495 = vmatpush1.bf16.xpose.msra.mxu0 0
    %496 = vmatprep.subr.bf16.mxu0 0
    %497 = vmatpush1.bf16.xpose.msra.mxu0 0
    %498 = vmatprep.subr.bf16.mxu0 0
    %499 = vmatpush1.bf16.xpose.msra.mxu0 0
    %500 = vmatprep.subr.bf16.mxu0 0
    %501 = vmatpush1.bf16.xpose.msra.mxu0 0
    %502 = vmatprep.subr.bf16.mxu0 0
    %503 = vmatpush1.bf16.xpose.msra.mxu0 0
    %504 = vmatprep.subr.bf16.mxu0 0
    %505 = vmatpush1.bf16.xpose.msra.mxu0 0
    %506 = vmatprep.mubr.bf16.mxu0 0
    %507 = vmatmul.mubr.bf16.gmra.mrb[0].mxu0 %v469
    %v508 = vpop.f32.mrb[0].mxu0
    %v509 = vadd.f32 0.0, %v508
    %v510 = vpop.f32.mrb[0].mxu0
    %v511 = vpop.f32.mrb[0].mxu0
    %v512 = vpop.f32.mrb[0].mxu0
    %513 = vdwg.mxu0
    %v514 = vmul.f32 %v509, 0.35355338
    %v515 = vadd.f32 %v514, %v460
    %516 = vst.msk [vmem:[#allocation3 + $0x28] sm:$0xff] %vm188, %v515
    %517 = vrot.lane.b32.xlu0 %v405, 112
    %v518 = vpop.permute.xlu0 %517
    %519 = vrot.lane.b32.xlu0 %v405, 80
    %v520 = vpop.permute.xlu0 %519
    %v522 = vsel %vm188, %v518, 0
    %v525 = vsel %vm188, %v520, 0
    %527 = vmatprep.subr.bf16.mxu0 0
    %528 = vmatpush1.bf16.xpose.msra.mxu0 %v525
    %529 = vmatprep.subr.bf16.mxu0 0
    %530 = vmatpush1.bf16.xpose.msra.mxu0 0
    %531 = vmatprep.subr.bf16.mxu0 0
    %532 = vmatpush1.bf16.xpose.msra.mxu0 0
    %533 = vmatprep.subr.bf16.mxu0 0
    %534 = vmatpush1.bf16.xpose.msra.mxu0 0
    %535 = vmatprep.subr.bf16.mxu0 0
    %536 = vmatpush1.bf16.xpose.msra.mxu0 0
    %537 = vmatprep.subr.bf16.mxu0 0
    %538 = vmatpush1.bf16.xpose.msra.mxu0 0
    %539 = vmatprep.subr.bf16.mxu0 0
    %540 = vmatpush1.bf16.xpose.msra.mxu0 0
    %541 = vmatprep.subr.bf16.mxu0 0
    %542 = vmatpush1.bf16.xpose.msra.mxu0 0
    %543 = vmatprep.subr.bf16.mxu0 0
    %544 = vmatpush1.bf16.xpose.msra.mxu0 0
    %545 = vmatprep.subr.bf16.mxu0 0
    %546 = vmatpush1.bf16.xpose.msra.mxu0 0
    %547 = vmatprep.subr.bf16.mxu0 0
    %548 = vmatpush1.bf16.xpose.msra.mxu0 0
    %549 = vmatprep.subr.bf16.mxu0 0
    %550 = vmatpush1.bf16.xpose.msra.mxu0 0
    %551 = vmatprep.subr.bf16.mxu0 0
    %552 = vmatpush1.bf16.xpose.msra.mxu0 0
    %553 = vmatprep.subr.bf16.mxu0 0
    %554 = vmatpush1.bf16.xpose.msra.mxu0 0
    %555 = vmatprep.subr.bf16.mxu0 0
    %556 = vmatpush1.bf16.xpose.msra.mxu0 0
    %557 = vmatprep.subr.bf16.mxu0 0
    %558 = vmatpush1.bf16.xpose.msra.mxu0 0
    %559 = vmatprep.mubr.bf16.mxu0 0
    %560 = vmatmul.mubr.bf16.gmra.mrb[0].mxu0 %v522
    %v561 = vpop.f32.mrb[0].mxu0
    %v562 = vadd.f32 0.0, %v561
    %v563 = vpop.f32.mrb[0].mxu0
    %v564 = vpop.f32.mrb[0].mxu0
    %v565 = vpop.f32.mrb[0].mxu0
    %566 = vdwg.mxu0
    %v567 = vmul.f32 %v562, 0.35355338
    %v568 = vadd.f32 %v567, %v460
    %569 = vst.msk [vmem:[#allocation3 + $0x30] sm:$0xff] %vm188, %v568
    %570 = vrot.lane.b32.xlu0 %v405, 104
    %v571 = vpop.permute.xlu0 %570
    %572 = vrot.lane.b32.xlu0 %v405, 72
    %v573 = vpop.permute.xlu0 %572
    %v575 = vsel %vm188, %v571, 0
    %v578 = vsel %vm188, %v573, 0
    %580 = vmatprep.subr.bf16.mxu0 0
    %581 = vmatpush1.bf16.xpose.msra.mxu0 %v578
    %582 = vmatprep.subr.bf16.mxu0 0
    %583 = vmatpush1.bf16.xpose.msra.mxu0 0
    %584 = vmatprep.subr.bf16.mxu0 0
    %585 = vmatpush1.bf16.xpose.msra.mxu0 0
    %586 = vmatprep.subr.bf16.mxu0 0
    %587 = vmatpush1.bf16.xpose.msra.mxu0 0
    %588 = vmatprep.subr.bf16.mxu0 0
    %589 = vmatpush1.bf16.xpose.msra.mxu0 0
    %590 = vmatprep.subr.bf16.mxu0 0
    %591 = vmatpush1.bf16.xpose.msra.mxu0 0
    %592 = vmatprep.subr.bf16.mxu0 0
    %593 = vmatpush1.bf16.xpose.msra.mxu0 0
    %594 = vmatprep.subr.bf16.mxu0 0
    %595 = vmatpush1.bf16.xpose.msra.mxu0 0
    %596 = vmatprep.subr.bf16.mxu0 0
    %597 = vmatpush1.bf16.xpose.msra.mxu0 0
    %598 = vmatprep.subr.bf16.mxu0 0
    %599 = vmatpush1.bf16.xpose.msra.mxu0 0
    %600 = vmatprep.subr.bf16.mxu0 0
    %601 = vmatpush1.bf16.xpose.msra.mxu0 0
    %602 = vmatprep.subr.bf16.mxu0 0
    %603 = vmatpush1.bf16.xpose.msra.mxu0 0
    %604 = vmatprep.subr.bf16.mxu0 0
    %605 = vmatpush1.bf16.xpose.msra.mxu0 0
    %606 = vmatprep.subr.bf16.mxu0 0
    %607 = vmatpush1.bf16.xpose.msra.mxu0 0
    %608 = vmatprep.subr.bf16.mxu0 0
    %609 = vmatpush1.bf16.xpose.msra.mxu0 0
    %610 = vmatprep.subr.bf16.mxu0 0
    %611 = vmatpush1.bf16.xpose.msra.mxu0 0
    %612 = vmatprep.mubr.bf16.mxu0 0
    %613 = vmatmul.mubr.bf16.gmra.mrb[0].mxu0 %v575
    %v614 = vpop.f32.mrb[0].mxu0
    %v615 = vadd.f32 0.0, %v614
    %v616 = vpop.f32.mrb[0].mxu0
    %v617 = vpop.f32.mrb[0].mxu0
    %v618 = vpop.f32.mrb[0].mxu0
    %619 = vdwg.mxu0
    %v620 = vmul.f32 %v615, 0.35355338
    %v621 = vadd.f32 %v620, %v460
    %622 = vst.msk [vmem:[#allocation3 + $0x38] sm:$0xff] %vm188, %v621
    %v623 = vld [vmem:[#allocation3] sm:$0xff]
    %v624 = vld [vmem:[#allocation3 + $0x8] sm:$0xff]
    %v625 = vld [vmem:[#allocation3 + $0x10] sm:$0xff]
    %v626 = vld [vmem:[#allocation3 + $0x18] sm:$0xff]
    %v627 = vld [vmem:[#allocation3 + $0x20] sm:$0xff]
    %v628 = vld [vmem:[#allocation3 + $0x28] sm:$0xff]
    %v629 = vld [vmem:[#allocation3 + $0x30] sm:$0xff]
    %v630 = vld [vmem:[#allocation3 + $0x38] sm:$0xff]
    %v631 = vsel %vm188, %v623, -inf
    %632 = vmax.xlane.f32.xlu0 %v631
    %v633 = vpop.xlane.xlu0 %632
    %v634 = vsel %vm188, %v624, -inf
    %635 = vmax.xlane.f32.xlu0 %v634
    %v636 = vpop.xlane.xlu0 %635
    %v637 = vsel %vm188, %v625, -inf
    %638 = vmax.xlane.f32.xlu0 %v637
    %v639 = vpop.xlane.xlu0 %638
    %v640 = vsel %vm188, %v626, -inf
    %641 = vmax.xlane.f32.xlu0 %v640
    %v642 = vpop.xlane.xlu0 %641
    %v643 = vsel %vm188, %v627, -inf
    %644 = vmax.xlane.f32.xlu0 %v643
    %v645 = vpop.xlane.xlu0 %644
    %v646 = vsel %vm188, %v628, -inf
    %647 = vmax.xlane.f32.xlu0 %v646
    %v648 = vpop.xlane.xlu0 %647
    %v649 = vsel %vm188, %v629, -inf
    %650 = vmax.xlane.f32.xlu0 %v649
    %v651 = vpop.xlane.xlu0 %650
    %v652 = vsel %vm188, %v630, -inf
    %653 = vmax.xlane.f32.xlu0 %v652
    %v654 = vpop.xlane.xlu0 %653
    %v655 = vsub.f32 %v623, %v633
    %v656 = vsub.f32 %v624, %v636
    %v657 = vsub.f32 %v625, %v639
    %v658 = vsub.f32 %v626, %v642
    %v659 = vsub.f32 %v627, %v645
    %v660 = vsub.f32 %v628, %v648
    %v661 = vsub.f32 %v629, %v651
    %v662 = vsub.f32 %v630, %v654
    %v663 = vmul.f32 %v655, 1.442695
    %v664 = vpow.pop %v663
    %v665 = vmul.f32 %v656, 1.442695
    %v666 = vpow.pop %v665
    %v667 = vmul.f32 %v657, 1.442695
    %v668 = vpow.pop %v667
    %v669 = vmul.f32 %v658, 1.442695
    %v670 = vpow.pop %v669
    %v671 = vmul.f32 %v659, 1.442695
    %v672 = vpow.pop %v671
    %v673 = vmul.f32 %v660, 1.442695
    %v674 = vpow.pop %v673
    %v675 = vmul.f32 %v661, 1.442695
    %v676 = vpow.pop %v675
    %v677 = vmul.f32 %v662, 1.442695
    %v678 = vpow.pop %v677
    %v679 = vsel %vm188, %v664, 0.0
    %680 = vadd.xlane.f32.xlu0 %v679
    %v681 = vpop.xlane.xlu0 %680
    %v682 = vsel %vm188, %v666, 0.0
    %683 = vadd.xlane.f32.xlu0 %v682
    %v684 = vpop.xlane.xlu0 %683
    %v685 = vsel %vm188, %v668, 0.0
    %686 = vadd.xlane.f32.xlu0 %v685
    %v687 = vpop.xlane.xlu0 %686
    %v688 = vsel %vm188, %v670, 0.0
    %689 = vadd.xlane.f32.xlu0 %v688
    %v690 = vpop.xlane.xlu0 %689
    %v691 = vsel %vm188, %v672, 0.0
    %692 = vadd.xlane.f32.xlu0 %v691
    %v693 = vpop.xlane.xlu0 %692
    %v694 = vsel %vm188, %v674, 0.0
    %695 = vadd.xlane.f32.xlu0 %v694
    %v696 = vpop.xlane.xlu0 %695
    %v697 = vsel %vm188, %v676, 0.0
    %698 = vadd.xlane.f32.xlu0 %v697
    %v699 = vpop.xlane.xlu0 %698
    %v700 = vsel %vm188, %v678, 0.0
    %701 = vadd.xlane.f32.xlu0 %v700
    %v702 = vpop.xlane.xlu0 %701
    %v703 = vrcp.pop %v681
    %v704 = vrcp.pop %v684
    %v705 = vrcp.pop %v687
    %v706 = vrcp.pop %v690
    %v707 = vrcp.pop %v693
    %v708 = vrcp.pop %v696
    %v709 = vrcp.pop %v699
    %v710 = vrcp.pop %v702
    %v711 = vmul.f32 %v664, %v703
    %v712 = vmul.f32 %v666, %v704
    %v713 = vmul.f32 %v668, %v705
    %v714 = vmul.f32 %v670, %v706
    %v715 = vmul.f32 %v672, %v707
    %v716 = vmul.f32 %v674, %v708
    %v717 = vmul.f32 %v676, %v709
    %v718 = vmul.f32 %v678, %v710
    %v719 = vpack.c.bf16 %v711, %v711
    %720 = vrot.lane.b32.xlu0 %v184, 64
    %v721 = vpop.permute.xlu0 %720
    %v723 = vsel %vm188, %v719, 0
    %vm725 = vcmask 1043456
    %v727 = vsel %vm725, %v721, 0
    %729 = vmatprep.subr.bf16.mxu0 0
    %730 = vmatpush1.bf16.msra.mxu0 %v727
    %731 = vmatprep.subr.bf16.mxu0 0
    %732 = vmatpush1.bf16.msra.mxu0 0
    %733 = vmatprep.subr.bf16.mxu0 0
    %734 = vmatpush1.bf16.msra.mxu0 0
    %735 = vmatprep.subr.bf16.mxu0 0
    %736 = vmatpush1.bf16.msra.mxu0 0
    %737 = vmatprep.subr.bf16.mxu0 0
    %738 = vmatpush1.bf16.msra.mxu0 0
    %739 = vmatprep.subr.bf16.mxu0 0
    %740 = vmatpush1.bf16.msra.mxu0 0
    %741 = vmatprep.subr.bf16.mxu0 0
    %742 = vmatpush1.bf16.msra.mxu0 0
    %743 = vmatprep.subr.bf16.mxu0 0
    %744 = vmatpush1.bf16.msra.mxu0 0
    %745 = vmatprep.subr.bf16.mxu0 0
    %746 = vmatpush1.bf16.msra.mxu0 0
    %747 = vmatprep.subr.bf16.mxu0 0
    %748 = vmatpush1.bf16.msra.mxu0 0
    %749 = vmatprep.subr.bf16.mxu0 0
    %750 = vmatpush1.bf16.msra.mxu0 0
    %751 = vmatprep.subr.bf16.mxu0 0
    %752 = vmatpush1.bf16.msra.mxu0 0
    %753 = vmatprep.subr.bf16.mxu0 0
    %754 = vmatpush1.bf16.msra.mxu0 0
    %755 = vmatprep.subr.bf16.mxu0 0
    %756 = vmatpush1.bf16.msra.mxu0 0
    %757 = vmatprep.subr.bf16.mxu0 0
    %758 = vmatpush1.bf16.msra.mxu0 0
    %759 = vmatprep.subr.bf16.mxu0 0
    %760 = vmatpush1.bf16.msra.mxu0 0
    %761 = vmatprep.mubr.bf16.mxu0 0
    %762 = vmatmul.mubr.bf16.gmra.mrb[0].mxu0 %v723
    %v763 = vpop.f32.mrb[0].mxu0
    %v764 = vadd.f32 0.0, %v763
    %v765 = vpop.f32.mrb[0].mxu0
    %v766 = vpop.f32.mrb[0].mxu0
    %v767 = vpop.f32.mrb[0].mxu0
    %768 = vdwg.mxu0
    %769 = vst.msk [vmem:[#allocation2] sm:$0xff] %vm188, %v764
    %v770 = vpack.c.bf16 %v712, %v712
    %771 = vrot.lane.b32.xlu0 %v184, 56
    %v772 = vpop.permute.xlu0 %771
    %v774 = vsel %vm188, %v770, 0
    %v777 = vsel %vm725, %v772, 0
    %779 = vmatprep.subr.bf16.mxu0 0
    %780 = vmatpush1.bf16.msra.mxu0 %v777
    %781 = vmatprep.subr.bf16.mxu0 0
    %782 = vmatpush1.bf16.msra.mxu0 0
    %783 = vmatprep.subr.bf16.mxu0 0
    %784 = vmatpush1.bf16.msra.mxu0 0
    %785 = vmatprep.subr.bf16.mxu0 0
    %786 = vmatpush1.bf16.msra.mxu0 0
    %787 = vmatprep.subr.bf16.mxu0 0
    %788 = vmatpush1.bf16.msra.mxu0 0
    %789 = vmatprep.subr.bf16.mxu0 0
    %790 = vmatpush1.bf16.msra.mxu0 0
    %791 = vmatprep.subr.bf16.mxu0 0
    %792 = vmatpush1.bf16.msra.mxu0 0
    %793 = vmatprep.subr.bf16.mxu0 0
    %794 = vmatpush1.bf16.msra.mxu0 0
    %795 = vmatprep.subr.bf16.mxu0 0
    %796 = vmatpush1.bf16.msra.mxu0 0
    %797 = vmatprep.subr.bf16.mxu0 0
    %798 = vmatpush1.bf16.msra.mxu0 0
    %799 = vmatprep.subr.bf16.mxu0 0
    %800 = vmatpush1.bf16.msra.mxu0 0
    %801 = vmatprep.subr.bf16.mxu0 0
    %802 = vmatpush1.bf16.msra.mxu0 0
    %803 = vmatprep.subr.bf16.mxu0 0
    %804 = vmatpush1.bf16.msra.mxu0 0
    %805 = vmatprep.subr.bf16.mxu0 0
    %806 = vmatpush1.bf16.msra.mxu0 0
    %807 = vmatprep.subr.bf16.mxu0 0
    %808 = vmatpush1.bf16.msra.mxu0 0
    %809 = vmatprep.subr.bf16.mxu0 0
    %810 = vmatpush1.bf16.msra.mxu0 0
    %811 = vmatprep.mubr.bf16.mxu0 0
    %812 = vmatmul.mubr.bf16.gmra.mrb[0].mxu0 %v774
    %v813 = vpop.f32.mrb[0].mxu0
    %v814 = vadd.f32 0.0, %v813
    %v815 = vpop.f32.mrb[0].mxu0
    %v816 = vpop.f32.mrb[0].mxu0
    %v817 = vpop.f32.mrb[0].mxu0
    %818 = vdwg.mxu0
    %820 = vrot.lane.b32.xlu0 %v814, 8
    %v821 = vpop.permute.xlu0 %820
    %vm823 = vcmask 130112
    %824 = vst.msk [vmem:[#allocation2] sm:$0xff] %vm823, %v821
    %v825 = vpack.c.bf16 %v713, %v713
    %826 = vrot.lane.b32.xlu0 %v184, 48
    %v827 = vpop.permute.xlu0 %826
    %v829 = vsel %vm188, %v825, 0
    %v832 = vsel %vm725, %v827, 0
    %834 = vmatprep.subr.bf16.mxu0 0
    %835 = vmatpush1.bf16.msra.mxu0 %v832
    %836 = vmatprep.subr.bf16.mxu0 0
    %837 = vmatpush1.bf16.msra.mxu0 0
    %838 = vmatprep.subr.bf16.mxu0 0
    %839 = vmatpush1.bf16.msra.mxu0 0
    %840 = vmatprep.subr.bf16.mxu0 0
    %841 = vmatpush1.bf16.msra.mxu0 0
    %842 = vmatprep.subr.bf16.mxu0 0
    %843 = vmatpush1.bf16.msra.mxu0 0
    %844 = vmatprep.subr.bf16.mxu0 0
    %845 = vmatpush1.bf16.msra.mxu0 0
    %846 = vmatprep.subr.bf16.mxu0 0
    %847 = vmatpush1.bf16.msra.mxu0 0
    %848 = vmatprep.subr.bf16.mxu0 0
    %849 = vmatpush1.bf16.msra.mxu0 0
    %850 = vmatprep.subr.bf16.mxu0 0
    %851 = vmatpush1.bf16.msra.mxu0 0
    %852 = vmatprep.subr.bf16.mxu0 0
    %853 = vmatpush1.bf16.msra.mxu0 0
    %854 = vmatprep.subr.bf16.mxu0 0
    %855 = vmatpush1.bf16.msra.mxu0 0
    %856 = vmatprep.subr.bf16.mxu0 0
    %857 = vmatpush1.bf16.msra.mxu0 0
    %858 = vmatprep.subr.bf16.mxu0 0
    %859 = vmatpush1.bf16.msra.mxu0 0
    %860 = vmatprep.subr.bf16.mxu0 0
    %861 = vmatpush1.bf16.msra.mxu0 0
    %862 = vmatprep.subr.bf16.mxu0 0
    %863 = vmatpush1.bf16.msra.mxu0 0
    %864 = vmatprep.subr.bf16.mxu0 0
    %865 = vmatpush1.bf16.msra.mxu0 0
    %866 = vmatprep.mubr.bf16.mxu0 0
    %867 = vmatmul.mubr.bf16.gmra.mrb[0].mxu0 %v829
    %v868 = vpop.f32.mrb[0].mxu0
    %v869 = vadd.f32 0.0, %v868
    %v870 = vpop.f32.mrb[0].mxu0
    %v871 = vpop.f32.mrb[0].mxu0
    %v872 = vpop.f32.mrb[0].mxu0
    %873 = vdwg.mxu0
    %875 = vrot.lane.b32.xlu0 %v869, 16
    %v876 = vpop.permute.xlu0 %875
    %vm878 = vcmask 195712
    %879 = vst.msk [vmem:[#allocation2] sm:$0xff] %vm878, %v876
    %v880 = vpack.c.bf16 %v714, %v714
    %881 = vrot.lane.b32.xlu0 %v184, 40
    %v882 = vpop.permute.xlu0 %881
    %v884 = vsel %vm188, %v880, 0
    %v887 = vsel %vm725, %v882, 0
    %889 = vmatprep.subr.bf16.mxu0 0
    %890 = vmatpush1.bf16.msra.mxu0 %v887
    %891 = vmatprep.subr.bf16.mxu0 0
    %892 = vmatpush1.bf16.msra.mxu0 0
    %893 = vmatprep.subr.bf16.mxu0 0
    %894 = vmatpush1.bf16.msra.mxu0 0
    %895 = vmatprep.subr.bf16.mxu0 0
    %896 = vmatpush1.bf16.msra.mxu0 0
    %897 = vmatprep.subr.bf16.mxu0 0
    %898 = vmatpush1.bf16.msra.mxu0 0
    %899 = vmatprep.subr.bf16.mxu0 0
    %900 = vmatpush1.bf16.msra.mxu0 0
    %901 = vmatprep.subr.bf16.mxu0 0
    %902 = vmatpush1.bf16.msra.mxu0 0
    %903 = vmatprep.subr.bf16.mxu0 0
    %904 = vmatpush1.bf16.msra.mxu0 0
    %905 = vmatprep.subr.bf16.mxu0 0
    %906 = vmatpush1.bf16.msra.mxu0 0
    %907 = vmatprep.subr.bf16.mxu0 0
    %908 = vmatpush1.bf16.msra.mxu0 0
    %909 = vmatprep.subr.bf16.mxu0 0
    %910 = vmatpush1.bf16.msra.mxu0 0
    %911 = vmatprep.subr.bf16.mxu0 0
    %912 = vmatpush1.bf16.msra.mxu0 0
    %913 = vmatprep.subr.bf16.mxu0 0
    %914 = vmatpush1.bf16.msra.mxu0 0
    %915 = vmatprep.subr.bf16.mxu0 0
    %916 = vmatpush1.bf16.msra.mxu0 0
    %917 = vmatprep.subr.bf16.mxu0 0
    %918 = vmatpush1.bf16.msra.mxu0 0
    %919 = vmatprep.subr.bf16.mxu0 0
    %920 = vmatpush1.bf16.msra.mxu0 0
    %921 = vmatprep.mubr.bf16.mxu0 0
    %922 = vmatmul.mubr.bf16.gmra.mrb[0].mxu0 %v884
    %v923 = vpop.f32.mrb[0].mxu0
    %v924 = vadd.f32 0.0, %v923
    %v925 = vpop.f32.mrb[0].mxu0
    %v926 = vpop.f32.mrb[0].mxu0
    %v927 = vpop.f32.mrb[0].mxu0
    %928 = vdwg.mxu0
    %930 = vrot.lane.b32.xlu0 %v924, 24
    %v931 = vpop.permute.xlu0 %930
    %vm933 = vcmask 261312
    %934 = vst.msk [vmem:[#allocation2] sm:$0xff] %vm933, %v931
    %v935 = vpack.c.bf16 %v715, %v715
    %936 = vrot.lane.b32.xlu0 %v405, 64
    %v937 = vpop.permute.xlu0 %936
    %v939 = vsel %vm188, %v935, 0
    %v942 = vsel %vm725, %v937, 0
    %944 = vmatprep.subr.bf16.mxu0 0
    %945 = vmatpush1.bf16.msra.mxu0 %v942
    %946 = vmatprep.subr.bf16.mxu0 0
    %947 = vmatpush1.bf16.msra.mxu0 0
    %948 = vmatprep.subr.bf16.mxu0 0
    %949 = vmatpush1.bf16.msra.mxu0 0
    %950 = vmatprep.subr.bf16.mxu0 0
    %951 = vmatpush1.bf16.msra.mxu0 0
    %952 = vmatprep.subr.bf16.mxu0 0
    %953 = vmatpush1.bf16.msra.mxu0 0
    %954 = vmatprep.subr.bf16.mxu0 0
    %955 = vmatpush1.bf16.msra.mxu0 0
    %956 = vmatprep.subr.bf16.mxu0 0
    %957 = vmatpush1.bf16.msra.mxu0 0
    %958 = vmatprep.subr.bf16.mxu0 0
    %959 = vmatpush1.bf16.msra.mxu0 0
    %960 = vmatprep.subr.bf16.mxu0 0
    %961 = vmatpush1.bf16.msra.mxu0 0
    %962 = vmatprep.subr.bf16.mxu0 0
    %963 = vmatpush1.bf16.msra.mxu0 0
    %964 = vmatprep.subr.bf16.mxu0 0
    %965 = vmatpush1.bf16.msra.mxu0 0
    %966 = vmatprep.subr.bf16.mxu0 0
    %967 = vmatpush1.bf16.msra.mxu0 0
    %968 = vmatprep.subr.bf16.mxu0 0
    %969 = vmatpush1.bf16.msra.mxu0 0
    %970 = vmatprep.subr.bf16.mxu0 0
    %971 = vmatpush1.bf16.msra.mxu0 0
    %972 = vmatprep.subr.bf16.mxu0 0
    %973 = vmatpush1.bf16.msra.mxu0 0
    %974 = vmatprep.subr.bf16.mxu0 0
    %975 = vmatpush1.bf16.msra.mxu0 0
    %976 = vmatprep.mubr.bf16.mxu0 0
    %977 = vmatmul.mubr.bf16.gmra.mrb[0].mxu0 %v939
    %v978 = vpop.f32.mrb[0].mxu0
    %v979 = vadd.f32 0.0, %v978
    %v980 = vpop.f32.mrb[0].mxu0
    %v981 = vpop.f32.mrb[0].mxu0
    %v982 = vpop.f32.mrb[0].mxu0
    %983 = vdwg.mxu0
    %984 = vst.msk [vmem:[#allocation2 + $0x8] sm:$0xff] %vm188, %v979
    %v985 = vpack.c.bf16 %v716, %v716
    %986 = vrot.lane.b32.xlu0 %v405, 56
    %v987 = vpop.permute.xlu0 %986
    %v989 = vsel %vm188, %v985, 0
    %v992 = vsel %vm725, %v987, 0
    %994 = vmatprep.subr.bf16.mxu0 0
    %995 = vmatpush1.bf16.msra.mxu0 %v992
    %996 = vmatprep.subr.bf16.mxu0 0
    %997 = vmatpush1.bf16.msra.mxu0 0
    %998 = vmatprep.subr.bf16.mxu0 0
    %999 = vmatpush1.bf16.msra.mxu0 0
    %1000 = vmatprep.subr.bf16.mxu0 0
    %1001 = vmatpush1.bf16.msra.mxu0 0
    %1002 = vmatprep.subr.bf16.mxu0 0
    %1003 = vmatpush1.bf16.msra.mxu0 0
    %1004 = vmatprep.subr.bf16.mxu0 0
    %1005 = vmatpush1.bf16.msra.mxu0 0
    %1006 = vmatprep.subr.bf16.mxu0 0
    %1007 = vmatpush1.bf16.msra.mxu0 0
    %1008 = vmatprep.subr.bf16.mxu0 0
    %1009 = vmatpush1.bf16.msra.mxu0 0
    %1010 = vmatprep.subr.bf16.mxu0 0
    %1011 = vmatpush1.bf16.msra.mxu0 0
    %1012 = vmatprep.subr.bf16.mxu0 0
    %1013 = vmatpush1.bf16.msra.mxu0 0
    %1014 = vmatprep.subr.bf16.mxu0 0
    %1015 = vmatpush1.bf16.msra.mxu0 0
    %1016 = vmatprep.subr.bf16.mxu0 0
    %1017 = vmatpush1.bf16.msra.mxu0 0
    %1018 = vmatprep.subr.bf16.mxu0 0
    %1019 = vmatpush1.bf16.msra.mxu0 0
    %1020 = vmatprep.subr.bf16.mxu0 0
    %1021 = vmatpush1.bf16.msra.mxu0 0
    %1022 = vmatprep.subr.bf16.mxu0 0
    %1023 = vmatpush1.bf16.msra.mxu0 0
    %1024 = vmatprep.subr.bf16.mxu0 0
    %1025 = vmatpush1.bf16.msra.mxu0 0
    %1026 = vmatprep.mubr.bf16.mxu0 0
    %1027 = vmatmul.mubr.bf16.gmra.mrb[0].mxu0 %v989
    %v1028 = vpop.f32.mrb[0].mxu0
    %v1029 = vadd.f32 0.0, %v1028
    %v1030 = vpop.f32.mrb[0].mxu0
    %v1031 = vpop.f32.mrb[0].mxu0
    %v1032 = vpop.f32.mrb[0].mxu0
    %1033 = vdwg.mxu0
    %1035 = vrot.lane.b32.xlu0 %v1029, 8
    %v1036 = vpop.permute.xlu0 %1035
    %1038 = vst.msk [vmem:[#allocation2 + $0x8] sm:$0xff] %vm823, %v1036
    %v1039 = vpack.c.bf16 %v717, %v717
    %1040 = vrot.lane.b32.xlu0 %v405, 48
    %v1041 = vpop.permute.xlu0 %1040
    %v1043 = vsel %vm188, %v1039, 0
    %v1046 = vsel %vm725, %v1041, 0
    %1048 = vmatprep.subr.bf16.mxu0 0
    %1049 = vmatpush1.bf16.msra.mxu0 %v1046
    %1050 = vmatprep.subr.bf16.mxu0 0
    %1051 = vmatpush1.bf16.msra.mxu0 0
    %1052 = vmatprep.subr.bf16.mxu0 0
    %1053 = vmatpush1.bf16.msra.mxu0 0
    %1054 = vmatprep.subr.bf16.mxu0 0
    %1055 = vmatpush1.bf16.msra.mxu0 0
    %1056 = vmatprep.subr.bf16.mxu0 0
    %1057 = vmatpush1.bf16.msra.mxu0 0
    %1058 = vmatprep.subr.bf16.mxu0 0
    %1059 = vmatpush1.bf16.msra.mxu0 0
    %1060 = vmatprep.subr.bf16.mxu0 0
    %1061 = vmatpush1.bf16.msra.mxu0 0
    %1062 = vmatprep.subr.bf16.mxu0 0
    %1063 = vmatpush1.bf16.msra.mxu0 0
    %1064 = vmatprep.subr.bf16.mxu0 0
    %1065 = vmatpush1.bf16.msra.mxu0 0
    %1066 = vmatprep.subr.bf16.mxu0 0
    %1067 = vmatpush1.bf16.msra.mxu0 0
    %1068 = vmatprep.subr.bf16.mxu0 0
    %1069 = vmatpush1.bf16.msra.mxu0 0
    %1070 = vmatprep.subr.bf16.mxu0 0
    %1071 = vmatpush1.bf16.msra.mxu0 0
    %1072 = vmatprep.subr.bf16.mxu0 0
    %1073 = vmatpush1.bf16.msra.mxu0 0
    %1074 = vmatprep.subr.bf16.mxu0 0
    %1075 = vmatpush1.bf16.msra.mxu0 0
    %1076 = vmatprep.subr.bf16.mxu0 0
    %1077 = vmatpush1.bf16.msra.mxu0 0
    %1078 = vmatprep.subr.bf16.mxu0 0
    %1079 = vmatpush1.bf16.msra.mxu0 0
    %1080 = vmatprep.mubr.bf16.mxu0 0
    %1081 = vmatmul.mubr.bf16.gmra.mrb[0].mxu0 %v1043
    %v1082 = vpop.f32.mrb[0].mxu0
    %v1083 = vadd.f32 0.0, %v1082
    %v1084 = vpop.f32.mrb[0].mxu0
    %v1085 = vpop.f32.mrb[0].mxu0
    %v1086 = vpop.f32.mrb[0].mxu0
    %1087 = vdwg.mxu0
    %1089 = vrot.lane.b32.xlu0 %v1083, 16
    %v1090 = vpop.permute.xlu0 %1089
    %1092 = vst.msk [vmem:[#allocation2 + $0x8] sm:$0xff] %vm878, %v1090
    %v1093 = vpack.c.bf16 %v718, %v718
    %1094 = vrot.lane.b32.xlu0 %v405, 40
    %v1095 = vpop.permute.xlu0 %1094
    %v1097 = vsel %vm188, %v1093, 0
    %v1100 = vsel %vm725, %v1095, 0
    %1102 = vmatprep.subr.bf16.mxu0 0
    %1103 = vmatpush1.bf16.msra.mxu0 %v1100
    %1104 = vmatprep.subr.bf16.mxu0 0
    %1105 = vmatpush1.bf16.msra.mxu0 0
    %1106 = vmatprep.subr.bf16.mxu0 0
    %1107 = vmatpush1.bf16.msra.mxu0 0
    %1108 = vmatprep.subr.bf16.mxu0 0
    %1109 = vmatpush1.bf16.msra.mxu0 0
    %1110 = vmatprep.subr.bf16.mxu0 0
    %1111 = vmatpush1.bf16.msra.mxu0 0
    %1112 = vmatprep.subr.bf16.mxu0 0
    %1113 = vmatpush1.bf16.msra.mxu0 0
    %1114 = vmatprep.subr.bf16.mxu0 0
    %1115 = vmatpush1.bf16.msra.mxu0 0
    %1116 = vmatprep.subr.bf16.mxu0 0
    %1117 = vmatpush1.bf16.msra.mxu0 0
    %1118 = vmatprep.subr.bf16.mxu0 0
    %1119 = vmatpush1.bf16.msra.mxu0 0
    %1120 = vmatprep.subr.bf16.mxu0 0
    %1121 = vmatpush1.bf16.msra.mxu0 0
    %1122 = vmatprep.subr.bf16.mxu0 0
    %1123 = vmatpush1.bf16.msra.mxu0 0
    %1124 = vmatprep.subr.bf16.mxu0 0
    %1125 = vmatpush1.bf16.msra.mxu0 0
    %1126 = vmatprep.subr.bf16.mxu0 0
    %1127 = vmatpush1.bf16.msra.mxu0 0
    %1128 = vmatprep.subr.bf16.mxu0 0
    %1129 = vmatpush1.bf16.msra.mxu0 0
    %1130 = vmatprep.subr.bf16.mxu0 0
    %1131 = vmatpush1.bf16.msra.mxu0 0
    %1132 = vmatprep.subr.bf16.mxu0 0
    %1133 = vmatpush1.bf16.msra.mxu0 0
    %1134 = vmatprep.mubr.bf16.mxu0 0
    %1135 = vmatmul.mubr.bf16.gmra.mrb[0].mxu0 %v1097
    %v1136 = vpop.f32.mrb[0].mxu0
    %v1137 = vadd.f32 0.0, %v1136
    %v1138 = vpop.f32.mrb[0].mxu0
    %v1139 = vpop.f32.mrb[0].mxu0
    %v1140 = vpop.f32.mrb[0].mxu0
    %1141 = vdwg.mxu0
    %1143 = vrot.lane.b32.xlu0 %v1137, 24
    %v1144 = vpop.permute.xlu0 %1143
    %1146 = vst.msk [vmem:[#allocation2 + $0x8] sm:$0xff] %vm933, %v1144
    %v1147 = vld [vmem:[#allocation2] sm:$0xff]
    %v1148 = vld [vmem:[#allocation2 + $0x8] sm:$0xff]
    %v1149 = vld [vmem:[%s6] sm:$0xf]
    %v1150 = vld [vmem:[%s6 + $0x4] sm:$0xf]
    %v1151 = vld [vmem:[%s6 + $0x8] sm:$0xf]
    %v1152 = vld [vmem:[%s6 + $0xc] sm:$0xf]
    %v1153 = vpack.c.bf16 %v1148, %v1147
    %v1154 = vld [vmem:[%s7] sm:$0x1]
    %v1156 = vlaneseq
    %v1157 = vshrl.u32 %v1156, 7
    %v1158 = vsub.s32 0, %v1157
    %v1159 = vrot.slane %v1154, %v1158
    %v1165 = vunpack.c.l.b16 %v1149
    %v1166 = vunpack.c.l.b16 %v1150
    %v1167 = vunpack.c.l.b16 %v1151
    %v1168 = vunpack.c.l.b16 %v1152
    %v1169 = vpack.c.b16 %v1166, %v1165
    %v1170 = vpack.c.b16 %v1168, %v1167
    %v1174 = vsel %vm71, %v1153, 0
    %1176 = vmatprep.subr.bf16.mxu0 0
    %1177 = vmatpush1.bf16.msra.mxu0 %v1169
    %1178 = vmatprep.subr.bf16.mxu0 0
    %1179 = vmatpush1.bf16.msra.mxu0 %v1170
    %1180 = vmatprep.subr.bf16.mxu0 0
    %1181 = vmatpush1.bf16.msra.mxu0 0
    %1182 = vmatprep.subr.bf16.mxu0 0
    %1183 = vmatpush1.bf16.msra.mxu0 0
    %1184 = vmatprep.subr.bf16.mxu0 0
    %1185 = vmatpush1.bf16.msra.mxu0 0
    %1186 = vmatprep.subr.bf16.mxu0 0
    %1187 = vmatpush1.bf16.msra.mxu0 0
    %1188 = vmatprep.subr.bf16.mxu0 0
    %1189 = vmatpush1.bf16.msra.mxu0 0
    %1190 = vmatprep.subr.bf16.mxu0 0
    %1191 = vmatpush1.bf16.msra.mxu0 0
    %1192 = vmatprep.subr.bf16.mxu0 0
    %1193 = vmatpush1.bf16.msra.mxu0 0
    %1194 = vmatprep.subr.bf16.mxu0 0
    %1195 = vmatpush1.bf16.msra.mxu0 0
    %1196 = vmatprep.subr.bf16.mxu0 0
    %1197 = vmatpush1.bf16.msra.mxu0 0
    %1198 = vmatprep.subr.bf16.mxu0 0
    %1199 = vmatpush1.bf16.msra.mxu0 0
    %1200 = vmatprep.subr.bf16.mxu0 0
    %1201 = vmatpush1.bf16.msra.mxu0 0
    %1202 = vmatprep.subr.bf16.mxu0 0
    %1203 = vmatpush1.bf16.msra.mxu0 0
    %1204 = vmatprep.subr.bf16.mxu0 0
    %1205 = vmatpush1.bf16.msra.mxu0 0
    %1206 = vmatprep.subr.bf16.mxu0 0
    %1207 = vmatpush1.bf16.msra.mxu0 0
    %1208 = vmatprep.mubr.bf16.mxu0 0
    %1209 = vmatmul.mubr.bf16.gmra.mrb[0].mxu0 %v1174
    %v1210 = vpop.f32.mrb[0].mxu0
    %v1211 = vadd.f32 %v1159, %v1210
    %v1212 = vpop.f32.mrb[0].mxu0
    %v1213 = vpop.f32.mrb[0].mxu0
    %v1214 = vadd.f32 %v1159, %v1213
    %v1215 = vpop.f32.mrb[0].mxu0
    %1216 = vdwg.mxu0
    %v1217 = vadd.f32 %v113, %v1211
    %v1218 = vadd.f32 %v114, %v1214
    %v1219 = vld [vmem:[%s8] sm:$0x1]
    %v1220 = vld [vmem:[%s9] sm:$0x1]
    %v1221 = vsel %vm71, %v1217, 0.0
    %1222 = vadd.xlane.f32.xlu0 %v1221
    %v1223 = vpop.xlane.xlu0 %1222
    %v1224 = vsel %vm71, %v1218, 0.0
    %1225 = vadd.xlane.f32.xlu0 %v1224
    %v1226 = vpop.xlane.xlu0 %1225
    %v1227 = vmul.f32 %v1223, %v78
    %v1228 = vmul.f32 %v1226, %v78
    %v1229 = vsub.f32 %v1217, %v1227
    %v1230 = vsub.f32 %v1218, %v1228
    %v1231 = vmul.f32 %v1229, %v1229
    %v1232 = vmul.f32 %v1230, %v1230
    %v1233 = vsel %vm71, %v1231, 0.0
    %1234 = vadd.xlane.f32.xlu0 %v1233
    %v1235 = vpop.xlane.xlu0 %1234
    %v1236 = vsel %vm71, %v1232, 0.0
    %1237 = vadd.xlane.f32.xlu0 %v1236
    %v1238 = vpop.xlane.xlu0 %1237
    %v1239 = vmul.f32 %v1235, %v78
    %v1240 = vmul.f32 %v1238, %v78
    %v1241 = vadd.f32 %v1239, 1e-12
    %v1242 = vadd.f32 %v1240, 1e-12
    %v1243 = vrsqrt.pop %v1241
    %v1244 = vrsqrt.pop %v1242
    %v1245 = vmul.f32 %v1229, %v1243
    %v1246 = vmul.f32 %v1230, %v1244
    %v1248 = vlaneseq
    %v1249 = vshrl.u32 %v1248, 7
    %v1250 = vsub.s32 0, %v1249
    %v1251 = vrot.slane %v1219, %v1250
    %v1253 = vmul.f32 %v1245, %v1251
    %v1254 = vmul.f32 %v1246, %v1251
    %v1256 = vlaneseq
    %v1257 = vshrl.u32 %v1256, 7
    %v1258 = vsub.s32 0, %v1257
    %v1259 = vrot.slane %v1220, %v1258
    %v1261 = vadd.f32 %v1253, %v1259
    %v1262 = vadd.f32 %v1254, %v1259
    %v1263 = vld [vmem:[%s10] sm:$0xf]
    %v1264 = vld [vmem:[%s10 + $0x4] sm:$0xf]
    %v1265 = vld [vmem:[%s10 + $0x8] sm:$0xf]
    %v1266 = vld [vmem:[%s10 + $0xc] sm:$0xf]
    %v1267 = vpack.c.bf16 %v1262, %v1261
    %v1268 = vld [vmem:[%s11] sm:$0x1]
    %v1270 = vlaneseq
    %v1271 = vshrl.u32 %v1270, 7
    %v1272 = vsub.s32 0, %v1271
    %v1273 = vrot.slane %v1268, %v1272
    %v1279 = vunpack.c.l.b16 %v1263
    %v1280 = vunpack.c.l.b16 %v1264
    %v1281 = vunpack.c.l.b16 %v1265
    %v1282 = vunpack.c.l.b16 %v1266
    %v1283 = vpack.c.b16 %v1280, %v1279
    %v1284 = vpack.c.b16 %v1282, %v1281
    %v1288 = vsel %vm71, %v1267, 0
    %1290 = vmatprep.subr.bf16.mxu0 0
    %1291 = vmatpush1.bf16.msra.mxu0 %v1283
    %1292 = vmatprep.subr.bf16.mxu0 0
    %1293 = vmatpush1.bf16.msra.mxu0 %v1284
    %1294 = vmatprep.subr.bf16.mxu0 0
    %1295 = vmatpush1.bf16.msra.mxu0 0
    %1296 = vmatprep.subr.bf16.mxu0 0
    %1297 = vmatpush1.bf16.msra.mxu0 0
    %1298 = vmatprep.subr.bf16.mxu0 0
    %1299 = vmatpush1.bf16.msra.mxu0 0
    %1300 = vmatprep.subr.bf16.mxu0 0
    %1301 = vmatpush1.bf16.msra.mxu0 0
    %1302 = vmatprep.subr.bf16.mxu0 0
    %1303 = vmatpush1.bf16.msra.mxu0 0
    %1304 = vmatprep.subr.bf16.mxu0 0
    %1305 = vmatpush1.bf16.msra.mxu0 0
    %1306 = vmatprep.subr.bf16.mxu0 0
    %1307 = vmatpush1.bf16.msra.mxu0 0
    %1308 = vmatprep.subr.bf16.mxu0 0
    %1309 = vmatpush1.bf16.msra.mxu0 0
    %1310 = vmatprep.subr.bf16.mxu0 0
    %1311 = vmatpush1.bf16.msra.mxu0 0
    %1312 = vmatprep.subr.bf16.mxu0 0
    %1313 = vmatpush1.bf16.msra.mxu0 0
    %1314 = vmatprep.subr.bf16.mxu0 0
    %1315 = vmatpush1.bf16.msra.mxu0 0
    %1316 = vmatprep.subr.bf16.mxu0 0
    %1317 = vmatpush1.bf16.msra.mxu0 0
    %1318 = vmatprep.subr.bf16.mxu0 0
    %1319 = vmatpush1.bf16.msra.mxu0 0
    %1320 = vmatprep.subr.bf16.mxu0 0
    %1321 = vmatpush1.bf16.msra.mxu0 0
    %1322 = vmatprep.mubr.bf16.mxu0 0
    %1323 = vmatmul.mubr.bf16.gmra.mrb[0].mxu0 %v1288
    %v1324 = vpop.f32.mrb[0].mxu0
    %v1325 = vadd.f32 %v1273, %v1324
    %v1326 = vpop.f32.mrb[0].mxu0
    %v1327 = vpop.f32.mrb[0].mxu0
    %v1328 = vadd.f32 %v1273, %v1327
    %v1329 = vpop.f32.mrb[0].mxu0
    %1330 = vdwg.mxu0
    %v1331 = vmul.f32 %v1325, %v1325
    %v1332 = vmul.f32 %v1328, %v1328
    %v1333 = vmul.f32 %v1325, %v1331
    %v1334 = vmul.f32 %v1328, %v1332
    %v1335 = vmul.f32 %v1333, 0.044715
    %v1336 = vmul.f32 %v1334, 0.044715
    %v1337 = vadd.f32 %v1325, %v1335
    %v1338 = vadd.f32 %v1328, %v1336
    %v1339 = vmul.f32 %v1337, 0.7978846
    %v1340 = vmul.f32 %v1338, 0.7978846
    %v1341 = vtanh.pop %v1339
    %v1342 = vtanh.pop %v1340
    %v1343 = vadd.f32 %v1341, 1.0
    %v1344 = vadd.f32 %v1342, 1.0
    %v1345 = vmul.f32 %v1343, 0.5
    %v1346 = vmul.f32 %v1344, 0.5
    %v1347 = vmul.f32 %v1325, %v1345
    %v1348 = vmul.f32 %v1328, %v1346
    %v1349 = vld [vmem:[%s12] sm:$0xf]
    %v1350 = vld [vmem:[%s12 + $0x4] sm:$0xf]
    %v1351 = vld [vmem:[%s12 + $0x8] sm:$0xf]
    %v1352 = vld [vmem:[%s12 + $0xc] sm:$0xf]
    %v1353 = vld [vmem:[%s12 + $0x10] sm:$0xf]
    %v1354 = vld [vmem:[%s12 + $0x14] sm:$0xf]
    %v1355 = vld [vmem:[%s12 + $0x18] sm:$0xf]
    %v1356 = vld [vmem:[%s12 + $0x1c] sm:$0xf]
    %v1357 = vpack.c.bf16 %v1348, %v1347
    %v1358 = vld [vmem:[%s13] sm:$0x1]
    %v1360 = vlaneseq
    %v1361 = vshrl.u32 %v1360, 7
    %v1362 = vsub.s32 0, %v1361
    %v1363 = vrot.slane %v1358, %v1362
    %v1373 = vunpack.c.l.b16 %v1349
    %v1374 = vunpack.c.l.b16 %v1350
    %v1375 = vunpack.c.l.b16 %v1351
    %v1376 = vunpack.c.l.b16 %v1352
    %v1377 = vunpack.c.l.b16 %v1353
    %v1378 = vunpack.c.l.b16 %v1354
    %v1379 = vunpack.c.l.b16 %v1355
    %v1380 = vunpack.c.l.b16 %v1356
    %v1381 = vpack.c.b16 %v1374, %v1373
    %v1382 = vpack.c.b16 %v1376, %v1375
    %v1383 = vpack.c.b16 %v1378, %v1377
    %v1384 = vpack.c.b16 %v1380, %v1379
    %vm1389 = vcmask 523264
    %v1391 = vsel %vm1389, %v1357, 0
    %1393 = vmatprep.subr.bf16.mxu0 0
    %1394 = vmatpush1.bf16.msra.mxu0 %v1381
    %1395 = vmatprep.subr.bf16.mxu0 0
    %1396 = vmatpush1.bf16.msra.mxu0 %v1382
    %1397 = vmatprep.subr.bf16.mxu0 0
    %1398 = vmatpush1.bf16.msra.mxu0 %v1383
    %1399 = vmatprep.subr.bf16.mxu0 0
    %1400 = vmatpush1.bf16.msra.mxu0 %v1384
    %1401 = vmatprep.subr.bf16.mxu0 0
    %1402 = vmatpush1.bf16.msra.mxu0 0
    %1403 = vmatprep.subr.bf16.mxu0 0
    %1404 = vmatpush1.bf16.msra.mxu0 0
    %1405 = vmatprep.subr.bf16.mxu0 0
    %1406 = vmatpush1.bf16.msra.mxu0 0
    %1407 = vmatprep.subr.bf16.mxu0 0
    %1408 = vmatpush1.bf16.msra.mxu0 0
    %1409 = vmatprep.subr.bf16.mxu0 0
    %1410 = vmatpush1.bf16.msra.mxu0 0
    %1411 = vmatprep.subr.bf16.mxu0 0
    %1412 = vmatpush1.bf16.msra.mxu0 0
    %1413 = vmatprep.subr.bf16.mxu0 0
    %1414 = vmatpush1.bf16.msra.mxu0 0
    %1415 = vmatprep.subr.bf16.mxu0 0
    %1416 = vmatpush1.bf16.msra.mxu0 0
    %1417 = vmatprep.subr.bf16.mxu0 0
    %1418 = vmatpush1.bf16.msra.mxu0 0
    %1419 = vmatprep.subr.bf16.mxu0 0
    %1420 = vmatpush1.bf16.msra.mxu0 0
    %1421 = vmatprep.subr.bf16.mxu0 0
    %1422 = vmatpush1.bf16.msra.mxu0 0
    %1423 = vmatprep.subr.bf16.mxu0 0
    %1424 = vmatpush1.bf16.msra.mxu0 0
    %1425 = vmatprep.mubr.bf16.mxu0 0
    %1426 = vmatmul.mubr.bf16.gmra.mrb[0].mxu0 %v1391
    %v1427 = vpop.f32.mrb[0].mxu0
    %v1428 = vadd.f32 %v1363, %v1427
    %v1429 = vpop.f32.mrb[0].mxu0
    %v1430 = vpop.f32.mrb[0].mxu0
    %v1431 = vadd.f32 %v1363, %v1430
    %v1432 = vpop.f32.mrb[0].mxu0
    %1433 = vdwg.mxu0
    %v1434 = vadd.f32 %v1261, %v1428
    %v1435 = vadd.f32 %v1262, %v1431
    %v1436 = vld [vmem:[%s14] sm:$0x1]
    %v1437 = vld [vmem:[%s15] sm:$0x1]
    %v1438 = vsel %vm71, %v1434, 0.0
    %1439 = vadd.xlane.f32.xlu0 %v1438
    %v1440 = vpop.xlane.xlu0 %1439
    %v1441 = vsel %vm71, %v1435, 0.0
    %1442 = vadd.xlane.f32.xlu0 %v1441
    %v1443 = vpop.xlane.xlu0 %1442
    %v1444 = vmul.f32 %v1440, %v78
    %v1445 = vmul.f32 %v1443, %v78
    %v1446 = vsub.f32 %v1434, %v1444
    %v1447 = vsub.f32 %v1435, %v1445
    %v1448 = vmul.f32 %v1446, %v1446
    %v1449 = vmul.f32 %v1447, %v1447
    %v1450 = vsel %vm71, %v1448, 0.0
    %1451 = vadd.xlane.f32.xlu0 %v1450
    %v1452 = vpop.xlane.xlu0 %1451
    %v1453 = vsel %vm71, %v1449, 0.0
    %1454 = vadd.xlane.f32.xlu0 %v1453
    %v1455 = vpop.xlane.xlu0 %1454
    %v1456 = vmul.f32 %v1452, %v78
    %v1457 = vmul.f32 %v1455, %v78
    %v1458 = vadd.f32 %v1456, 1e-12
    %v1459 = vadd.f32 %v1457, 1e-12
    %v1460 = vrsqrt.pop %v1458
    %v1461 = vrsqrt.pop %v1459
    %v1462 = vmul.f32 %v1446, %v1460
    %v1463 = vmul.f32 %v1447, %v1461
    %v1465 = vlaneseq
    %v1466 = vshrl.u32 %v1465, 7
    %v1467 = vsub.s32 0, %v1466
    %v1468 = vrot.slane %v1436, %v1467
    %v1470 = vmul.f32 %v1462, %v1468
    %v1471 = vmul.f32 %v1463, %v1468
    %v1473 = vlaneseq
    %v1474 = vshrl.u32 %v1473, 7
    %v1475 = vsub.s32 0, %v1474
    %v1476 = vrot.slane %v1437, %v1475
    %v1478 = vadd.f32 %v1470, %v1476
    %v1479 = vadd.f32 %v1471, %v1476
    %s1480 = scalar_lea.vmem %s4, 16
    %v1481 = vld [vmem:[%s1480] sm:$0xf]
    %v1482 = vld [vmem:[%s1480 + $0x4] sm:$0xf]
    %v1483 = vld [vmem:[%s1480 + $0x8] sm:$0xf]
    %v1484 = vld [vmem:[%s1480 + $0xc] sm:$0xf]
    %v1485 = vpack.c.bf16 %v1479, %v1478
    %s1486 = scalar_lea.vmem %s5, 1
    %v1487 = vld [vmem:[%s1486] sm:$0x1]
    %v1489 = vlaneseq
    %v1490 = vshrl.u32 %v1489, 7
    %v1491 = vsub.s32 0, %v1490
    %v1492 = vrot.slane %v1487, %v1491
    %v1498 = vunpack.c.l.b16 %v1481
    %v1499 = vunpack.c.l.b16 %v1482
    %v1500 = vunpack.c.l.b16 %v1483
    %v1501 = vunpack.c.l.b16 %v1484
    %v1502 = vpack.c.b16 %v1499, %v1498
    %v1503 = vpack.c.b16 %v1501, %v1500
    %v1507 = vsel %vm71, %v1485, 0
    %1509 = vmatprep.subr.bf16.mxu0 0
    %1510 = vmatpush1.bf16.msra.mxu0 %v1502
    %1511 = vmatprep.subr.bf16.mxu0 0
    %1512 = vmatpush1.bf16.msra.mxu0 %v1503
    %1513 = vmatprep.subr.bf16.mxu0 0
    %1514 = vmatpush1.bf16.msra.mxu0 0
    %1515 = vmatprep.subr.bf16.mxu0 0
    %1516 = vmatpush1.bf16.msra.mxu0 0
    %1517 = vmatprep.subr.bf16.mxu0 0
    %1518 = vmatpush1.bf16.msra.mxu0 0
    %1519 = vmatprep.subr.bf16.mxu0 0
    %1520 = vmatpush1.bf16.msra.mxu0 0
    %1521 = vmatprep.subr.bf16.mxu0 0
    %1522 = vmatpush1.bf16.msra.mxu0 0
    %1523 = vmatprep.subr.bf16.mxu0 0
    %1524 = vmatpush1.bf16.msra.mxu0 0
    %1525 = vmatprep.subr.bf16.mxu0 0
    %1526 = vmatpush1.bf16.msra.mxu0 0
    %1527 = vmatprep.subr.bf16.mxu0 0
    %1528 = vmatpush1.bf16.msra.mxu0 0
    %1529 = vmatprep.subr.bf16.mxu0 0
    %1530 = vmatpush1.bf16.msra.mxu0 0
    %1531 = vmatprep.subr.bf16.mxu0 0
    %1532 = vmatpush1.bf16.msra.mxu0 0
    %1533 = vmatprep.subr.bf16.mxu0 0
    %1534 = vmatpush1.bf16.msra.mxu0 0
    %1535 = vmatprep.subr.bf16.mxu0 0
    %1536 = vmatpush1.bf16.msra.mxu0 0
    %1537 = vmatprep.subr.bf16.mxu0 0
    %1538 = vmatpush1.bf16.msra.mxu0 0
    %1539 = vmatprep.subr.bf16.mxu0 0
    %1540 = vmatpush1.bf16.msra.mxu0 0
    %1541 = vmatprep.mubr.bf16.mxu0 0
    %1542 = vmatmul.mubr.bf16.gmra.mrb[0].mxu0 %v1507
    %v1543 = vpop.f32.mrb[0].mxu0
    %v1544 = vadd.f32 %v1492, %v1543
    %v1545 = vpop.f32.mrb[0].mxu0
    %v1546 = vpop.f32.mrb[0].mxu0
    %v1547 = vadd.f32 %v1492, %v1546
    %v1548 = vpop.f32.mrb[0].mxu0
    %1549 = vdwg.mxu0
    %v1550 = vld [vmem:[%s1] sm:$0x1]
    %v1551 = vpack.c.bf16 %v1544, %v1544
    %1553 = vrot.lane.b32.xlu0 %v1551, 96
    %v1554 = vpop.permute.xlu0 %1553
    %v1556 = vsel %vm188, %v1551, 0
    %v1559 = vsel %vm188, %v1554, 0
    %1561 = vmatprep.subr.bf16.mxu0 0
    %1562 = vmatpush1.bf16.xpose.msra.mxu0 %v1559
    %1563 = vmatprep.subr.bf16.mxu0 0
    %1564 = vmatpush1.bf16.xpose.msra.mxu0 0
    %1565 = vmatprep.subr.bf16.mxu0 0
    %1566 = vmatpush1.bf16.xpose.msra.mxu0 0
    %1567 = vmatprep.subr.bf16.mxu0 0
    %1568 = vmatpush1.bf16.xpose.msra.mxu0 0
    %1569 = vmatprep.subr.bf16.mxu0 0
    %1570 = vmatpush1.bf16.xpose.msra.mxu0 0
    %1571 = vmatprep.subr.bf16.mxu0 0
    %1572 = vmatpush1.bf16.xpose.msra.mxu0 0
    %1573 = vmatprep.subr.bf16.mxu0 0
    %1574 = vmatpush1.bf16.xpose.msra.mxu0 0
    %1575 = vmatprep.subr.bf16.mxu0 0
    %1576 = vmatpush1.bf16.xpose.msra.mxu0 0
    %1577 = vmatprep.subr.bf16.mxu0 0
    %1578 = vmatpush1.bf16.xpose.msra.mxu0 0
    %1579 = vmatprep.subr.bf16.mxu0 0
    %1580 = vmatpush1.bf16.xpose.msra.mxu0 0
    %1581 = vmatprep.subr.bf16.mxu0 0
    %1582 = vmatpush1.bf16.xpose.msra.mxu0 0
    %1583 = vmatprep.subr.bf16.mxu0 0
    %1584 = vmatpush1.bf16.xpose.msra.mxu0 0
    %1585 = vmatprep.subr.bf16.mxu0 0
    %1586 = vmatpush1.bf16.xpose.msra.mxu0 0
    %1587 = vmatprep.subr.bf16.mxu0 0
    %1588 = vmatpush1.bf16.xpose.msra.mxu0 0
    %1589 = vmatprep.subr.bf16.mxu0 0
    %1590 = vmatpush1.bf16.xpose.msra.mxu0 0
    %1591 = vmatprep.subr.bf16.mxu0 0
    %1592 = vmatpush1.bf16.xpose.msra.mxu0 0
    %1593 = vmatprep.mubr.bf16.mxu0 0
    %1594 = vmatmul.mubr.bf16.gmra.mrb[0].mxu0 %v1556
    %v1595 = vpop.f32.mrb[0].mxu0
    %v1596 = vadd.f32 0.0, %v1595
    %v1597 = vpop.f32.mrb[0].mxu0
    %v1598 = vpop.f32.mrb[0].mxu0
    %v1599 = vpop.f32.mrb[0].mxu0
    %1600 = vdwg.mxu0
    %v1601 = vmul.f32 %v1596, 0.35355338
    %v1603 = vlaneseq
    %v1604 = vshrl.u32 %v1603, 7
    %v1605 = vsub.s32 0, %v1604
    %v1606 = vrot.slane %v1550, %v1605
    %v1608 = vadd.f32 %v1601, %v1606
    %1609 = vst.msk [vmem:[#allocation3] sm:$0xff] %vm188, %v1608
    %1610 = vrot.lane.b32.xlu0 %v1551, 120
    %v1611 = vpop.permute.xlu0 %1610
    %1612 = vrot.lane.b32.xlu0 %v1551, 88
    %v1613 = vpop.permute.xlu0 %1612
    %v1615 = vsel %vm188, %v1611, 0
    %v1618 = vsel %vm188, %v1613, 0
    %1620 = vmatprep.subr.bf16.mxu0 0
    %1621 = vmatpush1.bf16.xpose.msra.mxu0 %v1618
    %1622 = vmatprep.subr.bf16.mxu0 0
    %1623 = vmatpush1.bf16.xpose.msra.mxu0 0
    %1624 = vmatprep.subr.bf16.mxu0 0
    %1625 = vmatpush1.bf16.xpose.msra.mxu0 0
    %1626 = vmatprep.subr.bf16.mxu0 0
    %1627 = vmatpush1.bf16.xpose.msra.mxu0 0
    %1628 = vmatprep.subr.bf16.mxu0 0
    %1629 = vmatpush1.bf16.xpose.msra.mxu0 0
    %1630 = vmatprep.subr.bf16.mxu0 0
    %1631 = vmatpush1.bf16.xpose.msra.mxu0 0
    %1632 = vmatprep.subr.bf16.mxu0 0
    %1633 = vmatpush1.bf16.xpose.msra.mxu0 0
    %1634 = vmatprep.subr.bf16.mxu0 0
    %1635 = vmatpush1.bf16.xpose.msra.mxu0 0
    %1636 = vmatprep.subr.bf16.mxu0 0
    %1637 = vmatpush1.bf16.xpose.msra.mxu0 0
    %1638 = vmatprep.subr.bf16.mxu0 0
    %1639 = vmatpush1.bf16.xpose.msra.mxu0 0
    %1640 = vmatprep.subr.bf16.mxu0 0
    %1641 = vmatpush1.bf16.xpose.msra.mxu0 0
    %1642 = vmatprep.subr.bf16.mxu0 0
    %1643 = vmatpush1.bf16.xpose.msra.mxu0 0
    %1644 = vmatprep.subr.bf16.mxu0 0
    %1645 = vmatpush1.bf16.xpose.msra.mxu0 0
    %1646 = vmatprep.subr.bf16.mxu0 0
    %1647 = vmatpush1.bf16.xpose.msra.mxu0 0
    %1648 = vmatprep.subr.bf16.mxu0 0
    %1649 = vmatpush1.bf16.xpose.msra.mxu0 0
    %1650 = vmatprep.subr.bf16.mxu0 0
    %1651 = vmatpush1.bf16.xpose.msra.mxu0 0
    %1652 = vmatprep.mubr.bf16.mxu0 0
    %1653 = vmatmul.mubr.bf16.gmra.mrb[0].mxu0 %v1615
    %v1654 = vpop.f32.mrb[0].mxu0
    %v1655 = vadd.f32 0.0, %v1654
    %v1656 = vpop.f32.mrb[0].mxu0
    %v1657 = vpop.f32.mrb[0].mxu0
    %v1658 = vpop.f32.mrb[0].mxu0
    %1659 = vdwg.mxu0
    %v1660 = vmul.f32 %v1655, 0.35355338
    %v1661 = vadd.f32 %v1660, %v1606
    %1662 = vst.msk [vmem:[#allocation3 + $0x8] sm:$0xff] %vm188, %v1661
    %1663 = vrot.lane.b32.xlu0 %v1551, 112
    %v1664 = vpop.permute.xlu0 %1663
    %1665 = vrot.lane.b32.xlu0 %v1551, 80
    %v1666 = vpop.permute.xlu0 %1665
    %v1668 = vsel %vm188, %v1664, 0
    %v1671 = vsel %vm188, %v1666, 0
    %1673 = vmatprep.subr.bf16.mxu0 0
    %1674 = vmatpush1.bf16.xpose.msra.mxu0 %v1671
    %1675 = vmatprep.subr.bf16.mxu0 0
    %1676 = vmatpush1.bf16.xpose.msra.mxu0 0
    %1677 = vmatprep.subr.bf16.mxu0 0
    %1678 = vmatpush1.bf16.xpose.msra.mxu0 0
    %1679 = vmatprep.subr.bf16.mxu0 0
    %1680 = vmatpush1.bf16.xpose.msra.mxu0 0
    %1681 = vmatprep.subr.bf16.mxu0 0
    %1682 = vmatpush1.bf16.xpose.msra.mxu0 0
    %1683 = vmatprep.subr.bf16.mxu0 0
    %1684 = vmatpush1.bf16.xpose.msra.mxu0 0
    %1685 = vmatprep.subr.bf16.mxu0 0
    %1686 = vmatpush1.bf16.xpose.msra.mxu0 0
    %1687 = vmatprep.subr.bf16.mxu0 0
    %1688 = vmatpush1.bf16.xpose.msra.mxu0 0
    %1689 = vmatprep.subr.bf16.mxu0 0
    %1690 = vmatpush1.bf16.xpose.msra.mxu0 0
    %1691 = vmatprep.subr.bf16.mxu0 0
    %1692 = vmatpush1.bf16.xpose.msra.mxu0 0
    %1693 = vmatprep.subr.bf16.mxu0 0
    %1694 = vmatpush1.bf16.xpose.msra.mxu0 0
    %1695 = vmatprep.subr.bf16.mxu0 0
    %1696 = vmatpush1.bf16.xpose.msra.mxu0 0
    %1697 = vmatprep.subr.bf16.mxu0 0
    %1698 = vmatpush1.bf16.xpose.msra.mxu0 0
    %1699 = vmatprep.subr.bf16.mxu0 0
    %1700 = vmatpush1.bf16.xpose.msra.mxu0 0
    %1701 = vmatprep.subr.bf16.mxu0 0
    %1702 = vmatpush1.bf16.xpose.msra.mxu0 0
    %1703 = vmatprep.subr.bf16.mxu0 0
    %1704 = vmatpush1.bf16.xpose.msra.mxu0 0
    %1705 = vmatprep.mubr.bf16.mxu0 0
    %1706 = vmatmul.mubr.bf16.gmra.mrb[0].mxu0 %v1668
    %v1707 = vpop.f32.mrb[0].mxu0
    %v1708 = vadd.f32 0.0, %v1707
    %v1709 = vpop.f32.mrb[0].mxu0
    %v1710 = vpop.f32.mrb[0].mxu0
    %v1711 = vpop.f32.mrb[0].mxu0
    %1712 = vdwg.mxu0
    %v1713 = vmul.f32 %v1708, 0.35355338
    %v1714 = vadd.f32 %v1713, %v1606
    %1715 = vst.msk [vmem:[#allocation3 + $0x10] sm:$0xff] %vm188, %v1714
    %1716 = vrot.lane.b32.xlu0 %v1551, 104
    %v1717 = vpop.permute.xlu0 %1716
    %1718 = vrot.lane.b32.xlu0 %v1551, 72
    %v1719 = vpop.permute.xlu0 %1718
    %v1721 = vsel %vm188, %v1717, 0
    %v1724 = vsel %vm188, %v1719, 0
    %1726 = vmatprep.subr.bf16.mxu0 0
    %1727 = vmatpush1.bf16.xpose.msra.mxu0 %v1724
    %1728 = vmatprep.subr.bf16.mxu0 0
    %1729 = vmatpush1.bf16.xpose.msra.mxu0 0
    %1730 = vmatprep.subr.bf16.mxu0 0
    %1731 = vmatpush1.bf16.xpose.msra.mxu0 0
    %1732 = vmatprep.subr.bf16.mxu0 0
    %1733 = vmatpush1.bf16.xpose.msra.mxu0 0
    %1734 = vmatprep.subr.bf16.mxu0 0
    %1735 = vmatpush1.bf16.xpose.msra.mxu0 0
    %1736 = vmatprep.subr.bf16.mxu0 0
    %1737 = vmatpush1.bf16.xpose.msra.mxu0 0
    %1738 = vmatprep.subr.bf16.mxu0 0
    %1739 = vmatpush1.bf16.xpose.msra.mxu0 0
    %1740 = vmatprep.subr.bf16.mxu0 0
    %1741 = vmatpush1.bf16.xpose.msra.mxu0 0
    %1742 = vmatprep.subr.bf16.mxu0 0
    %1743 = vmatpush1.bf16.xpose.msra.mxu0 0
    %1744 = vmatprep.subr.bf16.mxu0 0
    %1745 = vmatpush1.bf16.xpose.msra.mxu0 0
    %1746 = vmatprep.subr.bf16.mxu0 0
    %1747 = vmatpush1.bf16.xpose.msra.mxu0 0
    %1748 = vmatprep.subr.bf16.mxu0 0
    %1749 = vmatpush1.bf16.xpose.msra.mxu0 0
    %1750 = vmatprep.subr.bf16.mxu0 0
    %1751 = vmatpush1.bf16.xpose.msra.mxu0 0
    %1752 = vmatprep.subr.bf16.mxu0 0
    %1753 = vmatpush1.bf16.xpose.msra.mxu0 0
    %1754 = vmatprep.subr.bf16.mxu0 0
    %1755 = vmatpush1.bf16.xpose.msra.mxu0 0
    %1756 = vmatprep.subr.bf16.mxu0 0
    %1757 = vmatpush1.bf16.xpose.msra.mxu0 0
    %1758 = vmatprep.mubr.bf16.mxu0 0
    %1759 = vmatmul.mubr.bf16.gmra.mrb[0].mxu0 %v1721
    %v1760 = vpop.f32.mrb[0].mxu0
    %v1761 = vadd.f32 0.0, %v1760
    %v1762 = vpop.f32.mrb[0].mxu0
    %v1763 = vpop.f32.mrb[0].mxu0
    %v1764 = vpop.f32.mrb[0].mxu0
    %1765 = vdwg.mxu0
    %v1766 = vmul.f32 %v1761, 0.35355338
    %v1767 = vadd.f32 %v1766, %v1606
    %1768 = vst.msk [vmem:[#allocation3 + $0x18] sm:$0xff] %vm188, %v1767
    %v1769 = vld [vmem:[%s403] sm:$0x1]
    %v1770 = vpack.c.bf16 %v1547, %v1547
    %1772 = vrot.lane.b32.xlu0 %v1770, 96
    %v1773 = vpop.permute.xlu0 %1772
    %v1775 = vsel %vm188, %v1770, 0
    %v1778 = vsel %vm188, %v1773, 0
    %1780 = vmatprep.subr.bf16.mxu0 0
    %1781 = vmatpush1.bf16.xpose.msra.mxu0 %v1778
    %1782 = vmatprep.subr.bf16.mxu0 0
    %1783 = vmatpush1.bf16.xpose.msra.mxu0 0
    %1784 = vmatprep.subr.bf16.mxu0 0
    %1785 = vmatpush1.bf16.xpose.msra.mxu0 0
    %1786 = vmatprep.subr.bf16.mxu0 0
    %1787 = vmatpush1.bf16.xpose.msra.mxu0 0
    %1788 = vmatprep.subr.bf16.mxu0 0
    %1789 = vmatpush1.bf16.xpose.msra.mxu0 0
    %1790 = vmatprep.subr.bf16.mxu0 0
    %1791 = vmatpush1.bf16.xpose.msra.mxu0 0
    %1792 = vmatprep.subr.bf16.mxu0 0
    %1793 = vmatpush1.bf16.xpose.msra.mxu0 0
    %1794 = vmatprep.subr.bf16.mxu0 0
    %1795 = vmatpush1.bf16.xpose.msra.mxu0 0
    %1796 = vmatprep.subr.bf16.mxu0 0
    %1797 = vmatpush1.bf16.xpose.msra.mxu0 0
    %1798 = vmatprep.subr.bf16.mxu0 0
    %1799 = vmatpush1.bf16.xpose.msra.mxu0 0
    %1800 = vmatprep.subr.bf16.mxu0 0
    %1801 = vmatpush1.bf16.xpose.msra.mxu0 0
    %1802 = vmatprep.subr.bf16.mxu0 0
    %1803 = vmatpush1.bf16.xpose.msra.mxu0 0
    %1804 = vmatprep.subr.bf16.mxu0 0
    %1805 = vmatpush1.bf16.xpose.msra.mxu0 0
    %1806 = vmatprep.subr.bf16.mxu0 0
    %1807 = vmatpush1.bf16.xpose.msra.mxu0 0
    %1808 = vmatprep.subr.bf16.mxu0 0
    %1809 = vmatpush1.bf16.xpose.msra.mxu0 0
    %1810 = vmatprep.subr.bf16.mxu0 0
    %1811 = vmatpush1.bf16.xpose.msra.mxu0 0
    %1812 = vmatprep.mubr.bf16.mxu0 0
    %1813 = vmatmul.mubr.bf16.gmra.mrb[0].mxu0 %v1775
    %v1814 = vpop.f32.mrb[0].mxu0
    %v1815 = vadd.f32 0.0, %v1814
    %v1816 = vpop.f32.mrb[0].mxu0
    %v1817 = vpop.f32.mrb[0].mxu0
    %v1818 = vpop.f32.mrb[0].mxu0
    %1819 = vdwg.mxu0
    %v1820 = vmul.f32 %v1815, 0.35355338
    %v1822 = vlaneseq
    %v1823 = vshrl.u32 %v1822, 7
    %v1824 = vsub.s32 0, %v1823
    %v1825 = vrot.slane %v1769, %v1824
    %v1827 = vadd.f32 %v1820, %v1825
    %1828 = vst.msk [vmem:[#allocation3 + $0x20] sm:$0xff] %vm188, %v1827
    %1829 = vrot.lane.b32.xlu0 %v1770, 120
    %v1830 = vpop.permute.xlu0 %1829
    %1831 = vrot.lane.b32.xlu0 %v1770, 88
    %v1832 = vpop.permute.xlu0 %1831
    %v1834 = vsel %vm188, %v1830, 0
    %v1837 = vsel %vm188, %v1832, 0
    %1839 = vmatprep.subr.bf16.mxu0 0
    %1840 = vmatpush1.bf16.xpose.msra.mxu0 %v1837
    %1841 = vmatprep.subr.bf16.mxu0 0
    %1842 = vmatpush1.bf16.xpose.msra.mxu0 0
    %1843 = vmatprep.subr.bf16.mxu0 0
    %1844 = vmatpush1.bf16.xpose.msra.mxu0 0
    %1845 = vmatprep.subr.bf16.mxu0 0
    %1846 = vmatpush1.bf16.xpose.msra.mxu0 0
    %1847 = vmatprep.subr.bf16.mxu0 0
    %1848 = vmatpush1.bf16.xpose.msra.mxu0 0
    %1849 = vmatprep.subr.bf16.mxu0 0
    %1850 = vmatpush1.bf16.xpose.msra.mxu0 0
    %1851 = vmatprep.subr.bf16.mxu0 0
    %1852 = vmatpush1.bf16.xpose.msra.mxu0 0
    %1853 = vmatprep.subr.bf16.mxu0 0
    %1854 = vmatpush1.bf16.xpose.msra.mxu0 0
    %1855 = vmatprep.subr.bf16.mxu0 0
    %1856 = vmatpush1.bf16.xpose.msra.mxu0 0
    %1857 = vmatprep.subr.bf16.mxu0 0
    %1858 = vmatpush1.bf16.xpose.msra.mxu0 0
    %1859 = vmatprep.subr.bf16.mxu0 0
    %1860 = vmatpush1.bf16.xpose.msra.mxu0 0
    %1861 = vmatprep.subr.bf16.mxu0 0
    %1862 = vmatpush1.bf16.xpose.msra.mxu0 0
    %1863 = vmatprep.subr.bf16.mxu0 0
    %1864 = vmatpush1.bf16.xpose.msra.mxu0 0
    %1865 = vmatprep.subr.bf16.mxu0 0
    %1866 = vmatpush1.bf16.xpose.msra.mxu0 0
    %1867 = vmatprep.subr.bf16.mxu0 0
    %1868 = vmatpush1.bf16.xpose.msra.mxu0 0
    %1869 = vmatprep.subr.bf16.mxu0 0
    %1870 = vmatpush1.bf16.xpose.msra.mxu0 0
    %1871 = vmatprep.mubr.bf16.mxu0 0
    %1872 = vmatmul.mubr.bf16.gmra.mrb[0].mxu0 %v1834
    %v1873 = vpop.f32.mrb[0].mxu0
    %v1874 = vadd.f32 0.0, %v1873
    %v1875 = vpop.f32.mrb[0].mxu0
    %v1876 = vpop.f32.mrb[0].mxu0
    %v1877 = vpop.f32.mrb[0].mxu0
    %1878 = vdwg.mxu0
    %v1879 = vmul.f32 %v1874, 0.35355338
    %v1880 = vadd.f32 %v1879, %v1825
    %1881 = vst.msk [vmem:[#allocation3 + $0x28] sm:$0xff] %vm188, %v1880
    %1882 = vrot.lane.b32.xlu0 %v1770, 112
    %v1883 = vpop.permute.xlu0 %1882
    %1884 = vrot.lane.b32.xlu0 %v1770, 80
    %v1885 = vpop.permute.xlu0 %1884
    %v1887 = vsel %vm188, %v1883, 0
    %v1890 = vsel %vm188, %v1885, 0
    %1892 = vmatprep.subr.bf16.mxu0 0
    %1893 = vmatpush1.bf16.xpose.msra.mxu0 %v1890
    %1894 = vmatprep.subr.bf16.mxu0 0
    %1895 = vmatpush1.bf16.xpose.msra.mxu0 0
    %1896 = vmatprep.subr.bf16.mxu0 0
    %1897 = vmatpush1.bf16.xpose.msra.mxu0 0
    %1898 = vmatprep.subr.bf16.mxu0 0
    %1899 = vmatpush1.bf16.xpose.msra.mxu0 0
    %1900 = vmatprep.subr.bf16.mxu0 0
    %1901 = vmatpush1.bf16.xpose.msra.mxu0 0
    %1902 = vmatprep.subr.bf16.mxu0 0
    %1903 = vmatpush1.bf16.xpose.msra.mxu0 0
    %1904 = vmatprep.subr.bf16.mxu0 0
    %1905 = vmatpush1.bf16.xpose.msra.mxu0 0
    %1906 = vmatprep.subr.bf16.mxu0 0
    %1907 = vmatpush1.bf16.xpose.msra.mxu0 0
    %1908 = vmatprep.subr.bf16.mxu0 0
    %1909 = vmatpush1.bf16.xpose.msra.mxu0 0
    %1910 = vmatprep.subr.bf16.mxu0 0
    %1911 = vmatpush1.bf16.xpose.msra.mxu0 0
    %1912 = vmatprep.subr.bf16.mxu0 0
    %1913 = vmatpush1.bf16.xpose.msra.mxu0 0
    %1914 = vmatprep.subr.bf16.mxu0 0
    %1915 = vmatpush1.bf16.xpose.msra.mxu0 0
    %1916 = vmatprep.subr.bf16.mxu0 0
    %1917 = vmatpush1.bf16.xpose.msra.mxu0 0
    %1918 = vmatprep.subr.bf16.mxu0 0
    %1919 = vmatpush1.bf16.xpose.msra.mxu0 0
    %1920 = vmatprep.subr.bf16.mxu0 0
    %1921 = vmatpush1.bf16.xpose.msra.mxu0 0
    %1922 = vmatprep.subr.bf16.mxu0 0
    %1923 = vmatpush1.bf16.xpose.msra.mxu0 0
    %1924 = vmatprep.mubr.bf16.mxu0 0
    %1925 = vmatmul.mubr.bf16.gmra.mrb[0].mxu0 %v1887
    %v1926 = vpop.f32.mrb[0].mxu0
    %v1927 = vadd.f32 0.0, %v1926
    %v1928 = vpop.f32.mrb[0].mxu0
    %v1929 = vpop.f32.mrb[0].mxu0
    %v1930 = vpop.f32.mrb[0].mxu0
    %1931 = vdwg.mxu0
    %v1932 = vmul.f32 %v1927, 0.35355338
    %v1933 = vadd.f32 %v1932, %v1825
    %1934 = vst.msk [vmem:[#allocation3 + $0x30] sm:$0xff] %vm188, %v1933
    %1935 = vrot.lane.b32.xlu0 %v1770, 104
    %v1936 = vpop.permute.xlu0 %1935
    %1937 = vrot.lane.b32.xlu0 %v1770, 72
    %v1938 = vpop.permute.xlu0 %1937
    %v1940 = vsel %vm188, %v1936, 0
    %v1943 = vsel %vm188, %v1938, 0
    %1945 = vmatprep.subr.bf16.mxu0 0
    %1946 = vmatpush1.bf16.xpose.msra.mxu0 %v1943
    %1947 = vmatprep.subr.bf16.mxu0 0
    %1948 = vmatpush1.bf16.xpose.msra.mxu0 0
    %1949 = vmatprep.subr.bf16.mxu0 0
    %1950 = vmatpush1.bf16.xpose.msra.mxu0 0
    %1951 = vmatprep.subr.bf16.mxu0 0
    %1952 = vmatpush1.bf16.xpose.msra.mxu0 0
    %1953 = vmatprep.subr.bf16.mxu0 0
    %1954 = vmatpush1.bf16.xpose.msra.mxu0 0
    %1955 = vmatprep.subr.bf16.mxu0 0
    %1956 = vmatpush1.bf16.xpose.msra.mxu0 0
    %1957 = vmatprep.subr.bf16.mxu0 0
    %1958 = vmatpush1.bf16.xpose.msra.mxu0 0
    %1959 = vmatprep.subr.bf16.mxu0 0
    %1960 = vmatpush1.bf16.xpose.msra.mxu0 0
    %1961 = vmatprep.subr.bf16.mxu0 0
    %1962 = vmatpush1.bf16.xpose.msra.mxu0 0
    %1963 = vmatprep.subr.bf16.mxu0 0
    %1964 = vmatpush1.bf16.xpose.msra.mxu0 0
    %1965 = vmatprep.subr.bf16.mxu0 0
    %1966 = vmatpush1.bf16.xpose.msra.mxu0 0
    %1967 = vmatprep.subr.bf16.mxu0 0
    %1968 = vmatpush1.bf16.xpose.msra.mxu0 0
    %1969 = vmatprep.subr.bf16.mxu0 0
    %1970 = vmatpush1.bf16.xpose.msra.mxu0 0
    %1971 = vmatprep.subr.bf16.mxu0 0
    %1972 = vmatpush1.bf16.xpose.msra.mxu0 0
    %1973 = vmatprep.subr.bf16.mxu0 0
    %1974 = vmatpush1.bf16.xpose.msra.mxu0 0
    %1975 = vmatprep.subr.bf16.mxu0 0
    %1976 = vmatpush1.bf16.xpose.msra.mxu0 0
    %1977 = vmatprep.mubr.bf16.mxu0 0
    %1978 = vmatmul.mubr.bf16.gmra.mrb[0].mxu0 %v1940
    %v1979 = vpop.f32.mrb[0].mxu0
    %v1980 = vadd.f32 0.0, %v1979
    %v1981 = vpop.f32.mrb[0].mxu0
    %v1982 = vpop.f32.mrb[0].mxu0
    %v1983 = vpop.f32.mrb[0].mxu0
    %1984 = vdwg.mxu0
    %v1985 = vmul.f32 %v1980, 0.35355338
    %v1986 = vadd.f32 %v1985, %v1825
    %1987 = vst.msk [vmem:[#allocation3 + $0x38] sm:$0xff] %vm188, %v1986
    %v1988 = vld [vmem:[#allocation3] sm:$0xff]
    %v1989 = vld [vmem:[#allocation3 + $0x8] sm:$0xff]
    %v1990 = vld [vmem:[#allocation3 + $0x10] sm:$0xff]
    %v1991 = vld [vmem:[#allocation3 + $0x18] sm:$0xff]
    %v1992 = vld [vmem:[#allocation3 + $0x20] sm:$0xff]
    %v1993 = vld [vmem:[#allocation3 + $0x28] sm:$0xff]
    %v1994 = vld [vmem:[#allocation3 + $0x30] sm:$0xff]
    %v1995 = vld [vmem:[#allocation3 + $0x38] sm:$0xff]
    %v1996 = vsel %vm188, %v1988, -inf
    %1997 = vmax.xlane.f32.xlu0 %v1996
    %v1998 = vpop.xlane.xlu0 %1997
    %v1999 = vsel %vm188, %v1989, -inf
    %2000 = vmax.xlane.f32.xlu0 %v1999
    %v2001 = vpop.xlane.xlu0 %2000
    %v2002 = vsel %vm188, %v1990, -inf
    %2003 = vmax.xlane.f32.xlu0 %v2002
    %v2004 = vpop.xlane.xlu0 %2003
    %v2005 = vsel %vm188, %v1991, -inf
    %2006 = vmax.xlane.f32.xlu0 %v2005
    %v2007 = vpop.xlane.xlu0 %2006
    %v2008 = vsel %vm188, %v1992, -inf
    %2009 = vmax.xlane.f32.xlu0 %v2008
    %v2010 = vpop.xlane.xlu0 %2009
    %v2011 = vsel %vm188, %v1993, -inf
    %2012 = vmax.xlane.f32.xlu0 %v2011
    %v2013 = vpop.xlane.xlu0 %2012
    %v2014 = vsel %vm188, %v1994, -inf
    %2015 = vmax.xlane.f32.xlu0 %v2014
    %v2016 = vpop.xlane.xlu0 %2015
    %v2017 = vsel %vm188, %v1995, -inf
    %2018 = vmax.xlane.f32.xlu0 %v2017
    %v2019 = vpop.xlane.xlu0 %2018
    %v2020 = vsub.f32 %v1988, %v1998
    %v2021 = vsub.f32 %v1989, %v2001
    %v2022 = vsub.f32 %v1990, %v2004
    %v2023 = vsub.f32 %v1991, %v2007
    %v2024 = vsub.f32 %v1992, %v2010
    %v2025 = vsub.f32 %v1993, %v2013
    %v2026 = vsub.f32 %v1994, %v2016
    %v2027 = vsub.f32 %v1995, %v2019
    %v2028 = vmul.f32 %v2020, 1.442695
    %v2029 = vpow.pop %v2028
    %v2030 = vmul.f32 %v2021, 1.442695
    %v2031 = vpow.pop %v2030
    %v2032 = vmul.f32 %v2022, 1.442695
    %v2033 = vpow.pop %v2032
    %v2034 = vmul.f32 %v2023, 1.442695
    %v2035 = vpow.pop %v2034
    %v2036 = vmul.f32 %v2024, 1.442695
    %v2037 = vpow.pop %v2036
    %v2038 = vmul.f32 %v2025, 1.442695
    %v2039 = vpow.pop %v2038
    %v2040 = vmul.f32 %v2026, 1.442695
    %v2041 = vpow.pop %v2040
    %v2042 = vmul.f32 %v2027, 1.442695
    %v2043 = vpow.pop %v2042
    %v2044 = vsel %vm188, %v2029, 0.0
    %2045 = vadd.xlane.f32.xlu0 %v2044
    %v2046 = vpop.xlane.xlu0 %2045
    %v2047 = vsel %vm188, %v2031, 0.0
    %2048 = vadd.xlane.f32.xlu0 %v2047
    %v2049 = vpop.xlane.xlu0 %2048
    %v2050 = vsel %vm188, %v2033, 0.0
    %2051 = vadd.xlane.f32.xlu0 %v2050
    %v2052 = vpop.xlane.xlu0 %2051
    %v2053 = vsel %vm188, %v2035, 0.0
    %2054 = vadd.xlane.f32.xlu0 %v2053
    %v2055 = vpop.xlane.xlu0 %2054
    %v2056 = vsel %vm188, %v2037, 0.0
    %2057 = vadd.xlane.f32.xlu0 %v2056
    %v2058 = vpop.xlane.xlu0 %2057
    %v2059 = vsel %vm188, %v2039, 0.0
    %2060 = vadd.xlane.f32.xlu0 %v2059
    %v2061 = vpop.xlane.xlu0 %2060
    %v2062 = vsel %vm188, %v2041, 0.0
    %2063 = vadd.xlane.f32.xlu0 %v2062
    %v2064 = vpop.xlane.xlu0 %2063
    %v2065 = vsel %vm188, %v2043, 0.0
    %2066 = vadd.xlane.f32.xlu0 %v2065
    %v2067 = vpop.xlane.xlu0 %2066
    %v2068 = vrcp.pop %v2046
    %v2069 = vrcp.pop %v2049
    %v2070 = vrcp.pop %v2052
    %v2071 = vrcp.pop %v2055
    %v2072 = vrcp.pop %v2058
    %v2073 = vrcp.pop %v2061
    %v2074 = vrcp.pop %v2064
    %v2075 = vrcp.pop %v2067
    %v2076 = vmul.f32 %v2029, %v2068
    %v2077 = vmul.f32 %v2031, %v2069
    %v2078 = vmul.f32 %v2033, %v2070
    %v2079 = vmul.f32 %v2035, %v2071
    %v2080 = vmul.f32 %v2037, %v2072
    %v2081 = vmul.f32 %v2039, %v2073
    %v2082 = vmul.f32 %v2041, %v2074
    %v2083 = vmul.f32 %v2043, %v2075
    %v2084 = vpack.c.bf16 %v2076, %v2076
    %2085 = vrot.lane.b32.xlu0 %v1551, 64
    %v2086 = vpop.permute.xlu0 %2085
    %v2088 = vsel %vm188, %v2084, 0
    %v2091 = vsel %vm725, %v2086, 0
    %2093 = vmatprep.subr.bf16.mxu0 0
    %2094 = vmatpush1.bf16.msra.mxu0 %v2091
    %2095 = vmatprep.subr.bf16.mxu0 0
    %2096 = vmatpush1.bf16.msra.mxu0 0
    %2097 = vmatprep.subr.bf16.mxu0 0
    %2098 = vmatpush1.bf16.msra.mxu0 0
    %2099 = vmatprep.subr.bf16.mxu0 0
    %2100 = vmatpush1.bf16.msra.mxu0 0
    %2101 = vmatprep.subr.bf16.mxu0 0
    %2102 = vmatpush1.bf16.msra.mxu0 0
    %2103 = vmatprep.subr.bf16.mxu0 0
    %2104 = vmatpush1.bf16.msra.mxu0 0
    %2105 = vmatprep.subr.bf16.mxu0 0
    %2106 = vmatpush1.bf16.msra.mxu0 0
    %2107 = vmatprep.subr.bf16.mxu0 0
    %2108 = vmatpush1.bf16.msra.mxu0 0
    %2109 = vmatprep.subr.bf16.mxu0 0
    %2110 = vmatpush1.bf16.msra.mxu0 0
    %2111 = vmatprep.subr.bf16.mxu0 0
    %2112 = vmatpush1.bf16.msra.mxu0 0
    %2113 = vmatprep.subr.bf16.mxu0 0
    %2114 = vmatpush1.bf16.msra.mxu0 0
    %2115 = vmatprep.subr.bf16.mxu0 0
    %2116 = vmatpush1.bf16.msra.mxu0 0
    %2117 = vmatprep.subr.bf16.mxu0 0
    %2118 = vmatpush1.bf16.msra.mxu0 0
    %2119 = vmatprep.subr.bf16.mxu0 0
    %2120 = vmatpush1.bf16.msra.mxu0 0
    %2121 = vmatprep.subr.bf16.mxu0 0
    %2122 = vmatpush1.bf16.msra.mxu0 0
    %2123 = vmatprep.subr.bf16.mxu0 0
    %2124 = vmatpush1.bf16.msra.mxu0 0
    %2125 = vmatprep.mubr.bf16.mxu0 0
    %2126 = vmatmul.mubr.bf16.gmra.mrb[0].mxu0 %v2088
    %v2127 = vpop.f32.mrb[0].mxu0
    %v2128 = vadd.f32 0.0, %v2127
    %v2129 = vpop.f32.mrb[0].mxu0
    %v2130 = vpop.f32.mrb[0].mxu0
    %v2131 = vpop.f32.mrb[0].mxu0
    %2132 = vdwg.mxu0
    %2133 = vst.msk [vmem:[#allocation2] sm:$0xff] %vm188, %v2128
    %v2134 = vpack.c.bf16 %v2077, %v2077
    %2135 = vrot.lane.b32.xlu0 %v1551, 56
    %v2136 = vpop.permute.xlu0 %2135
    %v2138 = vsel %vm188, %v2134, 0
    %v2141 = vsel %vm725, %v2136, 0
    %2143 = vmatprep.subr.bf16.mxu0 0
    %2144 = vmatpush1.bf16.msra.mxu0 %v2141
    %2145 = vmatprep.subr.bf16.mxu0 0
    %2146 = vmatpush1.bf16.msra.mxu0 0
    %2147 = vmatprep.subr.bf16.mxu0 0
    %2148 = vmatpush1.bf16.msra.mxu0 0
    %2149 = vmatprep.subr.bf16.mxu0 0
    %2150 = vmatpush1.bf16.msra.mxu0 0
    %2151 = vmatprep.subr.bf16.mxu0 0
    %2152 = vmatpush1.bf16.msra.mxu0 0
    %2153 = vmatprep.subr.bf16.mxu0 0
    %2154 = vmatpush1.bf16.msra.mxu0 0
    %2155 = vmatprep.subr.bf16.mxu0 0
    %2156 = vmatpush1.bf16.msra.mxu0 0
    %2157 = vmatprep.subr.bf16.mxu0 0
    %2158 = vmatpush1.bf16.msra.mxu0 0
    %2159 = vmatprep.subr.bf16.mxu0 0
    %2160 = vmatpush1.bf16.msra.mxu0 0
    %2161 = vmatprep.subr.bf16.mxu0 0
    %2162 = vmatpush1.bf16.msra.mxu0 0
    %2163 = vmatprep.subr.bf16.mxu0 0
    %2164 = vmatpush1.bf16.msra.mxu0 0
    %2165 = vmatprep.subr.bf16.mxu0 0
    %2166 = vmatpush1.bf16.msra.mxu0 0
    %2167 = vmatprep.subr.bf16.mxu0 0
    %2168 = vmatpush1.bf16.msra.mxu0 0
    %2169 = vmatprep.subr.bf16.mxu0 0
    %2170 = vmatpush1.bf16.msra.mxu0 0
    %2171 = vmatprep.subr.bf16.mxu0 0
    %2172 = vmatpush1.bf16.msra.mxu0 0
    %2173 = vmatprep.subr.bf16.mxu0 0
    %2174 = vmatpush1.bf16.msra.mxu0 0
    %2175 = vmatprep.mubr.bf16.mxu0 0
    %2176 = vmatmul.mubr.bf16.gmra.mrb[0].mxu0 %v2138
    %v2177 = vpop.f32.mrb[0].mxu0
    %v2178 = vadd.f32 0.0, %v2177
    %v2179 = vpop.f32.mrb[0].mxu0
    %v2180 = vpop.f32.mrb[0].mxu0
    %v2181 = vpop.f32.mrb[0].mxu0
    %2182 = vdwg.mxu0
    %2184 = vrot.lane.b32.xlu0 %v2178, 8
    %v2185 = vpop.permute.xlu0 %2184
    %2187 = vst.msk [vmem:[#allocation2] sm:$0xff] %vm823, %v2185
    %v2188 = vpack.c.bf16 %v2078, %v2078
    %2189 = vrot.lane.b32.xlu0 %v1551, 48
    %v2190 = vpop.permute.xlu0 %2189
    %v2192 = vsel %vm188, %v2188, 0
    %v2195 = vsel %vm725, %v2190, 0
    %2197 = vmatprep.subr.bf16.mxu0 0
    %2198 = vmatpush1.bf16.msra.mxu0 %v2195
    %2199 = vmatprep.subr.bf16.mxu0 0
    %2200 = vmatpush1.bf16.msra.mxu0 0
    %2201 = vmatprep.subr.bf16.mxu0 0
    %2202 = vmatpush1.bf16.msra.mxu0 0
    %2203 = vmatprep.subr.bf16.mxu0 0
    %2204 = vmatpush1.bf16.msra.mxu0 0
    %2205 = vmatprep.subr.bf16.mxu0 0
    %2206 = vmatpush1.bf16.msra.mxu0 0
    %2207 = vmatprep.subr.bf16.mxu0 0
    %2208 = vmatpush1.bf16.msra.mxu0 0
    %2209 = vmatprep.subr.bf16.mxu0 0
    %2210 = vmatpush1.bf16.msra.mxu0 0
    %2211 = vmatprep.subr.bf16.mxu0 0
    %2212 = vmatpush1.bf16.msra.mxu0 0
    %2213 = vmatprep.subr.bf16.mxu0 0
    %2214 = vmatpush1.bf16.msra.mxu0 0
    %2215 = vmatprep.subr.bf16.mxu0 0
    %2216 = vmatpush1.bf16.msra.mxu0 0
    %2217 = vmatprep.subr.bf16.mxu0 0
    %2218 = vmatpush1.bf16.msra.mxu0 0
    %2219 = vmatprep.subr.bf16.mxu0 0
    %2220 = vmatpush1.bf16.msra.mxu0 0
    %2221 = vmatprep.subr.bf16.mxu0 0
    %2222 = vmatpush1.bf16.msra.mxu0 0
    %2223 = vmatprep.subr.bf16.mxu0 0
    %2224 = vmatpush1.bf16.msra.mxu0 0
    %2225 = vmatprep.subr.bf16.mxu0 0
    %2226 = vmatpush1.bf16.msra.mxu0 0
    %2227 = vmatprep.subr.bf16.mxu0 0
    %2228 = vmatpush1.bf16.msra.mxu0 0
    %2229 = vmatprep.mubr.bf16.mxu0 0
    %2230 = vmatmul.mubr.bf16.gmra.mrb[0].mxu0 %v2192
    %v2231 = vpop.f32.mrb[0].mxu0
    %v2232 = vadd.f32 0.0, %v2231
    %v2233 = vpop.f32.mrb[0].mxu0
    %v2234 = vpop.f32.mrb[0].mxu0
    %v2235 = vpop.f32.mrb[0].mxu0
    %2236 = vdwg.mxu0
    %2238 = vrot.lane.b32.xlu0 %v2232, 16
    %v2239 = vpop.permute.xlu0 %2238
    %2241 = vst.msk [vmem:[#allocation2] sm:$0xff] %vm878, %v2239
    %v2242 = vpack.c.bf16 %v2079, %v2079
    %2243 = vrot.lane.b32.xlu0 %v1551, 40
    %v2244 = vpop.permute.xlu0 %2243
    %v2246 = vsel %vm188, %v2242, 0
    %v2249 = vsel %vm725, %v2244, 0
    %2251 = vmatprep.subr.bf16.mxu0 0
    %2252 = vmatpush1.bf16.msra.mxu0 %v2249
    %2253 = vmatprep.subr.bf16.mxu0 0
    %2254 = vmatpush1.bf16.msra.mxu0 0
    %2255 = vmatprep.subr.bf16.mxu0 0
    %2256 = vmatpush1.bf16.msra.mxu0 0
    %2257 = vmatprep.subr.bf16.mxu0 0
    %2258 = vmatpush1.bf16.msra.mxu0 0
    %2259 = vmatprep.subr.bf16.mxu0 0
    %2260 = vmatpush1.bf16.msra.mxu0 0
    %2261 = vmatprep.subr.bf16.mxu0 0
    %2262 = vmatpush1.bf16.msra.mxu0 0
    %2263 = vmatprep.subr.bf16.mxu0 0
    %2264 = vmatpush1.bf16.msra.mxu0 0
    %2265 = vmatprep.subr.bf16.mxu0 0
    %2266 = vmatpush1.bf16.msra.mxu0 0
    %2267 = vmatprep.subr.bf16.mxu0 0
    %2268 = vmatpush1.bf16.msra.mxu0 0
    %2269 = vmatprep.subr.bf16.mxu0 0
    %2270 = vmatpush1.bf16.msra.mxu0 0
    %2271 = vmatprep.subr.bf16.mxu0 0
    %2272 = vmatpush1.bf16.msra.mxu0 0
    %2273 = vmatprep.subr.bf16.mxu0 0
    %2274 = vmatpush1.bf16.msra.mxu0 0
    %2275 = vmatprep.subr.bf16.mxu0 0
    %2276 = vmatpush1.bf16.msra.mxu0 0
    %2277 = vmatprep.subr.bf16.mxu0 0
    %2278 = vmatpush1.bf16.msra.mxu0 0
    %2279 = vmatprep.subr.bf16.mxu0 0
    %2280 = vmatpush1.bf16.msra.mxu0 0
    %2281 = vmatprep.subr.bf16.mxu0 0
    %2282 = vmatpush1.bf16.msra.mxu0 0
    %2283 = vmatprep.mubr.bf16.mxu0 0
    %2284 = vmatmul.mubr.bf16.gmra.mrb[0].mxu0 %v2246
    %v2285 = vpop.f32.mrb[0].mxu0
    %v2286 = vadd.f32 0.0, %v2285
    %v2287 = vpop.f32.mrb[0].mxu0
    %v2288 = vpop.f32.mrb[0].mxu0
    %v2289 = vpop.f32.mrb[0].mxu0
    %2290 = vdwg.mxu0
    %2292 = vrot.lane.b32.xlu0 %v2286, 24
    %v2293 = vpop.permute.xlu0 %2292
    %2295 = vst.msk [vmem:[#allocation2] sm:$0xff] %vm933, %v2293
    %v2296 = vpack.c.bf16 %v2080, %v2080
    %2297 = vrot.lane.b32.xlu0 %v1770, 64
    %v2298 = vpop.permute.xlu0 %2297
    %v2300 = vsel %vm188, %v2296, 0
    %v2303 = vsel %vm725, %v2298, 0
    %2305 = vmatprep.subr.bf16.mxu0 0
    %2306 = vmatpush1.bf16.msra.mxu0 %v2303
    %2307 = vmatprep.subr.bf16.mxu0 0
    %2308 = vmatpush1.bf16.msra.mxu0 0
    %2309 = vmatprep.subr.bf16.mxu0 0
    %2310 = vmatpush1.bf16.msra.mxu0 0
    %2311 = vmatprep.subr.bf16.mxu0 0
    %2312 = vmatpush1.bf16.msra.mxu0 0
    %2313 = vmatprep.subr.bf16.mxu0 0
    %2314 = vmatpush1.bf16.msra.mxu0 0
    %2315 = vmatprep.subr.bf16.mxu0 0
    %2316 = vmatpush1.bf16.msra.mxu0 0
    %2317 = vmatprep.subr.bf16.mxu0 0
    %2318 = vmatpush1.bf16.msra.mxu0 0
    %2319 = vmatprep.subr.bf16.mxu0 0
    %2320 = vmatpush1.bf16.msra.mxu0 0
    %2321 = vmatprep.subr.bf16.mxu0 0
    %2322 = vmatpush1.bf16.msra.mxu0 0
    %2323 = vmatprep.subr.bf16.mxu0 0
    %2324 = vmatpush1.bf16.msra.mxu0 0
    %2325 = vmatprep.subr.bf16.mxu0 0
    %2326 = vmatpush1.bf16.msra.mxu0 0
    %2327 = vmatprep.subr.bf16.mxu0 0
    %2328 = vmatpush1.bf16.msra.mxu0 0
    %2329 = vmatprep.subr.bf16.mxu0 0
    %2330 = vmatpush1.bf16.msra.mxu0 0
    %2331 = vmatprep.subr.bf16.mxu0 0
    %2332 = vmatpush1.bf16.msra.mxu0 0
    %2333 = vmatprep.subr.bf16.mxu0 0
    %2334 = vmatpush1.bf16.msra.mxu0 0
    %2335 = vmatprep.subr.bf16.mxu0 0
    %2336 = vmatpush1.bf16.msra.mxu0 0
    %2337 = vmatprep.mubr.bf16.mxu0 0
    %2338 = vmatmul.mubr.bf16.gmra.mrb[0].mxu0 %v2300
    %v2339 = vpop.f32.mrb[0].mxu0
    %v2340 = vadd.f32 0.0, %v2339
    %v2341 = vpop.f32.mrb[0].mxu0
    %v2342 = vpop.f32.mrb[0].mxu0
    %v2343 = vpop.f32.mrb[0].mxu0
    %2344 = vdwg.mxu0
    %2345 = vst.msk [vmem:[#allocation2 + $0x8] sm:$0xff] %vm188, %v2340
    %v2346 = vpack.c.bf16 %v2081, %v2081
    %2347 = vrot.lane.b32.xlu0 %v1770, 56
    %v2348 = vpop.permute.xlu0 %2347
    %v2350 = vsel %vm188, %v2346, 0
    %v2353 = vsel %vm725, %v2348, 0
    %2355 = vmatprep.subr.bf16.mxu0 0
    %2356 = vmatpush1.bf16.msra.mxu0 %v2353
    %2357 = vmatprep.subr.bf16.mxu0 0
    %2358 = vmatpush1.bf16.msra.mxu0 0
    %2359 = vmatprep.subr.bf16.mxu0 0
    %2360 = vmatpush1.bf16.msra.mxu0 0
    %2361 = vmatprep.subr.bf16.mxu0 0
    %2362 = vmatpush1.bf16.msra.mxu0 0
    %2363 = vmatprep.subr.bf16.mxu0 0
    %2364 = vmatpush1.bf16.msra.mxu0 0
    %2365 = vmatprep.subr.bf16.mxu0 0
    %2366 = vmatpush1.bf16.msra.mxu0 0
    %2367 = vmatprep.subr.bf16.mxu0 0
    %2368 = vmatpush1.bf16.msra.mxu0 0
    %2369 = vmatprep.subr.bf16.mxu0 0
    %2370 = vmatpush1.bf16.msra.mxu0 0
    %2371 = vmatprep.subr.bf16.mxu0 0
    %2372 = vmatpush1.bf16.msra.mxu0 0
    %2373 = vmatprep.subr.bf16.mxu0 0
    %2374 = vmatpush1.bf16.msra.mxu0 0
    %2375 = vmatprep.subr.bf16.mxu0 0
    %2376 = vmatpush1.bf16.msra.mxu0 0
    %2377 = vmatprep.subr.bf16.mxu0 0
    %2378 = vmatpush1.bf16.msra.mxu0 0
    %2379 = vmatprep.subr.bf16.mxu0 0
    %2380 = vmatpush1.bf16.msra.mxu0 0
    %2381 = vmatprep.subr.bf16.mxu0 0
    %2382 = vmatpush1.bf16.msra.mxu0 0
    %2383 = vmatprep.subr.bf16.mxu0 0
    %2384 = vmatpush1.bf16.msra.mxu0 0
    %2385 = vmatprep.subr.bf16.mxu0 0
    %2386 = vmatpush1.bf16.msra.mxu0 0
    %2387 = vmatprep.mubr.bf16.mxu0 0
    %2388 = vmatmul.mubr.bf16.gmra.mrb[0].mxu0 %v2350
    %v2389 = vpop.f32.mrb[0].mxu0
    %v2390 = vadd.f32 0.0, %v2389
    %v2391 = vpop.f32.mrb[0].mxu0
    %v2392 = vpop.f32.mrb[0].mxu0
    %v2393 = vpop.f32.mrb[0].mxu0
    %2394 = vdwg.mxu0
    %2396 = vrot.lane.b32.xlu0 %v2390, 8
    %v2397 = vpop.permute.xlu0 %2396
    %2399 = vst.msk [vmem:[#allocation2 + $0x8] sm:$0xff] %vm823, %v2397
    %v2400 = vpack.c.bf16 %v2082, %v2082
    %2401 = vrot.lane.b32.xlu0 %v1770, 48
    %v2402 = vpop.permute.xlu0 %2401
    %v2404 = vsel %vm188, %v2400, 0
    %v2407 = vsel %vm725, %v2402, 0
    %2409 = vmatprep.subr.bf16.mxu0 0
    %2410 = vmatpush1.bf16.msra.mxu0 %v2407
    %2411 = vmatprep.subr.bf16.mxu0 0
    %2412 = vmatpush1.bf16.msra.mxu0 0
    %2413 = vmatprep.subr.bf16.mxu0 0
    %2414 = vmatpush1.bf16.msra.mxu0 0
    %2415 = vmatprep.subr.bf16.mxu0 0
    %2416 = vmatpush1.bf16.msra.mxu0 0
    %2417 = vmatprep.subr.bf16.mxu0 0
    %2418 = vmatpush1.bf16.msra.mxu0 0
    %2419 = vmatprep.subr.bf16.mxu0 0
    %2420 = vmatpush1.bf16.msra.mxu0 0
    %2421 = vmatprep.subr.bf16.mxu0 0
    %2422 = vmatpush1.bf16.msra.mxu0 0
    %2423 = vmatprep.subr.bf16.mxu0 0
    %2424 = vmatpush1.bf16.msra.mxu0 0
    %2425 = vmatprep.subr.bf16.mxu0 0
    %2426 = vmatpush1.bf16.msra.mxu0 0
    %2427 = vmatprep.subr.bf16.mxu0 0
    %2428 = vmatpush1.bf16.msra.mxu0 0
    %2429 = vmatprep.subr.bf16.mxu0 0
    %2430 = vmatpush1.bf16.msra.mxu0 0
    %2431 = vmatprep.subr.bf16.mxu0 0
    %2432 = vmatpush1.bf16.msra.mxu0 0
    %2433 = vmatprep.subr.bf16.mxu0 0
    %2434 = vmatpush1.bf16.msra.mxu0 0
    %2435 = vmatprep.subr.bf16.mxu0 0
    %2436 = vmatpush1.bf16.msra.mxu0 0
    %2437 = vmatprep.subr.bf16.mxu0 0
    %2438 = vmatpush1.bf16.msra.mxu0 0
    %2439 = vmatprep.subr.bf16.mxu0 0
    %2440 = vmatpush1.bf16.msra.mxu0 0
    %2441 = vmatprep.mubr.bf16.mxu0 0
    %2442 = vmatmul.mubr.bf16.gmra.mrb[0].mxu0 %v2404
    %v2443 = vpop.f32.mrb[0].mxu0
    %v2444 = vadd.f32 0.0, %v2443
    %v2445 = vpop.f32.mrb[0].mxu0
    %v2446 = vpop.f32.mrb[0].mxu0
    %v2447 = vpop.f32.mrb[0].mxu0
    %2448 = vdwg.mxu0
    %2450 = vrot.lane.b32.xlu0 %v2444, 16
    %v2451 = vpop.permute.xlu0 %2450
    %2453 = vst.msk [vmem:[#allocation2 + $0x8] sm:$0xff] %vm878, %v2451
    %v2454 = vpack.c.bf16 %v2083, %v2083
    %2455 = vrot.lane.b32.xlu0 %v1770, 40
    %v2456 = vpop.permute.xlu0 %2455
    %v2458 = vsel %vm188, %v2454, 0
    %v2461 = vsel %vm725, %v2456, 0
    %2463 = vmatprep.subr.bf16.mxu0 0
    %2464 = vmatpush1.bf16.msra.mxu0 %v2461
    %2465 = vmatprep.subr.bf16.mxu0 0
    %2466 = vmatpush1.bf16.msra.mxu0 0
    %2467 = vmatprep.subr.bf16.mxu0 0
    %2468 = vmatpush1.bf16.msra.mxu0 0
    %2469 = vmatprep.subr.bf16.mxu0 0
    %2470 = vmatpush1.bf16.msra.mxu0 0
    %2471 = vmatprep.subr.bf16.mxu0 0
    %2472 = vmatpush1.bf16.msra.mxu0 0
    %2473 = vmatprep.subr.bf16.mxu0 0
    %2474 = vmatpush1.bf16.msra.mxu0 0
    %2475 = vmatprep.subr.bf16.mxu0 0
    %2476 = vmatpush1.bf16.msra.mxu0 0
    %2477 = vmatprep.subr.bf16.mxu0 0
    %2478 = vmatpush1.bf16.msra.mxu0 0
    %2479 = vmatprep.subr.bf16.mxu0 0
    %2480 = vmatpush1.bf16.msra.mxu0 0
    %2481 = vmatprep.subr.bf16.mxu0 0
    %2482 = vmatpush1.bf16.msra.mxu0 0
    %2483 = vmatprep.subr.bf16.mxu0 0
    %2484 = vmatpush1.bf16.msra.mxu0 0
    %2485 = vmatprep.subr.bf16.mxu0 0
    %2486 = vmatpush1.bf16.msra.mxu0 0
    %2487 = vmatprep.subr.bf16.mxu0 0
    %2488 = vmatpush1.bf16.msra.mxu0 0
    %2489 = vmatprep.subr.bf16.mxu0 0
    %2490 = vmatpush1.bf16.msra.mxu0 0
    %2491 = vmatprep.subr.bf16.mxu0 0
    %2492 = vmatpush1.bf16.msra.mxu0 0
    %2493 = vmatprep.subr.bf16.mxu0 0
    %2494 = vmatpush1.bf16.msra.mxu0 0
    %2495 = vmatprep.mubr.bf16.mxu0 0
    %2496 = vmatmul.mubr.bf16.gmra.mrb[0].mxu0 %v2458
    %v2497 = vpop.f32.mrb[0].mxu0
    %v2498 = vadd.f32 0.0, %v2497
    %v2499 = vpop.f32.mrb[0].mxu0
    %v2500 = vpop.f32.mrb[0].mxu0
    %v2501 = vpop.f32.mrb[0].mxu0
    %2502 = vdwg.mxu0
    %2504 = vrot.lane.b32.xlu0 %v2498, 24
    %v2505 = vpop.permute.xlu0 %2504
    %2507 = vst.msk [vmem:[#allocation2 + $0x8] sm:$0xff] %vm933, %v2505
    %v2508 = vld [vmem:[#allocation2] sm:$0xff]
    %v2509 = vld [vmem:[#allocation2 + $0x8] sm:$0xff]
    %s2510 = scalar_lea.vmem %s6, 16
    %v2511 = vld [vmem:[%s2510] sm:$0xf]
    %v2512 = vld [vmem:[%s2510 + $0x4] sm:$0xf]
    %v2513 = vld [vmem:[%s2510 + $0x8] sm:$0xf]
    %v2514 = vld [vmem:[%s2510 + $0xc] sm:$0xf]
    %v2515 = vpack.c.bf16 %v2509, %v2508
    %s2516 = scalar_lea.vmem %s7, 1
    %v2517 = vld [vmem:[%s2516] sm:$0x1]
    %v2519 = vlaneseq
    %v2520 = vshrl.u32 %v2519, 7
    %v2521 = vsub.s32 0, %v2520
    %v2522 = vrot.slane %v2517, %v2521
    %v2528 = vunpack.c.l.b16 %v2511
    %v2529 = vunpack.c.l.b16 %v2512
    %v2530 = vunpack.c.l.b16 %v2513
    %v2531 = vunpack.c.l.b16 %v2514
    %v2532 = vpack.c.b16 %v2529, %v2528
    %v2533 = vpack.c.b16 %v2531, %v2530
    %v2537 = vsel %vm71, %v2515, 0
    %2539 = vmatprep.subr.bf16.mxu0 0
    %2540 = vmatpush1.bf16.msra.mxu0 %v2532
    %2541 = vmatprep.subr.bf16.mxu0 0
    %2542 = vmatpush1.bf16.msra.mxu0 %v2533
    %2543 = vmatprep.subr.bf16.mxu0 0
    %2544 = vmatpush1.bf16.msra.mxu0 0
    %2545 = vmatprep.subr.bf16.mxu0 0
    %2546 = vmatpush1.bf16.msra.mxu0 0
    %2547 = vmatprep.subr.bf16.mxu0 0
    %2548 = vmatpush1.bf16.msra.mxu0 0
    %2549 = vmatprep.subr.bf16.mxu0 0
    %2550 = vmatpush1.bf16.msra.mxu0 0
    %2551 = vmatprep.subr.bf16.mxu0 0
    %2552 = vmatpush1.bf16.msra.mxu0 0
    %2553 = vmatprep.subr.bf16.mxu0 0
    %2554 = vmatpush1.bf16.msra.mxu0 0
    %2555 = vmatprep.subr.bf16.mxu0 0
    %2556 = vmatpush1.bf16.msra.mxu0 0
    %2557 = vmatprep.subr.bf16.mxu0 0
    %2558 = vmatpush1.bf16.msra.mxu0 0
    %2559 = vmatprep.subr.bf16.mxu0 0
    %2560 = vmatpush1.bf16.msra.mxu0 0
    %2561 = vmatprep.subr.bf16.mxu0 0
    %2562 = vmatpush1.bf16.msra.mxu0 0
    %2563 = vmatprep.subr.bf16.mxu0 0
    %2564 = vmatpush1.bf16.msra.mxu0 0
    %2565 = vmatprep.subr.bf16.mxu0 0
    %2566 = vmatpush1.bf16.msra.mxu0 0
    %2567 = vmatprep.subr.bf16.mxu0 0
    %2568 = vmatpush1.bf16.msra.mxu0 0
    %2569 = vmatprep.subr.bf16.mxu0 0
    %2570 = vmatpush1.bf16.msra.mxu0 0
    %2571 = vmatprep.mubr.bf16.mxu0 0
    %2572 = vmatmul.mubr.bf16.gmra.mrb[0].mxu0 %v2537
    %v2573 = vpop.f32.mrb[0].mxu0
    %v2574 = vadd.f32 %v2522, %v2573
    %v2575 = vpop.f32.mrb[0].mxu0
    %v2576 = vpop.f32.mrb[0].mxu0
    %v2577 = vadd.f32 %v2522, %v2576
    %v2578 = vpop.f32.mrb[0].mxu0
    %2579 = vdwg.mxu0
    %v2580 = vadd.f32 %v1478, %v2574
    %v2581 = vadd.f32 %v1479, %v2577
    %s2582 = scalar_lea.vmem %s8, 1
    %v2583 = vld [vmem:[%s2582] sm:$0x1]
    %s2584 = scalar_lea.vmem %s9, 1
    %v2585 = vld [vmem:[%s2584] sm:$0x1]
    %v2586 = vsel %vm71, %v2580, 0.0
    %2587 = vadd.xlane.f32.xlu0 %v2586
    %v2588 = vpop.xlane.xlu0 %2587
    %v2589 = vsel %vm71, %v2581, 0.0
    %2590 = vadd.xlane.f32.xlu0 %v2589
    %v2591 = vpop.xlane.xlu0 %2590
    %v2592 = vmul.f32 %v2588, %v78
    %v2593 = vmul.f32 %v2591, %v78
    %v2594 = vsub.f32 %v2580, %v2592
    %v2595 = vsub.f32 %v2581, %v2593
    %v2596 = vmul.f32 %v2594, %v2594
    %v2597 = vmul.f32 %v2595, %v2595
    %v2598 = vsel %vm71, %v2596, 0.0
    %2599 = vadd.xlane.f32.xlu0 %v2598
    %v2600 = vpop.xlane.xlu0 %2599
    %v2601 = vsel %vm71, %v2597, 0.0
    %2602 = vadd.xlane.f32.xlu0 %v2601
    %v2603 = vpop.xlane.xlu0 %2602
    %v2604 = vmul.f32 %v2600, %v78
    %v2605 = vmul.f32 %v2603, %v78
    %v2606 = vadd.f32 %v2604, 1e-12
    %v2607 = vadd.f32 %v2605, 1e-12
    %v2608 = vrsqrt.pop %v2606
    %v2609 = vrsqrt.pop %v2607
    %v2610 = vmul.f32 %v2594, %v2608
    %v2611 = vmul.f32 %v2595, %v2609
    %v2613 = vlaneseq
    %v2614 = vshrl.u32 %v2613, 7
    %v2615 = vsub.s32 0, %v2614
    %v2616 = vrot.slane %v2583, %v2615
    %v2618 = vmul.f32 %v2610, %v2616
    %v2619 = vmul.f32 %v2611, %v2616
    %v2621 = vlaneseq
    %v2622 = vshrl.u32 %v2621, 7
    %v2623 = vsub.s32 0, %v2622
    %v2624 = vrot.slane %v2585, %v2623
    %v2626 = vadd.f32 %v2618, %v2624
    %v2627 = vadd.f32 %v2619, %v2624
    %s2628 = scalar_lea.vmem %s10, 16
    %v2629 = vld [vmem:[%s2628] sm:$0xf]
    %v2630 = vld [vmem:[%s2628 + $0x4] sm:$0xf]
    %v2631 = vld [vmem:[%s2628 + $0x8] sm:$0xf]
    %v2632 = vld [vmem:[%s2628 + $0xc] sm:$0xf]
    %v2633 = vpack.c.bf16 %v2627, %v2626
    %s2634 = scalar_lea.vmem %s11, 1
    %v2635 = vld [vmem:[%s2634] sm:$0x1]
    %v2637 = vlaneseq
    %v2638 = vshrl.u32 %v2637, 7
    %v2639 = vsub.s32 0, %v2638
    %v2640 = vrot.slane %v2635, %v2639
    %v2646 = vunpack.c.l.b16 %v2629
    %v2647 = vunpack.c.l.b16 %v2630
    %v2648 = vunpack.c.l.b16 %v2631
    %v2649 = vunpack.c.l.b16 %v2632
    %v2650 = vpack.c.b16 %v2647, %v2646
    %v2651 = vpack.c.b16 %v2649, %v2648
    %v2655 = vsel %vm71, %v2633, 0
    %2657 = vmatprep.subr.bf16.mxu0 0
    %2658 = vmatpush1.bf16.msra.mxu0 %v2650
    %2659 = vmatprep.subr.bf16.mxu0 0
    %2660 = vmatpush1.bf16.msra.mxu0 %v2651
    %2661 = vmatprep.subr.bf16.mxu0 0
    %2662 = vmatpush1.bf16.msra.mxu0 0
    %2663 = vmatprep.subr.bf16.mxu0 0
    %2664 = vmatpush1.bf16.msra.mxu0 0
    %2665 = vmatprep.subr.bf16.mxu0 0
    %2666 = vmatpush1.bf16.msra.mxu0 0
    %2667 = vmatprep.subr.bf16.mxu0 0
    %2668 = vmatpush1.bf16.msra.mxu0 0
    %2669 = vmatprep.subr.bf16.mxu0 0
    %2670 = vmatpush1.bf16.msra.mxu0 0
    %2671 = vmatprep.subr.bf16.mxu0 0
    %2672 = vmatpush1.bf16.msra.mxu0 0
    %2673 = vmatprep.subr.bf16.mxu0 0
    %2674 = vmatpush1.bf16.msra.mxu0 0
    %2675 = vmatprep.subr.bf16.mxu0 0
    %2676 = vmatpush1.bf16.msra.mxu0 0
    %2677 = vmatprep.subr.bf16.mxu0 0
    %2678 = vmatpush1.bf16.msra.mxu0 0
    %2679 = vmatprep.subr.bf16.mxu0 0
    %2680 = vmatpush1.bf16.msra.mxu0 0
    %2681 = vmatprep.subr.bf16.mxu0 0
    %2682 = vmatpush1.bf16.msra.mxu0 0
    %2683 = vmatprep.subr.bf16.mxu0 0
    %2684 = vmatpush1.bf16.msra.mxu0 0
    %2685 = vmatprep.subr.bf16.mxu0 0
    %2686 = vmatpush1.bf16.msra.mxu0 0
    %2687 = vmatprep.subr.bf16.mxu0 0
    %2688 = vmatpush1.bf16.msra.mxu0 0
    %2689 = vmatprep.mubr.bf16.mxu0 0
    %2690 = vmatmul.mubr.bf16.gmra.mrb[0].mxu0 %v2655
    %v2691 = vpop.f32.mrb[0].mxu0
    %v2692 = vadd.f32 %v2640, %v2691
    %v2693 = vpop.f32.mrb[0].mxu0
    %v2694 = vpop.f32.mrb[0].mxu0
    %v2695 = vadd.f32 %v2640, %v2694
    %v2696 = vpop.f32.mrb[0].mxu0
    %2697 = vdwg.mxu0
    %v2698 = vmul.f32 %v2692, %v2692
    %v2699 = vmul.f32 %v2695, %v2695
    %v2700 = vmul.f32 %v2692, %v2698
    %v2701 = vmul.f32 %v2695, %v2699
    %v2702 = vmul.f32 %v2700, 0.044715
    %v2703 = vmul.f32 %v2701, 0.044715
    %v2704 = vadd.f32 %v2692, %v2702
    %v2705 = vadd.f32 %v2695, %v2703
    %v2706 = vmul.f32 %v2704, 0.7978846
    %v2707 = vmul.f32 %v2705, 0.7978846
    %v2708 = vtanh.pop %v2706
    %v2709 = vtanh.pop %v2707
    %v2710 = vadd.f32 %v2708, 1.0
    %v2711 = vadd.f32 %v2709, 1.0
    %v2712 = vmul.f32 %v2710, 0.5
    %v2713 = vmul.f32 %v2711, 0.5
    %v2714 = vmul.f32 %v2692, %v2712
    %v2715 = vmul.f32 %v2695, %v2713
    %s2716 = scalar_lea.vmem %s12, 32
    %v2717 = vld [vmem:[%s2716] sm:$0xf]
    %v2718 = vld [vmem:[%s2716 + $0x4] sm:$0xf]
    %v2719 = vld [vmem:[%s2716 + $0x8] sm:$0xf]
    %v2720 = vld [vmem:[%s2716 + $0xc] sm:$0xf]
    %v2721 = vld [vmem:[%s2716 + $0x10] sm:$0xf]
    %v2722 = vld [vmem:[%s2716 + $0x14] sm:$0xf]
    %v2723 = vld [vmem:[%s2716 + $0x18] sm:$0xf]
    %v2724 = vld [vmem:[%s2716 + $0x1c] sm:$0xf]
    %v2725 = vpack.c.bf16 %v2715, %v2714
    %s2726 = scalar_lea.vmem %s13, 1
    %v2727 = vld [vmem:[%s2726] sm:$0x1]
    %v2729 = vlaneseq
    %v2730 = vshrl.u32 %v2729, 7
    %v2731 = vsub.s32 0, %v2730
    %v2732 = vrot.slane %v2727, %v2731
    %v2742 = vunpack.c.l.b16 %v2717
    %v2743 = vunpack.c.l.b16 %v2718
    %v2744 = vunpack.c.l.b16 %v2719
    %v2745 = vunpack.c.l.b16 %v2720
    %v2746 = vunpack.c.l.b16 %v2721
    %v2747 = vunpack.c.l.b16 %v2722
    %v2748 = vunpack.c.l.b16 %v2723
    %v2749 = vunpack.c.l.b16 %v2724
    %v2750 = vpack.c.b16 %v2743, %v2742
    %v2751 = vpack.c.b16 %v2745, %v2744
    %v2752 = vpack.c.b16 %v2747, %v2746
    %v2753 = vpack.c.b16 %v2749, %v2748
    %v2759 = vsel %vm1389, %v2725, 0
    %2761 = vmatprep.subr.bf16.mxu0 0
    %2762 = vmatpush1.bf16.msra.mxu0 %v2750
    %2763 = vmatprep.subr.bf16.mxu0 0
    %2764 = vmatpush1.bf16.msra.mxu0 %v2751
    %2765 = vmatprep.subr.bf16.mxu0 0
    %2766 = vmatpush1.bf16.msra.mxu0 %v2752
    %2767 = vmatprep.subr.bf16.mxu0 0
    %2768 = vmatpush1.bf16.msra.mxu0 %v2753
    %2769 = vmatprep.subr.bf16.mxu0 0
    %2770 = vmatpush1.bf16.msra.mxu0 0
    %2771 = vmatprep.subr.bf16.mxu0 0
    %2772 = vmatpush1.bf16.msra.mxu0 0
    %2773 = vmatprep.subr.bf16.mxu0 0
    %2774 = vmatpush1.bf16.msra.mxu0 0
    %2775 = vmatprep.subr.bf16.mxu0 0
    %2776 = vmatpush1.bf16.msra.mxu0 0
    %2777 = vmatprep.subr.bf16.mxu0 0
    %2778 = vmatpush1.bf16.msra.mxu0 0
    %2779 = vmatprep.subr.bf16.mxu0 0
    %2780 = vmatpush1.bf16.msra.mxu0 0
    %2781 = vmatprep.subr.bf16.mxu0 0
    %2782 = vmatpush1.bf16.msra.mxu0 0
    %2783 = vmatprep.subr.bf16.mxu0 0
    %2784 = vmatpush1.bf16.msra.mxu0 0
    %2785 = vmatprep.subr.bf16.mxu0 0
    %2786 = vmatpush1.bf16.msra.mxu0 0
    %2787 = vmatprep.subr.bf16.mxu0 0
    %2788 = vmatpush1.bf16.msra.mxu0 0
    %2789 = vmatprep.subr.bf16.mxu0 0
    %2790 = vmatpush1.bf16.msra.mxu0 0
    %2791 = vmatprep.subr.bf16.mxu0 0
    %2792 = vmatpush1.bf16.msra.mxu0 0
    %2793 = vmatprep.mubr.bf16.mxu0 0
    %2794 = vmatmul.mubr.bf16.gmra.mrb[0].mxu0 %v2759
    %v2795 = vpop.f32.mrb[0].mxu0
    %v2796 = vadd.f32 %v2732, %v2795
    %v2797 = vpop.f32.mrb[0].mxu0
    %v2798 = vpop.f32.mrb[0].mxu0
    %v2799 = vadd.f32 %v2732, %v2798
    %v2800 = vpop.f32.mrb[0].mxu0
    %2801 = vdwg.mxu0
    %v2802 = vadd.f32 %v2626, %v2796
    %v2803 = vadd.f32 %v2627, %v2799
    %s2804 = scalar_lea.vmem %s14, 1
    %v2805 = vld [vmem:[%s2804] sm:$0x1]
    %s2806 = scalar_lea.vmem %s15, 1
    %v2807 = vld [vmem:[%s2806] sm:$0x1]
    %v2808 = vsel %vm71, %v2802, 0.0
    %2809 = vadd.xlane.f32.xlu0 %v2808
    %v2810 = vpop.xlane.xlu0 %2809
    %v2811 = vsel %vm71, %v2803, 0.0
    %2812 = vadd.xlane.f32.xlu0 %v2811
    %v2813 = vpop.xlane.xlu0 %2812
    %v2814 = vmul.f32 %v2810, %v78
    %v2815 = vmul.f32 %v2813, %v78
    %v2816 = vsub.f32 %v2802, %v2814
    %v2817 = vsub.f32 %v2803, %v2815
    %v2818 = vmul.f32 %v2816, %v2816
    %v2819 = vmul.f32 %v2817, %v2817
    %v2820 = vsel %vm71, %v2818, 0.0
    %2821 = vadd.xlane.f32.xlu0 %v2820
    %v2822 = vpop.xlane.xlu0 %2821
    %v2823 = vsel %vm71, %v2819, 0.0
    %2824 = vadd.xlane.f32.xlu0 %v2823
    %v2825 = vpop.xlane.xlu0 %2824
    %v2826 = vmul.f32 %v2822, %v78
    %v2827 = vmul.f32 %v2825, %v78
    %v2828 = vadd.f32 %v2826, 1e-12
    %v2829 = vadd.f32 %v2827, 1e-12
    %v2830 = vrsqrt.pop %v2828
    %v2831 = vrsqrt.pop %v2829
    %v2832 = vmul.f32 %v2816, %v2830
    %v2833 = vmul.f32 %v2817, %v2831
    %v2835 = vlaneseq
    %v2836 = vshrl.u32 %v2835, 7
    %v2837 = vsub.s32 0, %v2836
    %v2838 = vrot.slane %v2805, %v2837
    %v2840 = vmul.f32 %v2832, %v2838
    %v2841 = vmul.f32 %v2833, %v2838
    %v2843 = vlaneseq
    %v2844 = vshrl.u32 %v2843, 7
    %v2845 = vsub.s32 0, %v2844
    %v2846 = vrot.slane %v2807, %v2845
    %v2848 = vadd.f32 %v2840, %v2846
    %v2849 = vadd.f32 %v2841, %v2846
    %v2850 = vld [vmem:[%s16] sm:$0xf]
    %v2851 = vld [vmem:[%s16 + $0x4] sm:$0xf]
    %v2852 = vld [vmem:[%s16 + $0x8] sm:$0xf]
    %v2853 = vld [vmem:[%s16 + $0xc] sm:$0xf]
    %v2854 = vpack.c.bf16 %v2848, %v2848
    %v2855 = vpack.c.bf16 %v2849, %v2849
    %v2856 = vld [vmem:[%s17] sm:$0x1]
    %v2858 = vlaneseq
    %v2859 = vshrl.u32 %v2858, 7
    %v2860 = vsub.s32 0, %v2859
    %v2861 = vrot.slane %v2856, %v2860
    %v2865 = vunpack.c.l.b16 %v2854
    %v2866 = vunpack.c.l.b16 %v2855
    %v2867 = vrot.slane %v2866, 7
    %vm2868 = vcmask 1041409
    %v2869 = vsel %vm2868, %v2867, %v2865
    %v2870 = vpack.c.b16 %v2869, %v2869
    %v2875 = vunpack.c.l.b16 %v2850
    %v2876 = vunpack.c.l.b16 %v2851
    %v2877 = vunpack.c.l.b16 %v2852
    %v2878 = vunpack.c.l.b16 %v2853
    %v2879 = vpack.c.b16 %v2876, %v2875
    %v2880 = vpack.c.b16 %v2878, %v2877
    %v2884 = vsel %vm71, %v2870, 0
    %2886 = vmatprep.subr.bf16.mxu0 0
    %2887 = vmatpush1.bf16.msra.mxu0 %v2879
    %2888 = vmatprep.subr.bf16.mxu0 0
    %2889 = vmatpush1.bf16.msra.mxu0 %v2880
    %2890 = vmatprep.subr.bf16.mxu0 0
    %2891 = vmatpush1.bf16.msra.mxu0 0
    %2892 = vmatprep.subr.bf16.mxu0 0
    %2893 = vmatpush1.bf16.msra.mxu0 0
    %2894 = vmatprep.subr.bf16.mxu0 0
    %2895 = vmatpush1.bf16.msra.mxu0 0
    %2896 = vmatprep.subr.bf16.mxu0 0
    %2897 = vmatpush1.bf16.msra.mxu0 0
    %2898 = vmatprep.subr.bf16.mxu0 0
    %2899 = vmatpush1.bf16.msra.mxu0 0
    %2900 = vmatprep.subr.bf16.mxu0 0
    %2901 = vmatpush1.bf16.msra.mxu0 0
    %2902 = vmatprep.subr.bf16.mxu0 0
    %2903 = vmatpush1.bf16.msra.mxu0 0
    %2904 = vmatprep.subr.bf16.mxu0 0
    %2905 = vmatpush1.bf16.msra.mxu0 0
    %2906 = vmatprep.subr.bf16.mxu0 0
    %2907 = vmatpush1.bf16.msra.mxu0 0
    %2908 = vmatprep.subr.bf16.mxu0 0
    %2909 = vmatpush1.bf16.msra.mxu0 0
    %2910 = vmatprep.subr.bf16.mxu0 0
    %2911 = vmatpush1.bf16.msra.mxu0 0
    %2912 = vmatprep.subr.bf16.mxu0 0
    %2913 = vmatpush1.bf16.msra.mxu0 0
    %2914 = vmatprep.subr.bf16.mxu0 0
    %2915 = vmatpush1.bf16.msra.mxu0 0
    %2916 = vmatprep.subr.bf16.mxu0 0
    %2917 = vmatpush1.bf16.msra.mxu0 0
    %2918 = vmatprep.mubr.bf16.mxu0 0
    %2919 = vmatmul.mubr.bf16.gmra.mrb[0].mxu0 %v2884
    %v2920 = vpop.f32.mrb[0].mxu0
    %v2921 = vadd.f32 %v2861, %v2920
    %v2922 = vpop.f32.mrb[0].mxu0
    %v2923 = vpop.f32.mrb[0].mxu0
    %v2924 = vpop.f32.mrb[0].mxu0
    %2925 = vdwg.mxu0
    %v2926 = vtanh.pop %v2921
    %v2927 = vld [vmem:[%s18] sm:$0xf]
    %v2928 = vld [vmem:[%s18 + $0x4] sm:$0xf]
    %v2929 = vld [vmem:[%s18 + $0x8] sm:$0xf]
    %v2930 = vld [vmem:[%s18 + $0xc] sm:$0xf]
    %v2931 = vpack.c.bf16 %v2926, %v2926
    %v2932 = vld [vmem:[%s19] sm:$0x1]
    %v2934 = vlaneseq
    %v2935 = vshrl.u32 %v2934, 7
    %v2936 = vsub.s32 0, %v2935
    %v2937 = vrot.slane %v2932, %v2936
    %v2943 = vunpack.c.l.b16 %v2927
    %v2944 = vunpack.c.l.b16 %v2928
    %v2945 = vunpack.c.l.b16 %v2929
    %v2946 = vunpack.c.l.b16 %v2930
    %v2947 = vpack.c.b16 %v2944, %v2943
    %v2948 = vpack.c.b16 %v2946, %v2945
    %v2952 = vsel %vm71, %v2931, 0
    %2954 = vmatprep.subr.bf16.mxu0 0
    %2955 = vmatpush1.bf16.msra.mxu0 %v2947
    %2956 = vmatprep.subr.bf16.mxu0 0
    %2957 = vmatpush1.bf16.msra.mxu0 %v2948
    %2958 = vmatprep.subr.bf16.mxu0 0
    %2959 = vmatpush1.bf16.msra.mxu0 0
    %2960 = vmatprep.subr.bf16.mxu0 0
    %2961 = vmatpush1.bf16.msra.mxu0 0
    %2962 = vmatprep.subr.bf16.mxu0 0
    %2963 = vmatpush1.bf16.msra.mxu0 0
    %2964 = vmatprep.subr.bf16.mxu0 0
    %2965 = vmatpush1.bf16.msra.mxu0 0
    %2966 = vmatprep.subr.bf16.mxu0 0
    %2967 = vmatpush1.bf16.msra.mxu0 0
    %2968 = vmatprep.subr.bf16.mxu0 0
    %2969 = vmatpush1.bf16.msra.mxu0 0
    %2970 = vmatprep.subr.bf16.mxu0 0
    %2971 = vmatpush1.bf16.msra.mxu0 0
    %2972 = vmatprep.subr.bf16.mxu0 0
    %2973 = vmatpush1.bf16.msra.mxu0 0
    %2974 = vmatprep.subr.bf16.mxu0 0
    %2975 = vmatpush1.bf16.msra.mxu0 0
    %2976 = vmatprep.subr.bf16.mxu0 0
    %2977 = vmatpush1.bf16.msra.mxu0 0
    %2978 = vmatprep.subr.bf16.mxu0 0
    %2979 = vmatpush1.bf16.msra.mxu0 0
    %2980 = vmatprep.subr.bf16.mxu0 0
    %2981 = vmatpush1.bf16.msra.mxu0 0
    %2982 = vmatprep.subr.bf16.mxu0 0
    %2983 = vmatpush1.bf16.msra.mxu0 0
    %2984 = vmatprep.subr.bf16.mxu0 0
    %2985 = vmatpush1.bf16.msra.mxu0 0
    %2986 = vmatprep.mubr.bf16.mxu0 0
    %2987 = vmatmul.mubr.bf16.gmra.mrb[0].mxu0 %v2952
    %v2988 = vpop.f32.mrb[0].mxu0
    %v2989 = vadd.f32 %v2937, %v2988
    %v2990 = vpop.f32.mrb[0].mxu0
    %v2991 = vpop.f32.mrb[0].mxu0
    %v2992 = vpop.f32.mrb[0].mxu0
    %2993 = vdwg.mxu0
    %vm2994 = vcmask 17408
    %2995 = vst.msk [vmem:[#allocation4] sm:$0x3] %vm2994, %v2989
    // Predicated region
    $region82: #{sentiment_classifier_forward.1} parent=1 // pred_check
      _
    $region83: #{sentiment_classifier_forward.1} parent=1 // pred_check_branch
      %2997 = sbr.rel (0) target = $region85
    $region84: #{sentiment_classifier_forward.1} parent=1 // pred_region
      %s2999 = ssub.s32 32, 32
      %3000 = vsyncadd [#allocation5], %s2999
      %s3002 = sshll.u32 [#allocation4], 4
      %s3003 = int_to_ptr.vmem [resolvable:$true] %s3002
      %3005 = dma.vmem_to_hbm [thread:$0]  %s3003, 32, %s20, [#allocation5]
    $region85: #{sentiment_classifier_forward.1} parent=1 // pred_fallthru
      _
    // Predicated region
    $region86: #{sentiment_classifier_forward.1} parent=1 // pred_check
      _
    $region87: #{sentiment_classifier_forward.1} parent=1 // pred_check_branch
      %3007 = sbr.rel (0) target = $region89
    $region88: #{sentiment_classifier_forward.1} parent=1 // pred_region
      %3008 = dma.done [#allocation5], 32
    $region89: #{sentiment_classifier_forward.1} parent=1 // pred_fallthru
      _
    %3009 = vsyncpa [#allocation5], 1

</llo_original>
